<compile_context>
chip_gen: v5e
topology: v5e:2x2
jax: 0.10.0
libtpu: 0.0.40
codegen_flags: <defaults>
</compile_context>

<pallas_src>
import functools
import math

import jax
import jax.numpy as jnp
from jax.experimental import pallas as pl
from jax.experimental.pallas import tpu as pltpu


def _project(w, x_op, *, use_vpu):
    """(rows, C) @ (C, N) -> (rows, N) f32.  VPU broadcast-FMA path for tiny C."""
    if use_vpu:
        wf = w.astype(jnp.float32)
        acc = wf[:, 0:1] * x_op[0:1, :]
        for ci in range(1, x_op.shape[0]):
            acc = acc + wf[:, ci:ci + 1] * x_op[ci:ci + 1, :]
        return acc
    return jnp.dot(w, x_op, preferred_element_type=jnp.float32)


def _linear_attention_kernel(x_ref, w_qkv_ref, w_out_ref, b_ref, gain_ref, mask_ref,
                             o_ref, q_s, k_s, v_s, *, heads, dim_head, block_batch):
    """One grid step processes `block_batch` batch elements (channel-major).

    x_ref    : (bp, C, N)        input features (caller dtype: f32 or bf16)
    w_qkv_ref: (3*hidden, C)     qkv 1x1-conv weight, bf16
    w_out_ref: (C, hidden)       output 1x1-conv weight, bf16
    b_ref    : (C, 1)            output 1x1-conv bias, f32
    gain_ref : (C, 1)            RMSNorm gain * sqrt(C), f32
    mask_ref : (bp*hidden, bp*hidden)  block-diag (batch, head) mask * q-scale, f32
    o_ref    : (bp, C, N)        output (bf16 by default)
    q_s/k_s/v_s : (bp*hidden, N) bf16 VMEM scratch (packed MXU operands)
    """
    hidden = heads * dim_head
    bp = block_batch
    c = x_ref.shape[1]
    n = x_ref.shape[-1]
    use_vpu = c <= 16  # qkv projection contraction too shallow to be worth an MXU pass

    for bi in range(bp):
        xb = x_ref[bi]                                               # (C, N)
        x_op = xb.astype(jnp.float32 if use_vpu else jnp.bfloat16)
        rows = pl.ds(bi * hidden, hidden)

        # --- k branch: softmax over the spatial axis N (per channel).
        # exp(k) is stored UNNORMALIZED in bf16; the 1/sum_n denominator is folded into the
        # matching q rows below (k and q share the contraction index d), which removes a
        # (hidden, N) f32 normalize multiply and its live buffer.
        k = _project(w_qkv_ref[pl.ds(hidden, hidden), :], x_op, use_vpu=use_vpu)
        ek = jnp.exp(k - jnp.max(k, axis=-1, keepdims=True))         # (hidden, N) f32
        inv_k = pl.reciprocal(jnp.sum(ek, axis=-1, keepdims=True), approx=True)  # (hidden, 1)
        k_s[rows, :] = ek.astype(k_s.dtype)

        # --- q branch: softmax over dim_head within each head (per location), then fold
        # in the k-softmax denominator (the dim_head**-0.5 scale lives in the mask).
        q = _project(w_qkv_ref[pl.ds(0, hidden), :], x_op, use_vpu=use_vpu)
        q3 = q.reshape(heads, dim_head, n)
        eq = jnp.exp(q3 - jnp.max(q3, axis=1, keepdims=True))
        eq = eq * pl.reciprocal(jnp.sum(eq, axis=1, keepdims=True), approx=True)
        q_s[rows, :] = (eq.reshape(hidden, n) * inv_k).astype(q_s.dtype)

        # --- v branch.
        v = _project(w_qkv_ref[pl.ds(2 * hidden, hidden), :], x_op, use_vpu=use_vpu)
        v_s[rows, :] = v.astype(v_s.dtype)

    # Fused per-(batch, head) contexts in one wide MXU pass:
    #   ctxT[(b,h,e),(b',h',d)] = sum_n v_b[(h,e),n] * exp_k_{b'}[(h',d),n]
    # then keep only the (b==b', h==h') diagonal blocks; the q scale is in the mask and the
    # k denominator is already folded into q_s.
    ctxT = jax.lax.dot_general(
        v_s[...], k_s[...],
        dimension_numbers=(((1,), (1,)), ((), ())),
        preferred_element_type=jnp.float32)                           # (bp*hidden, bp*hidden)
    ctxT = ctxT * mask_ref[...]

    # out[(b,h,e), n] = sum_d ctx_b[h,d,e] * q_b[(h,d), n] — single wide MXU pass.
    out = jnp.dot(ctxT.astype(jnp.bfloat16), q_s[...],
                  preferred_element_type=jnp.float32)                 # (bp*hidden, N)

    for bi in range(bp):
        ob = out[bi * hidden:(bi + 1) * hidden, :].astype(jnp.bfloat16)

        # to_out[0]: 1x1 conv hidden -> C, with bias.
        y = jnp.dot(w_out_ref[...], ob, preferred_element_type=jnp.float32) + b_ref[...]

        # to_out[1]: RMSNorm == F.normalize(y, dim=channels) * g * sqrt(C)
        # (gain_ref already holds g*sqrt(C); max(norm,1e-12) == rsqrt(max(ss,1e-24))).
        ss = jnp.sum(y * y, axis=0, keepdims=True)                    # (1, N)
        y = y * jax.lax.rsqrt(jnp.maximum(ss, 1e-24)) * gain_ref[...]

        o_ref[bi] = y.astype(o_ref.dtype)


def linear_attention_pallas(x_nchw, w_qkv, w_out, b_out, g, *, heads, dim_head,
                            block_batch=None, out_dtype=jnp.bfloat16):
    """x_nchw: (B, C, H, W); w_qkv: (3*hidden, C); w_out: (C, hidden); b_out: (C,); g: (C,).

    x may be f32 or bf16 (no wrapper-side cast pass is inserted); output dtype defaults to
    bf16 to halve writeback traffic — pass out_dtype=jnp.float32 if the consumer needs f32.
    """
    b, c, h, w = x_nchw.shape
    n = h * w
    hidden = heads * dim_head
    scale = dim_head ** (-0.5)

    # Pack two batch elements per grid step when possible (fills the 256-wide MXU on
    # v6e/v7x) while keeping >= 2 grid steps so v7x's two TensorCores both get work.
    if block_batch is None:
        block_batch = 2 if (b % 2 == 0 and b >= 4) else 1
    if b % block_batch != 0:
        raise ValueError(f"block_batch={block_batch} must divide batch={b}")
    bp = block_batch
    hp = bp * hidden
    steps = b // bp

    # NCHW -> (B, C, N) is a free reshape; keep the caller's dtype (no extra HBM pass).
    x = x_nchw.reshape(b, c, n)
    w_qkv_b = w_qkv.astype(jnp.bfloat16)                  # (3*hidden, C)
    w_out_b = w_out.astype(jnp.bfloat16)                  # (C, hidden)
    bias = b_out.reshape(c, 1).astype(jnp.float32)
    gain = (g.astype(jnp.float32) * math.sqrt(c)).reshape(c, 1)

    # Block-diagonal (batch, head) mask with the q scale folded in.
    grp = jnp.arange(hp, dtype=jnp.int32) // dim_head
    mask = jnp.where(grp[:, None] == grp[None, :],
                     jnp.float32(scale), jnp.float32(0.0))            # (hp, hp)

    x_bytes = jnp.dtype(x.dtype).itemsize
    out_bytes = jnp.dtype(out_dtype).itemsize

    # VMEM budget: double-buffered I/O blocks + constants + bf16 scratch + rough f32 temps,
    # with 1.5x headroom — instead of hard-coding 64 MiB (== all of v7x's physical VMEM).
    in_block = bp * c * n * x_bytes
    out_block = bp * c * n * out_bytes
    const_bytes = (3 * hidden * c + c * hidden) * 2 + (2 * c + hp * hp) * 4
    scratch_bytes = 3 * hp * n * 2
    temp_bytes = 2 * hp * n * 4 + 2 * bp * c * n * 4 + 2 * hp * hp * 4
    vmem_est = 2 * (in_block + out_block) + 2 * const_bytes + scratch_bytes + temp_bytes
    vmem_limit = int(min(max(int(vmem_est * 1.5), 8 * 1024 * 1024), 100 * 1024 * 1024))

    # Advisory cost estimate so XLA schedules neighbours around the call sensibly.
    flops = steps * (bp * 2 * (3 * hidden) * c * n          # qkv projection
                     + 2 * hp * hp * n                       # context matmul
                     + 2 * hp * hp * n                       # apply matmul
                     + bp * 2 * c * hidden * n)              # output projection
    transcendentals = b * 2 * hidden * n                     # q and k exps
    bytes_accessed = (b * c * n * (x_bytes + out_bytes)
                      + (3 * hidden * c + c * hidden) * 2 + (2 * c + hp * hp) * 4)

    kernel = functools.partial(_linear_attention_kernel,
                               heads=heads, dim_head=dim_head, block_batch=bp)

    out = pl.pallas_call(
        kernel,
        out_shape=jax.ShapeDtypeStruct((b, c, n), out_dtype),
        grid_spec=pltpu.PrefetchScalarGridSpec(
            num_scalar_prefetch=0,
            grid=(steps,),
            in_specs=[
                pl.BlockSpec((bp, c, n), lambda i: (i, 0, 0)),
                pl.BlockSpec((3 * hidden, c), lambda i: (0, 0)),
                pl.BlockSpec((c, hidden), lambda i: (0, 0)),
                pl.BlockSpec((c, 1), lambda i: (0, 0)),
                pl.BlockSpec((c, 1), lambda i: (0, 0)),
                pl.BlockSpec((hp, hp), lambda i: (0, 0)),
            ],
            out_specs=pl.BlockSpec((bp, c, n), lambda i: (i, 0, 0)),
            scratch_shapes=[
                pltpu.VMEM((hp, n), jnp.bfloat16),   # packed q (softmax * 1/sum_k)
                pltpu.VMEM((hp, n), jnp.bfloat16),   # packed exp(k)
                pltpu.VMEM((hp, n), jnp.bfloat16),   # packed v
            ],
        ),
        compiler_params=pltpu.CompilerParams(
            dimension_semantics=("parallel",),
            vmem_limit_bytes=vmem_limit,
        ),
        cost_estimate=pl.CostEstimate(
            flops=int(flops),
            transcendentals=int(transcendentals),
            bytes_accessed=int(bytes_accessed),
        ),
    )(x, w_qkv_b, w_out_b, bias, gain, mask)

    # (B, C, N) -> NCHW (free reshape).
    return out.reshape(b, c, h, w)


def linear_attention_reference(x_nchw, w_qkv, w_out, b_out, g, *, heads, dim_head):
    """Pure-JAX mirror of the PyTorch forward (f32, HIGHEST-precision matmuls)."""
    b, c, h, w = x_nchw.shape
    n = h * w
    hidden = heads * dim_head
    scale = dim_head ** (-0.5)
    hp = jax.lax.Precision.HIGHEST

    x = x_nchw.astype(jnp.float32).reshape(b, c, n)
    qkv = jnp.einsum('oc,bcn->bon', w_qkv, x, precision=hp)
    q, k, v = jnp.split(qkv, 3, axis=1)
    q, k, v = (t.reshape(b, heads, dim_head, n) for t in (q, k, v))
    q = jax.nn.softmax(q, axis=-2) * scale
    k = jax.nn.softmax(k, axis=-1)
    context = jnp.einsum('bhdn,bhen->bhde', k, v, precision=hp)
    out = jnp.einsum('bhde,bhdn->bhen', context, q, precision=hp)
    out = out.reshape(b, hidden, n)
    y = jnp.einsum('oc,bcn->bon', w_out, out, precision=hp) + b_out.reshape(1, c, 1)
    norm = jnp.sqrt(jnp.sum(y * y, axis=1, keepdims=True))
    y = y / jnp.maximum(norm, 1e-12)
    y = y * g.reshape(1, c, 1) * math.sqrt(c)
    return y.reshape(b, c, h, w)


if __name__ == "__main__":
    # Small deterministic configuration consistent with LinearAttention defaults.
    # B=4 exercises the batch-pair packing (block_batch=2) with 2 parallel grid steps.
    B, DIM, H, W = 4, 4, 16, 16
    HEADS, DIM_HEAD = 4, 32
    HIDDEN = HEADS * DIM_HEAD

    key = jax.random.PRNGKey(0)
    k_x, k_qkv, k_out, k_b = jax.random.split(key, 4)

    x = jax.random.normal(k_x, (B, DIM, H, W), dtype=jnp.float32)
    # to_qkv: Conv2d(dim, hidden*3, 1, bias=False) -> weight (3*hidden, dim)
    w_qkv = 0.3 * jax.random.normal(k_qkv, (3 * HIDDEN, DIM), dtype=jnp.float32)
    # to_out[0]: Conv2d(hidden, dim, 1) -> weight (dim, hidden), bias (dim,)
    w_out = 0.5 * jax.random.normal(k_out, (DIM, HIDDEN), dtype=jnp.float32)
    b_out = 0.1 * jax.random.normal(k_b, (DIM,), dtype=jnp.float32)
    # RMSNorm gain, initialized to ones like the PyTorch module
    g = jnp.ones((DIM,), dtype=jnp.float32)

    out = linear_attention_pallas(x, w_qkv, w_out, b_out, g,
                                  heads=HEADS, dim_head=DIM_HEAD)
    out = jax.block_until_ready(out)

    ref = linear_attention_reference(x, w_qkv, w_out, b_out, g,
                                     heads=HEADS, dim_head=DIM_HEAD)
    ref = jax.block_until_ready(ref)

    assert out.shape == (B, DIM, H, W)
    assert jnp.all(jnp.isfinite(out))
    # bf16 MXU operands / bf16 output (f32 accumulation) vs an f32 HIGHEST-precision reference.
    out_f32 = out.astype(jnp.float32)
    assert jnp.allclose(out_f32, ref, atol=5e-2, rtol=5e-2), (
        f"max abs err = {jnp.max(jnp.abs(out_f32 - ref))}")

    print("KERNEL_OK")
</pallas_src>

<mosaic_0001>
module attributes {stable_mosaic.version = 11 : i64} {
  func.func @_linear_attention_kernel(%arg0: i32, %arg1: memref<2x4x256xf32, #tpu.memory_space<vmem>>, %arg2: memref<384x4xbf16, #tpu.memory_space<vmem>>, %arg3: memref<4x128xbf16, #tpu.memory_space<vmem>>, %arg4: memref<4x1xf32, #tpu.memory_space<vmem>>, %arg5: memref<4x1xf32, #tpu.memory_space<vmem>>, %arg6: memref<256x256xf32, #tpu.memory_space<vmem>>, %arg7: memref<2x4x256xbf16, #tpu.memory_space<vmem>>, %arg8: memref<256x256xbf16, #tpu.memory_space<vmem>>, %arg9: memref<256x256xbf16, #tpu.memory_space<vmem>>, %arg10: memref<256x256xbf16, #tpu.memory_space<vmem>>) attributes {dimension_semantics = [#tpu.dimension_semantics<parallel>], iteration_bounds = array<i64: 2>, scalar_prefetch = 0 : i64, scratch_operands = 3 : i64, tpu.core_type = #tpu.core_type<tc>, window_params = [{transform_indices = @transform_0, window_bounds = array<i64: 2, 4, 256>}, {pipeline_mode = #tpu.pipeline_mode<synchronous>, transform_indices = @transform_1, window_bounds = array<i64: 384, 4>}, {pipeline_mode = #tpu.pipeline_mode<synchronous>, transform_indices = @transform_2, window_bounds = array<i64: 4, 128>}, {pipeline_mode = #tpu.pipeline_mode<synchronous>, transform_indices = @transform_3, window_bounds = array<i64: 4, 1>}, {pipeline_mode = #tpu.pipeline_mode<synchronous>, transform_indices = @transform_4, window_bounds = array<i64: 4, 1>}, {pipeline_mode = #tpu.pipeline_mode<synchronous>, transform_indices = @transform_5, window_bounds = array<i64: 256, 256>}, {transform_indices = @transform_6, window_bounds = array<i64: 2, 4, 256>}]} {
    %c0 = arith.constant 0 : index
    %c0_0 = arith.constant 0 : index
    %c0_1 = arith.constant 0 : index
    %0 = vector.load %arg1[%c0, %c0_0, %c0_1] : memref<2x4x256xf32, #tpu.memory_space<vmem>>, vector<1x4x256xf32>
    %1 = vector.shape_cast %0 : vector<1x4x256xf32> to vector<4x256xf32>
    %c128 = arith.constant 128 : index
    %c0_2 = arith.constant 0 : index
    %2 = vector.load %arg2[%c128, %c0_2] : memref<384x4xbf16, #tpu.memory_space<vmem>>, vector<128x4xbf16>
    %3 = arith.extf %2 : vector<128x4xbf16> to vector<128x4xf32>
    %4 = vector.extract_strided_slice %3 {offsets = [0, 0], sizes = [128, 1], strides = [1, 1]} : vector<128x4xf32> to vector<128x1xf32>
    %5 = vector.extract_strided_slice %1 {offsets = [0, 0], sizes = [1, 256], strides = [1, 1]} : vector<4x256xf32> to vector<1x256xf32>
    %6 = vector.broadcast %4 : vector<128x1xf32> to vector<128x256xf32>
    %7 = vector.broadcast %5 : vector<1x256xf32> to vector<128x256xf32>
    %8 = arith.mulf %6, %7 : vector<128x256xf32>
    %9 = vector.extract_strided_slice %3 {offsets = [0, 1], sizes = [128, 1], strides = [1, 1]} : vector<128x4xf32> to vector<128x1xf32>
    %10 = vector.extract_strided_slice %1 {offsets = [1, 0], sizes = [1, 256], strides = [1, 1]} : vector<4x256xf32> to vector<1x256xf32>
    %11 = vector.broadcast %9 : vector<128x1xf32> to vector<128x256xf32>
    %12 = vector.broadcast %10 : vector<1x256xf32> to vector<128x256xf32>
    %13 = arith.mulf %11, %12 : vector<128x256xf32>
    %14 = arith.addf %8, %13 : vector<128x256xf32>
    %15 = vector.extract_strided_slice %3 {offsets = [0, 2], sizes = [128, 1], strides = [1, 1]} : vector<128x4xf32> to vector<128x1xf32>
    %16 = vector.extract_strided_slice %1 {offsets = [2, 0], sizes = [1, 256], strides = [1, 1]} : vector<4x256xf32> to vector<1x256xf32>
    %17 = vector.broadcast %15 : vector<128x1xf32> to vector<128x256xf32>
    %18 = vector.broadcast %16 : vector<1x256xf32> to vector<128x256xf32>
    %19 = arith.mulf %17, %18 : vector<128x256xf32>
    %20 = arith.addf %14, %19 : vector<128x256xf32>
    %21 = vector.extract_strided_slice %3 {offsets = [0, 3], sizes = [128, 1], strides = [1, 1]} : vector<128x4xf32> to vector<128x1xf32>
    %22 = vector.extract_strided_slice %1 {offsets = [3, 0], sizes = [1, 256], strides = [1, 1]} : vector<4x256xf32> to vector<1x256xf32>
    %23 = vector.broadcast %21 : vector<128x1xf32> to vector<128x256xf32>
    %24 = vector.broadcast %22 : vector<1x256xf32> to vector<128x256xf32>
    %25 = arith.mulf %23, %24 : vector<128x256xf32>
    %26 = arith.addf %20, %25 : vector<128x256xf32>
    %cst = arith.constant dense<0xFF800000> : vector<128xf32>
    %27 = vector.multi_reduction <maximumf>, %26, %cst [1] : vector<128x256xf32> to vector<128xf32>
    %28 = vector.shape_cast %27 : vector<128xf32> to vector<128x1xf32>
    %29 = vector.broadcast %28 : vector<128x1xf32> to vector<128x256xf32>
    %30 = arith.subf %26, %29 : vector<128x256xf32>
    %31 = math.exp %30 : vector<128x256xf32>
    %cst_3 = arith.constant dense<0.000000e+00> : vector<128xf32>
    %32 = vector.multi_reduction <add>, %31, %cst_3 [1] : vector<128x256xf32> to vector<128xf32>
    %33 = vector.shape_cast %32 : vector<128xf32> to vector<128x1xf32>
    %34 = tpu.reciprocal %33 {approx = true} : vector<128x1xf32> -> vector<128x1xf32>
    %35 = arith.truncf %31 : vector<128x256xf32> to vector<128x256xbf16>
    %c0_4 = arith.constant 0 : index
    %c0_5 = arith.constant 0 : index
    %36 = vector.load %arg9[%c0_4, %c0_5] : memref<256x256xbf16, #tpu.memory_space<vmem>>, vector<128x256xbf16>
    tpu.vector_store %arg9[%c0_4, %c0_5], %35 {strides = array<i32>} : memref<256x256xbf16, #tpu.memory_space<vmem>>, vector<128x256xbf16>,
    %c0_6 = arith.constant 0 : index
    %c0_7 = arith.constant 0 : index
    %37 = vector.load %arg2[%c0_6, %c0_7] : memref<384x4xbf16, #tpu.memory_space<vmem>>, vector<128x4xbf16>
    %38 = arith.extf %37 : vector<128x4xbf16> to vector<128x4xf32>
    %39 = vector.extract_strided_slice %38 {offsets = [0, 0], sizes = [128, 1], strides = [1, 1]} : vector<128x4xf32> to vector<128x1xf32>
    %40 = vector.extract_strided_slice %1 {offsets = [0, 0], sizes = [1, 256], strides = [1, 1]} : vector<4x256xf32> to vector<1x256xf32>
    %41 = vector.broadcast %39 : vector<128x1xf32> to vector<128x256xf32>
    %42 = vector.broadcast %40 : vector<1x256xf32> to vector<128x256xf32>
    %43 = arith.mulf %41, %42 : vector<128x256xf32>
    %44 = vector.extract_strided_slice %38 {offsets = [0, 1], sizes = [128, 1], strides = [1, 1]} : vector<128x4xf32> to vector<128x1xf32>
    %45 = vector.extract_strided_slice %1 {offsets = [1, 0], sizes = [1, 256], strides = [1, 1]} : vector<4x256xf32> to vector<1x256xf32>
    %46 = vector.broadcast %44 : vector<128x1xf32> to vector<128x256xf32>
    %47 = vector.broadcast %45 : vector<1x256xf32> to vector<128x256xf32>
    %48 = arith.mulf %46, %47 : vector<128x256xf32>
    %49 = arith.addf %43, %48 : vector<128x256xf32>
    %50 = vector.extract_strided_slice %38 {offsets = [0, 2], sizes = [128, 1], strides = [1, 1]} : vector<128x4xf32> to vector<128x1xf32>
    %51 = vector.extract_strided_slice %1 {offsets = [2, 0], sizes = [1, 256], strides = [1, 1]} : vector<4x256xf32> to vector<1x256xf32>
    %52 = vector.broadcast %50 : vector<128x1xf32> to vector<128x256xf32>
    %53 = vector.broadcast %51 : vector<1x256xf32> to vector<128x256xf32>
    %54 = arith.mulf %52, %53 : vector<128x256xf32>
    %55 = arith.addf %49, %54 : vector<128x256xf32>
    %56 = vector.extract_strided_slice %38 {offsets = [0, 3], sizes = [128, 1], strides = [1, 1]} : vector<128x4xf32> to vector<128x1xf32>
    %57 = vector.extract_strided_slice %1 {offsets = [3, 0], sizes = [1, 256], strides = [1, 1]} : vector<4x256xf32> to vector<1x256xf32>
    %58 = vector.broadcast %56 : vector<128x1xf32> to vector<128x256xf32>
    %59 = vector.broadcast %57 : vector<1x256xf32> to vector<128x256xf32>
    %60 = arith.mulf %58, %59 : vector<128x256xf32>
    %61 = arith.addf %55, %60 : vector<128x256xf32>
    %62 = vector.shape_cast %61 : vector<128x256xf32> to vector<4x32x256xf32>
    %cst_8 = arith.constant dense<0xFF800000> : vector<4x256xf32>
    %63 = vector.multi_reduction <maximumf>, %62, %cst_8 [1] : vector<4x32x256xf32> to vector<4x256xf32>
    %64 = vector.shape_cast %63 : vector<4x256xf32> to vector<4x1x256xf32>
    %65 = vector.broadcast %64 : vector<4x1x256xf32> to vector<4x32x256xf32>
    %66 = arith.subf %62, %65 : vector<4x32x256xf32>
    %67 = math.exp %66 : vector<4x32x256xf32>
    %cst_9 = arith.constant dense<0.000000e+00> : vector<4x256xf32>
    %68 = vector.multi_reduction <add>, %67, %cst_9 [1] : vector<4x32x256xf32> to vector<4x256xf32>
    %69 = vector.shape_cast %68 : vector<4x256xf32> to vector<4x1x256xf32>
    %70 = tpu.reciprocal %69 {approx = true} : vector<4x1x256xf32> -> vector<4x1x256xf32>
    %71 = vector.broadcast %70 : vector<4x1x256xf32> to vector<4x32x256xf32>
    %72 = arith.mulf %67, %71 : vector<4x32x256xf32>
    %73 = vector.shape_cast %72 : vector<4x32x256xf32> to vector<128x256xf32>
    %74 = vector.broadcast %34 : vector<128x1xf32> to vector<128x256xf32>
    %75 = arith.mulf %73, %74 : vector<128x256xf32>
    %76 = arith.truncf %75 : vector<128x256xf32> to vector<128x256xbf16>
    %c0_10 = arith.constant 0 : index
    %c0_11 = arith.constant 0 : index
    %77 = vector.load %arg8[%c0_10, %c0_11] : memref<256x256xbf16, #tpu.memory_space<vmem>>, vector<128x256xbf16>
    tpu.vector_store %arg8[%c0_10, %c0_11], %76 {strides = array<i32>} : memref<256x256xbf16, #tpu.memory_space<vmem>>, vector<128x256xbf16>,
    %c256 = arith.constant 256 : index
    %c0_12 = arith.constant 0 : index
    %78 = vector.load %arg2[%c256, %c0_12] : memref<384x4xbf16, #tpu.memory_space<vmem>>, vector<128x4xbf16>
    %79 = arith.extf %78 : vector<128x4xbf16> to vector<128x4xf32>
    %80 = vector.extract_strided_slice %79 {offsets = [0, 0], sizes = [128, 1], strides = [1, 1]} : vector<128x4xf32> to vector<128x1xf32>
    %81 = vector.extract_strided_slice %1 {offsets = [0, 0], sizes = [1, 256], strides = [1, 1]} : vector<4x256xf32> to vector<1x256xf32>
    %82 = vector.broadcast %80 : vector<128x1xf32> to vector<128x256xf32>
    %83 = vector.broadcast %81 : vector<1x256xf32> to vector<128x256xf32>
    %84 = arith.mulf %82, %83 : vector<128x256xf32>
    %85 = vector.extract_strided_slice %79 {offsets = [0, 1], sizes = [128, 1], strides = [1, 1]} : vector<128x4xf32> to vector<128x1xf32>
    %86 = vector.extract_strided_slice %1 {offsets = [1, 0], sizes = [1, 256], strides = [1, 1]} : vector<4x256xf32> to vector<1x256xf32>
    %87 = vector.broadcast %85 : vector<128x1xf32> to vector<128x256xf32>
    %88 = vector.broadcast %86 : vector<1x256xf32> to vector<128x256xf32>
    %89 = arith.mulf %87, %88 : vector<128x256xf32>
    %90 = arith.addf %84, %89 : vector<128x256xf32>
    %91 = vector.extract_strided_slice %79 {offsets = [0, 2], sizes = [128, 1], strides = [1, 1]} : vector<128x4xf32> to vector<128x1xf32>
    %92 = vector.extract_strided_slice %1 {offsets = [2, 0], sizes = [1, 256], strides = [1, 1]} : vector<4x256xf32> to vector<1x256xf32>
    %93 = vector.broadcast %91 : vector<128x1xf32> to vector<128x256xf32>
    %94 = vector.broadcast %92 : vector<1x256xf32> to vector<128x256xf32>
    %95 = arith.mulf %93, %94 : vector<128x256xf32>
    %96 = arith.addf %90, %95 : vector<128x256xf32>
    %97 = vector.extract_strided_slice %79 {offsets = [0, 3], sizes = [128, 1], strides = [1, 1]} : vector<128x4xf32> to vector<128x1xf32>
    %98 = vector.extract_strided_slice %1 {offsets = [3, 0], sizes = [1, 256], strides = [1, 1]} : vector<4x256xf32> to vector<1x256xf32>
    %99 = vector.broadcast %97 : vector<128x1xf32> to vector<128x256xf32>
    %100 = vector.broadcast %98 : vector<1x256xf32> to vector<128x256xf32>
    %101 = arith.mulf %99, %100 : vector<128x256xf32>
    %102 = arith.addf %96, %101 : vector<128x256xf32>
    %103 = arith.truncf %102 : vector<128x256xf32> to vector<128x256xbf16>
    %c0_13 = arith.constant 0 : index
    %c0_14 = arith.constant 0 : index
    %104 = vector.load %arg10[%c0_13, %c0_14] : memref<256x256xbf16, #tpu.memory_space<vmem>>, vector<128x256xbf16>
    tpu.vector_store %arg10[%c0_13, %c0_14], %103 {strides = array<i32>} : memref<256x256xbf16, #tpu.memory_space<vmem>>, vector<128x256xbf16>,
    %c1 = arith.constant 1 : index
    %c0_15 = arith.constant 0 : index
    %c0_16 = arith.constant 0 : index
    %105 = vector.load %arg1[%c1, %c0_15, %c0_16] : memref<2x4x256xf32, #tpu.memory_space<vmem>>, vector<1x4x256xf32>
    %106 = vector.shape_cast %105 : vector<1x4x256xf32> to vector<4x256xf32>
    %c128_17 = arith.constant 128 : index
    %c0_18 = arith.constant 0 : index
    %107 = vector.load %arg2[%c128_17, %c0_18] : memref<384x4xbf16, #tpu.memory_space<vmem>>, vector<128x4xbf16>
    %108 = arith.extf %107 : vector<128x4xbf16> to vector<128x4xf32>
    %109 = vector.extract_strided_slice %108 {offsets = [0, 0], sizes = [128, 1], strides = [1, 1]} : vector<128x4xf32> to vector<128x1xf32>
    %110 = vector.extract_strided_slice %106 {offsets = [0, 0], sizes = [1, 256], strides = [1, 1]} : vector<4x256xf32> to vector<1x256xf32>
    %111 = vector.broadcast %109 : vector<128x1xf32> to vector<128x256xf32>
    %112 = vector.broadcast %110 : vector<1x256xf32> to vector<128x256xf32>
    %113 = arith.mulf %111, %112 : vector<128x256xf32>
    %114 = vector.extract_strided_slice %108 {offsets = [0, 1], sizes = [128, 1], strides = [1, 1]} : vector<128x4xf32> to vector<128x1xf32>
    %115 = vector.extract_strided_slice %106 {offsets = [1, 0], sizes = [1, 256], strides = [1, 1]} : vector<4x256xf32> to vector<1x256xf32>
    %116 = vector.broadcast %114 : vector<128x1xf32> to vector<128x256xf32>
    %117 = vector.broadcast %115 : vector<1x256xf32> to vector<128x256xf32>
    %118 = arith.mulf %116, %117 : vector<128x256xf32>
    %119 = arith.addf %113, %118 : vector<128x256xf32>
    %120 = vector.extract_strided_slice %108 {offsets = [0, 2], sizes = [128, 1], strides = [1, 1]} : vector<128x4xf32> to vector<128x1xf32>
    %121 = vector.extract_strided_slice %106 {offsets = [2, 0], sizes = [1, 256], strides = [1, 1]} : vector<4x256xf32> to vector<1x256xf32>
    %122 = vector.broadcast %120 : vector<128x1xf32> to vector<128x256xf32>
    %123 = vector.broadcast %121 : vector<1x256xf32> to vector<128x256xf32>
    %124 = arith.mulf %122, %123 : vector<128x256xf32>
    %125 = arith.addf %119, %124 : vector<128x256xf32>
    %126 = vector.extract_strided_slice %108 {offsets = [0, 3], sizes = [128, 1], strides = [1, 1]} : vector<128x4xf32> to vector<128x1xf32>
    %127 = vector.extract_strided_slice %106 {offsets = [3, 0], sizes = [1, 256], strides = [1, 1]} : vector<4x256xf32> to vector<1x256xf32>
    %128 = vector.broadcast %126 : vector<128x1xf32> to vector<128x256xf32>
    %129 = vector.broadcast %127 : vector<1x256xf32> to vector<128x256xf32>
    %130 = arith.mulf %128, %129 : vector<128x256xf32>
    %131 = arith.addf %125, %130 : vector<128x256xf32>
    %cst_19 = arith.constant dense<0xFF800000> : vector<128xf32>
    %132 = vector.multi_reduction <maximumf>, %131, %cst_19 [1] : vector<128x256xf32> to vector<128xf32>
    %133 = vector.shape_cast %132 : vector<128xf32> to vector<128x1xf32>
    %134 = vector.broadcast %133 : vector<128x1xf32> to vector<128x256xf32>
    %135 = arith.subf %131, %134 : vector<128x256xf32>
    %136 = math.exp %135 : vector<128x256xf32>
    %cst_20 = arith.constant dense<0.000000e+00> : vector<128xf32>
    %137 = vector.multi_reduction <add>, %136, %cst_20 [1] : vector<128x256xf32> to vector<128xf32>
    %138 = vector.shape_cast %137 : vector<128xf32> to vector<128x1xf32>
    %139 = tpu.reciprocal %138 {approx = true} : vector<128x1xf32> -> vector<128x1xf32>
    %140 = arith.truncf %136 : vector<128x256xf32> to vector<128x256xbf16>
    %c128_21 = arith.constant 128 : index
    %c0_22 = arith.constant 0 : index
    %141 = vector.load %arg9[%c128_21, %c0_22] : memref<256x256xbf16, #tpu.memory_space<vmem>>, vector<128x256xbf16>
    tpu.vector_store %arg9[%c128_21, %c0_22], %140 {strides = array<i32>} : memref<256x256xbf16, #tpu.memory_space<vmem>>, vector<128x256xbf16>,
    %c0_23 = arith.constant 0 : index
    %c0_24 = arith.constant 0 : index
    %142 = vector.load %arg2[%c0_23, %c0_24] : memref<384x4xbf16, #tpu.memory_space<vmem>>, vector<128x4xbf16>
    %143 = arith.extf %142 : vector<128x4xbf16> to vector<128x4xf32>
    %144 = vector.extract_strided_slice %143 {offsets = [0, 0], sizes = [128, 1], strides = [1, 1]} : vector<128x4xf32> to vector<128x1xf32>
    %145 = vector.extract_strided_slice %106 {offsets = [0, 0], sizes = [1, 256], strides = [1, 1]} : vector<4x256xf32> to vector<1x256xf32>
    %146 = vector.broadcast %144 : vector<128x1xf32> to vector<128x256xf32>
    %147 = vector.broadcast %145 : vector<1x256xf32> to vector<128x256xf32>
    %148 = arith.mulf %146, %147 : vector<128x256xf32>
    %149 = vector.extract_strided_slice %143 {offsets = [0, 1], sizes = [128, 1], strides = [1, 1]} : vector<128x4xf32> to vector<128x1xf32>
    %150 = vector.extract_strided_slice %106 {offsets = [1, 0], sizes = [1, 256], strides = [1, 1]} : vector<4x256xf32> to vector<1x256xf32>
    %151 = vector.broadcast %149 : vector<128x1xf32> to vector<128x256xf32>
    %152 = vector.broadcast %150 : vector<1x256xf32> to vector<128x256xf32>
    %153 = arith.mulf %151, %152 : vector<128x256xf32>
    %154 = arith.addf %148, %153 : vector<128x256xf32>
    %155 = vector.extract_strided_slice %143 {offsets = [0, 2], sizes = [128, 1], strides = [1, 1]} : vector<128x4xf32> to vector<128x1xf32>
    %156 = vector.extract_strided_slice %106 {offsets = [2, 0], sizes = [1, 256], strides = [1, 1]} : vector<4x256xf32> to vector<1x256xf32>
    %157 = vector.broadcast %155 : vector<128x1xf32> to vector<128x256xf32>
    %158 = vector.broadcast %156 : vector<1x256xf32> to vector<128x256xf32>
    %159 = arith.mulf %157, %158 : vector<128x256xf32>
    %160 = arith.addf %154, %159 : vector<128x256xf32>
    %161 = vector.extract_strided_slice %143 {offsets = [0, 3], sizes = [128, 1], strides = [1, 1]} : vector<128x4xf32> to vector<128x1xf32>
    %162 = vector.extract_strided_slice %106 {offsets = [3, 0], sizes = [1, 256], strides = [1, 1]} : vector<4x256xf32> to vector<1x256xf32>
    %163 = vector.broadcast %161 : vector<128x1xf32> to vector<128x256xf32>
    %164 = vector.broadcast %162 : vector<1x256xf32> to vector<128x256xf32>
    %165 = arith.mulf %163, %164 : vector<128x256xf32>
    %166 = arith.addf %160, %165 : vector<128x256xf32>
    %167 = vector.shape_cast %166 : vector<128x256xf32> to vector<4x32x256xf32>
    %cst_25 = arith.constant dense<0xFF800000> : vector<4x256xf32>
    %168 = vector.multi_reduction <maximumf>, %167, %cst_25 [1] : vector<4x32x256xf32> to vector<4x256xf32>
    %169 = vector.shape_cast %168 : vector<4x256xf32> to vector<4x1x256xf32>
    %170 = vector.broadcast %169 : vector<4x1x256xf32> to vector<4x32x256xf32>
    %171 = arith.subf %167, %170 : vector<4x32x256xf32>
    %172 = math.exp %171 : vector<4x32x256xf32>
    %cst_26 = arith.constant dense<0.000000e+00> : vector<4x256xf32>
    %173 = vector.multi_reduction <add>, %172, %cst_26 [1] : vector<4x32x256xf32> to vector<4x256xf32>
    %174 = vector.shape_cast %173 : vector<4x256xf32> to vector<4x1x256xf32>
    %175 = tpu.reciprocal %174 {approx = true} : vector<4x1x256xf32> -> vector<4x1x256xf32>
    %176 = vector.broadcast %175 : vector<4x1x256xf32> to vector<4x32x256xf32>
    %177 = arith.mulf %172, %176 : vector<4x32x256xf32>
    %178 = vector.shape_cast %177 : vector<4x32x256xf32> to vector<128x256xf32>
    %179 = vector.broadcast %139 : vector<128x1xf32> to vector<128x256xf32>
    %180 = arith.mulf %178, %179 : vector<128x256xf32>
    %181 = arith.truncf %180 : vector<128x256xf32> to vector<128x256xbf16>
    %c128_27 = arith.constant 128 : index
    %c0_28 = arith.constant 0 : index
    %182 = vector.load %arg8[%c128_27, %c0_28] : memref<256x256xbf16, #tpu.memory_space<vmem>>, vector<128x256xbf16>
    tpu.vector_store %arg8[%c128_27, %c0_28], %181 {strides = array<i32>} : memref<256x256xbf16, #tpu.memory_space<vmem>>, vector<128x256xbf16>,
    %c256_29 = arith.constant 256 : index
    %c0_30 = arith.constant 0 : index
    %183 = vector.load %arg2[%c256_29, %c0_30] : memref<384x4xbf16, #tpu.memory_space<vmem>>, vector<128x4xbf16>
    %184 = arith.extf %183 : vector<128x4xbf16> to vector<128x4xf32>
    %185 = vector.extract_strided_slice %184 {offsets = [0, 0], sizes = [128, 1], strides = [1, 1]} : vector<128x4xf32> to vector<128x1xf32>
    %186 = vector.extract_strided_slice %106 {offsets = [0, 0], sizes = [1, 256], strides = [1, 1]} : vector<4x256xf32> to vector<1x256xf32>
    %187 = vector.broadcast %185 : vector<128x1xf32> to vector<128x256xf32>
    %188 = vector.broadcast %186 : vector<1x256xf32> to vector<128x256xf32>
    %189 = arith.mulf %187, %188 : vector<128x256xf32>
    %190 = vector.extract_strided_slice %184 {offsets = [0, 1], sizes = [128, 1], strides = [1, 1]} : vector<128x4xf32> to vector<128x1xf32>
    %191 = vector.extract_strided_slice %106 {offsets = [1, 0], sizes = [1, 256], strides = [1, 1]} : vector<4x256xf32> to vector<1x256xf32>
    %192 = vector.broadcast %190 : vector<128x1xf32> to vector<128x256xf32>
    %193 = vector.broadcast %191 : vector<1x256xf32> to vector<128x256xf32>
    %194 = arith.mulf %192, %193 : vector<128x256xf32>
    %195 = arith.addf %189, %194 : vector<128x256xf32>
    %196 = vector.extract_strided_slice %184 {offsets = [0, 2], sizes = [128, 1], strides = [1, 1]} : vector<128x4xf32> to vector<128x1xf32>
    %197 = vector.extract_strided_slice %106 {offsets = [2, 0], sizes = [1, 256], strides = [1, 1]} : vector<4x256xf32> to vector<1x256xf32>
    %198 = vector.broadcast %196 : vector<128x1xf32> to vector<128x256xf32>
    %199 = vector.broadcast %197 : vector<1x256xf32> to vector<128x256xf32>
    %200 = arith.mulf %198, %199 : vector<128x256xf32>
    %201 = arith.addf %195, %200 : vector<128x256xf32>
    %202 = vector.extract_strided_slice %184 {offsets = [0, 3], sizes = [128, 1], strides = [1, 1]} : vector<128x4xf32> to vector<128x1xf32>
    %203 = vector.extract_strided_slice %106 {offsets = [3, 0], sizes = [1, 256], strides = [1, 1]} : vector<4x256xf32> to vector<1x256xf32>
    %204 = vector.broadcast %202 : vector<128x1xf32> to vector<128x256xf32>
    %205 = vector.broadcast %203 : vector<1x256xf32> to vector<128x256xf32>
    %206 = arith.mulf %204, %205 : vector<128x256xf32>
    %207 = arith.addf %201, %206 : vector<128x256xf32>
    %208 = arith.truncf %207 : vector<128x256xf32> to vector<128x256xbf16>
    %c128_31 = arith.constant 128 : index
    %c0_32 = arith.constant 0 : index
    %209 = vector.load %arg10[%c128_31, %c0_32] : memref<256x256xbf16, #tpu.memory_space<vmem>>, vector<128x256xbf16>
    tpu.vector_store %arg10[%c128_31, %c0_32], %208 {strides = array<i32>} : memref<256x256xbf16, #tpu.memory_space<vmem>>, vector<128x256xbf16>,
    %c0_33 = arith.constant 0 : index
    %c0_34 = arith.constant 0 : index
    %210 = vector.load %arg10[%c0_33, %c0_34] : memref<256x256xbf16, #tpu.memory_space<vmem>>, vector<256x256xbf16>
    %c0_35 = arith.constant 0 : index
    %c0_36 = arith.constant 0 : index
    %211 = vector.load %arg9[%c0_35, %c0_36] : memref<256x256xbf16, #tpu.memory_space<vmem>>, vector<256x256xbf16>
    %cst_37 = arith.constant dense<0.000000e+00> : vector<256x256xf32>
    %212 = tpu.matmul %210, %211, %cst_37 {dimension_numbers = #tpu.dot_dimension_numbers<[1], [1], [0], [0], [0, 0, 1, 0], [], []>} : vector<256x256xbf16>, vector<256x256xbf16>, vector<256x256xf32> -> vector<256x256xf32>
    %c0_38 = arith.constant 0 : index
    %c0_39 = arith.constant 0 : index
    %213 = vector.load %arg6[%c0_38, %c0_39] : memref<256x256xf32, #tpu.memory_space<vmem>>, vector<256x256xf32>
    %214 = arith.mulf %212, %213 : vector<256x256xf32>
    %215 = arith.truncf %214 : vector<256x256xf32> to vector<256x256xbf16>
    %c0_40 = arith.constant 0 : index
    %c0_41 = arith.constant 0 : index
    %216 = vector.load %arg8[%c0_40, %c0_41] : memref<256x256xbf16, #tpu.memory_space<vmem>>, vector<256x256xbf16>
    %cst_42 = arith.constant dense<0.000000e+00> : vector<256x256xf32>
    %217 = tpu.matmul %215, %216, %cst_42 {dimension_numbers = #tpu.dot_dimension_numbers<[1], [0], [0], [1], [0, 0, 1, 1], [], []>} : vector<256x256xbf16>, vector<256x256xbf16>, vector<256x256xf32> -> vector<256x256xf32>
    %218 = vector.extract_strided_slice %217 {offsets = [0, 0], sizes = [128, 256], strides = [1, 1]} : vector<256x256xf32> to vector<128x256xf32>
    %219 = arith.truncf %218 : vector<128x256xf32> to vector<128x256xbf16>
    %c0_43 = arith.constant 0 : index
    %c0_44 = arith.constant 0 : index
    %220 = vector.load %arg3[%c0_43, %c0_44] : memref<4x128xbf16, #tpu.memory_space<vmem>>, vector<4x128xbf16>
    %cst_45 = arith.constant dense<0.000000e+00> : vector<4x256xf32>
    %221 = tpu.matmul %220, %219, %cst_45 {dimension_numbers = #tpu.dot_dimension_numbers<[1], [0], [0], [1], [0, 0, 1, 1], [], []>} : vector<4x128xbf16>, vector<128x256xbf16>, vector<4x256xf32> -> vector<4x256xf32>
    %c0_46 = arith.constant 0 : index
    %c0_47 = arith.constant 0 : index
    %222 = vector.load %arg4[%c0_46, %c0_47] : memref<4x1xf32, #tpu.memory_space<vmem>>, vector<4x1xf32>
    %223 = vector.broadcast %222 : vector<4x1xf32> to vector<4x256xf32>
    %224 = arith.addf %221, %223 : vector<4x256xf32>
    %225 = arith.mulf %224, %224 : vector<4x256xf32>
    %cst_48 = arith.constant dense<0.000000e+00> : vector<256xf32>
    %226 = vector.multi_reduction <add>, %225, %cst_48 [0] : vector<4x256xf32> to vector<256xf32>
    %227 = vector.shape_cast %226 : vector<256xf32> to vector<1x256xf32>
    %cst_49 = arith.constant 1.000000e-24 : f32
    %228 = vector.broadcast %cst_49 : f32 to vector<1x256xf32>
    %229 = arith.maximumf %227, %228 : vector<1x256xf32>
    %230 = math.rsqrt %229 : vector<1x256xf32>
    %231 = vector.broadcast %230 : vector<1x256xf32> to vector<4x256xf32>
    %232 = arith.mulf %224, %231 : vector<4x256xf32>
    %c0_50 = arith.constant 0 : index
    %c0_51 = arith.constant 0 : index
    %233 = vector.load %arg5[%c0_50, %c0_51] : memref<4x1xf32, #tpu.memory_space<vmem>>, vector<4x1xf32>
    %234 = vector.broadcast %233 : vector<4x1xf32> to vector<4x256xf32>
    %235 = arith.mulf %232, %234 : vector<4x256xf32>
    %236 = arith.truncf %235 : vector<4x256xf32> to vector<4x256xbf16>
    %c0_52 = arith.constant 0 : index
    %c0_53 = arith.constant 0 : index
    %c0_54 = arith.constant 0 : index
    %237 = vector.load %arg7[%c0_52, %c0_53, %c0_54] : memref<2x4x256xbf16, #tpu.memory_space<vmem>>, vector<1x4x256xbf16>
    %238 = vector.shape_cast %237 : vector<1x4x256xbf16> to vector<4x256xbf16>
    %239 = vector.shape_cast %236 : vector<4x256xbf16> to vector<1x4x256xbf16>
    tpu.vector_store %arg7[%c0_52, %c0_53, %c0_54], %239 {strides = array<i32>} : memref<2x4x256xbf16, #tpu.memory_space<vmem>>, vector<1x4x256xbf16>,
    %240 = vector.extract_strided_slice %217 {offsets = [128, 0], sizes = [128, 256], strides = [1, 1]} : vector<256x256xf32> to vector<128x256xf32>
    %241 = arith.truncf %240 : vector<128x256xf32> to vector<128x256xbf16>
    %c0_55 = arith.constant 0 : index
    %c0_56 = arith.constant 0 : index
    %242 = vector.load %arg3[%c0_55, %c0_56] : memref<4x128xbf16, #tpu.memory_space<vmem>>, vector<4x128xbf16>
    %cst_57 = arith.constant dense<0.000000e+00> : vector<4x256xf32>
    %243 = tpu.matmul %242, %241, %cst_57 {dimension_numbers = #tpu.dot_dimension_numbers<[1], [0], [0], [1], [0, 0, 1, 1], [], []>} : vector<4x128xbf16>, vector<128x256xbf16>, vector<4x256xf32> -> vector<4x256xf32>
    %c0_58 = arith.constant 0 : index
    %c0_59 = arith.constant 0 : index
    %244 = vector.load %arg4[%c0_58, %c0_59] : memref<4x1xf32, #tpu.memory_space<vmem>>, vector<4x1xf32>
    %245 = vector.broadcast %244 : vector<4x1xf32> to vector<4x256xf32>
    %246 = arith.addf %243, %245 : vector<4x256xf32>
    %247 = arith.mulf %246, %246 : vector<4x256xf32>
    %cst_60 = arith.constant dense<0.000000e+00> : vector<256xf32>
    %248 = vector.multi_reduction <add>, %247, %cst_60 [0] : vector<4x256xf32> to vector<256xf32>
    %249 = vector.shape_cast %248 : vector<256xf32> to vector<1x256xf32>
    %cst_61 = arith.constant 1.000000e-24 : f32
    %250 = vector.broadcast %cst_61 : f32 to vector<1x256xf32>
    %251 = arith.maximumf %249, %250 : vector<1x256xf32>
    %252 = math.rsqrt %251 : vector<1x256xf32>
    %253 = vector.broadcast %252 : vector<1x256xf32> to vector<4x256xf32>
    %254 = arith.mulf %246, %253 : vector<4x256xf32>
    %c0_62 = arith.constant 0 : index
    %c0_63 = arith.constant 0 : index
    %255 = vector.load %arg5[%c0_62, %c0_63] : memref<4x1xf32, #tpu.memory_space<vmem>>, vector<4x1xf32>
    %256 = vector.broadcast %255 : vector<4x1xf32> to vector<4x256xf32>
    %257 = arith.mulf %254, %256 : vector<4x256xf32>
    %258 = arith.truncf %257 : vector<4x256xf32> to vector<4x256xbf16>
    %c1_64 = arith.constant 1 : index
    %c0_65 = arith.constant 0 : index
    %c0_66 = arith.constant 0 : index
    %259 = vector.load %arg7[%c1_64, %c0_65, %c0_66] : memref<2x4x256xbf16, #tpu.memory_space<vmem>>, vector<1x4x256xbf16>
    %260 = vector.shape_cast %259 : vector<1x4x256xbf16> to vector<4x256xbf16>
    %261 = vector.shape_cast %258 : vector<4x256xbf16> to vector<1x4x256xbf16>
    tpu.vector_store %arg7[%c1_64, %c0_65, %c0_66], %261 {strides = array<i32>} : memref<2x4x256xbf16, #tpu.memory_space<vmem>>, vector<1x4x256xbf16>,
    return
  }
  func.func @transform_0(%arg0: i32) -> (i32, i32, i32) {
    %c0_i32 = arith.constant 0 : i32
    %c0_i32_0 = arith.constant 0 : i32
    %c0_i32_1 = arith.constant 0 : i32
    return %arg0, %c0_i32, %c0_i32_0 : i32, i32, i32
  }
  func.func @transform_1(%arg0: i32) -> (i32, i32) {
    %c0_i32 = arith.constant 0 : i32
    %c0_i32_0 = arith.constant 0 : i32
    %c0_i32_1 = arith.constant 0 : i32
    return %c0_i32, %c0_i32_0 : i32, i32
  }
  func.func @transform_2(%arg0: i32) -> (i32, i32) {
    %c0_i32 = arith.constant 0 : i32
    %c0_i32_0 = arith.constant 0 : i32
    %c0_i32_1 = arith.constant 0 : i32
    return %c0_i32, %c0_i32_0 : i32, i32
  }
  func.func @transform_3(%arg0: i32) -> (i32, i32) {
    %c0_i32 = arith.constant 0 : i32
    %c0_i32_0 = arith.constant 0 : i32
    %c0_i32_1 = arith.constant 0 : i32
    return %c0_i32, %c0_i32_0 : i32, i32
  }
  func.func @transform_4(%arg0: i32) -> (i32, i32) {
    %c0_i32 = arith.constant 0 : i32
    %c0_i32_0 = arith.constant 0 : i32
    %c0_i32_1 = arith.constant 0 : i32
    return %c0_i32, %c0_i32_0 : i32, i32
  }
  func.func @transform_5(%arg0: i32) -> (i32, i32) {
    %c0_i32 = arith.constant 0 : i32
    %c0_i32_0 = arith.constant 0 : i32
    %c0_i32_1 = arith.constant 0 : i32
    return %c0_i32, %c0_i32_0 : i32, i32
  }
  func.func @transform_6(%arg0: i32) -> (i32, i32, i32) {
    %c0_i32 = arith.constant 0 : i32
    %c0_i32_0 = arith.constant 0 : i32
    %c0_i32_1 = arith.constant 0 : i32
    return %arg0, %c0_i32, %c0_i32_0 : i32, i32, i32
  }
}

</mosaic_0001>

<llo_original>
// kernel: tpu_custom_call.1
$region0: #{tpu_custom_call.1}
  #allocation0 [shape = 'u32[]', space=smem, size = 0x4, offset = 0x4, fixed_abs, tag = 'smem constant byte address 0x4 - core index']
  #allocation1 [shape = 'u32[72,128]{1,0:T(1,128)}', space=vmem, size = 0x9000, scoped, tag = 'internal scratch']
  #allocation2 [shape = 'bf16[256,256]{1,0:T(8,128)(2,1)}', space=vmem, size = 0x20000, scoped, tag = 'scratch operand']
  #allocation3 [shape = 'bf16[256,256]{1,0:T(8,128)(2,1)}', space=vmem, size = 0x20000, scoped, tag = 'scratch operand']
  #allocation4 [shape = 'bf16[256,256]{1,0:T(8,128)(2,1)}', space=vmem, size = 0x20000, scoped, tag = 'scratch operand']
  %s0 = inlined_call_operand.vmem [shape: f32[4,4,256], index: 0, kind: input, shape index: {}]
  %s1 = inlined_call_operand.vmem [shape: bf16[384,4], index: 1, kind: input, shape index: {}]
  %s2 = inlined_call_operand.vmem [shape: bf16[4,128], index: 2, kind: input, shape index: {}]
  %s3 = inlined_call_operand.vmem [shape: f32[4,1], index: 3, kind: input, shape index: {}]
  %s4 = inlined_call_operand.vmem [shape: f32[4,1], index: 4, kind: input, shape index: {}]
  %s5 = inlined_call_operand.hbm [shape: f32[256,256], index: 5, kind: input, shape index: {}]
  %s6 = inlined_call_operand.hbm [shape: bf16[4,4,256], index: 6, kind: output, shape index: {}]
  %s7 = sld [smem:[#allocation0]]
  $region61: #{tpu_custom_call.1} parent=0
    _
  %s9 = ssub.s32 1, %s7
  %s10 = scalar_select 0, %s9, %s7
  $region1: #{tpu_custom_call.1} parent=0
    #allocation5 [shape = 'u8[262144]{0}', space=vmem, size = 0x40000, scoped, tag = 'input window, operand 5, single buffered']
    #allocation6 [shape = 's32[2]{0}', space=sflag, size = 0x8, scoped, tag = 'scoped memory for tpu_custom_call.1']
    #allocation7 [shape = 's32[2]{0}', space=sflag, size = 0x8, scoped, tag = 'scoped memory for tpu_custom_call.1']
    #allocation8 [shape = 'u8[8192]{0}', space=vmem, size = 0x2000, scoped, tag = 'output window, operand 0']
    %11 = vsyncpa [#allocation6], 0
    %12 = vsyncpa [#allocation7], 0
    %s13 = scalar_lea.sflag [#allocation7], 1
    %14 = vsyncpa %s13, 0
    loop: start=0, step=1, limit=4
    $region2: #{tpu_custom_call.1} parent=1 // loop_pre_header
      _
    $region3: #{tpu_custom_call.1} parent=1 // loop_header
      %s16 = sphi 0, %s20
      %p17 = scmp.ge.s32.totalorder %s16, 4
      %s26 = sphi 0, %s28
      %s29 = sphi 0, %s26
      %s30 = sphi 0, %s29
      %s46 = sphi 0, %s30
      %s50 = sphi 0, %s50
      %s52 = sphi 0, %s50
      %s53 = sphi 0, %s52
      %s67 = sphi 0, %s53
      %s71 = sphi 0, %s71
      %s73 = sphi 0, %s71
      %s74 = sphi 0, %s73
      %s88 = sphi 0, %s74
      %s92 = sphi 0, %s92
      %s94 = sphi 0, %s92
      %s95 = sphi 0, %s94
      %s109 = sphi 0, %s95
      %s113 = sphi 0, %s113
      %s115 = sphi 0, %s113
      %s116 = sphi 0, %s115
      %s130 = sphi 0, %s116
      %s134 = sphi 0, %s134
      %s136 = sphi 0, %s134
      %s137 = sphi 0, %s136
      %s151 = sphi 0, %s137
      %s157 = sphi 0, %s159
      %s160 = sphi 0, %s157
      %s161 = sphi 0, %s160
      %s177 = sphi 0, %s161
    $region4: #{tpu_custom_call.1} parent=1 // loop_header_branch
      %19 = sbr.rel (%p17) target = $region8
    $region5: #{tpu_custom_call.1} parent=1 // loop_body
      %s21 = ssub.s32 %s16, 1
      %s22 = ssub.s32 %s16, 2
      %s23 = sadd.s32 %s16, 1
      %s24 = ssub.s32 %s16, %s23
      %p25 = scmp.eq.s32.totalorder %s24, 0
      %s27 = sadd.s32 %s26, 1
      %s28 = scalar_select %p25, %s26, %s27
      %p31 = pneg %p25
      %p32 = scmp.eq.s32.totalorder %s16, 1
      %p33 = por %p31, %p32
      %p34 = scmp.ne.s32.totalorder %s26, %s29
      %p35 = scmp.eq.s32.totalorder %s16, 0
      %p36 = por %p34, %p35
      %p37 = scmp.ne.s32.totalorder %s26, %s29
      %p38 = scmp.eq.s32.totalorder %s21, 1
      %p39 = por %p37, %p38
      %p40 = scmp.ne.s32.totalorder %s29, %s30
      %p41 = scmp.eq.s32.totalorder %s21, 0
      %p42 = por %p40, %p41
      %p43 = scmp.ne.s32.totalorder %s29, %s30
      %p44 = scmp.eq.s32.totalorder %s22, 1
      %p45 = por %p43, %p44
      %p47 = scmp.ne.s32.totalorder %s30, %s46
      %p48 = scmp.eq.s32.totalorder %s22, 0
      %p49 = por %p47, %p48
      %s51 = sadd.s32 %s50, 1
      %p54 = scmp.eq.s32.totalorder %s16, 1
      %p55 = scmp.ne.s32.totalorder %s50, %s52
      %p56 = scmp.eq.s32.totalorder %s16, 0
      %p57 = por %p55, %p56
      %p58 = scmp.ne.s32.totalorder %s50, %s52
      %p59 = scmp.eq.s32.totalorder %s21, 1
      %p60 = por %p58, %p59
      %p61 = scmp.ne.s32.totalorder %s52, %s53
      %p62 = scmp.eq.s32.totalorder %s21, 0
      %p63 = por %p61, %p62
      %p64 = scmp.ne.s32.totalorder %s52, %s53
      %p65 = scmp.eq.s32.totalorder %s22, 1
      %p66 = por %p64, %p65
      %p68 = scmp.ne.s32.totalorder %s53, %s67
      %p69 = scmp.eq.s32.totalorder %s22, 0
      %p70 = por %p68, %p69
      %s72 = sadd.s32 %s71, 1
      %p75 = scmp.eq.s32.totalorder %s16, 1
      %p76 = scmp.ne.s32.totalorder %s71, %s73
      %p77 = scmp.eq.s32.totalorder %s16, 0
      %p78 = por %p76, %p77
      %p79 = scmp.ne.s32.totalorder %s71, %s73
      %p80 = scmp.eq.s32.totalorder %s21, 1
      %p81 = por %p79, %p80
      %p82 = scmp.ne.s32.totalorder %s73, %s74
      %p83 = scmp.eq.s32.totalorder %s21, 0
      %p84 = por %p82, %p83
      %p85 = scmp.ne.s32.totalorder %s73, %s74
      %p86 = scmp.eq.s32.totalorder %s22, 1
      %p87 = por %p85, %p86
      %p89 = scmp.ne.s32.totalorder %s74, %s88
      %p90 = scmp.eq.s32.totalorder %s22, 0
      %p91 = por %p89, %p90
      %s93 = sadd.s32 %s92, 1
      %p96 = scmp.eq.s32.totalorder %s16, 1
      %p97 = scmp.ne.s32.totalorder %s92, %s94
      %p98 = scmp.eq.s32.totalorder %s16, 0
      %p99 = por %p97, %p98
      %p100 = scmp.ne.s32.totalorder %s92, %s94
      %p101 = scmp.eq.s32.totalorder %s21, 1
      %p102 = por %p100, %p101
      %p103 = scmp.ne.s32.totalorder %s94, %s95
      %p104 = scmp.eq.s32.totalorder %s21, 0
      %p105 = por %p103, %p104
      %p106 = scmp.ne.s32.totalorder %s94, %s95
      %p107 = scmp.eq.s32.totalorder %s22, 1
      %p108 = por %p106, %p107
      %p110 = scmp.ne.s32.totalorder %s95, %s109
      %p111 = scmp.eq.s32.totalorder %s22, 0
      %p112 = por %p110, %p111
      %s114 = sadd.s32 %s113, 1
      %p117 = scmp.eq.s32.totalorder %s16, 1
      %p118 = scmp.ne.s32.totalorder %s113, %s115
      %p119 = scmp.eq.s32.totalorder %s16, 0
      %p120 = por %p118, %p119
      %p121 = scmp.ne.s32.totalorder %s113, %s115
      %p122 = scmp.eq.s32.totalorder %s21, 1
      %p123 = por %p121, %p122
      %p124 = scmp.ne.s32.totalorder %s115, %s116
      %p125 = scmp.eq.s32.totalorder %s21, 0
      %p126 = por %p124, %p125
      %p127 = scmp.ne.s32.totalorder %s115, %s116
      %p128 = scmp.eq.s32.totalorder %s22, 1
      %p129 = por %p127, %p128
      %p131 = scmp.ne.s32.totalorder %s116, %s130
      %p132 = scmp.eq.s32.totalorder %s22, 0
      %p133 = por %p131, %p132
      %s135 = sadd.s32 %s134, 1
      %p138 = scmp.eq.s32.totalorder %s16, 1
      %p139 = scmp.ne.s32.totalorder %s134, %s136
      %p140 = scmp.eq.s32.totalorder %s16, 0
      %p141 = por %p139, %p140
      %p142 = scmp.ne.s32.totalorder %s134, %s136
      %p143 = scmp.eq.s32.totalorder %s21, 1
      %p144 = por %p142, %p143
      %p145 = scmp.ne.s32.totalorder %s136, %s137
      %p146 = scmp.eq.s32.totalorder %s21, 0
      %p147 = por %p145, %p146
      %p148 = scmp.ne.s32.totalorder %s136, %s137
      %p149 = scmp.eq.s32.totalorder %s22, 1
      %p150 = por %p148, %p149
      %p152 = scmp.ne.s32.totalorder %s137, %s151
      %p153 = scmp.eq.s32.totalorder %s22, 0
      %p154 = por %p152, %p153
      %s155 = ssub.s32 %s16, %s23
      %p156 = scmp.eq.s32.totalorder %s155, 0
      %s158 = sadd.s32 %s157, 1
      %s159 = scalar_select %p156, %s157, %s158
      %p162 = pneg %p156
      %p163 = scmp.eq.s32.totalorder %s16, 1
      %p164 = por %p162, %p163
      %p165 = scmp.ne.s32.totalorder %s157, %s160
      %p166 = scmp.eq.s32.totalorder %s16, 0
      %p167 = por %p165, %p166
      %p168 = scmp.ne.s32.totalorder %s157, %s160
      %p169 = scmp.eq.s32.totalorder %s21, 1
      %p170 = por %p168, %p169
      %p171 = scmp.ne.s32.totalorder %s160, %s161
      %p172 = scmp.eq.s32.totalorder %s21, 0
      %p173 = por %p171, %p172
      %p174 = scmp.ne.s32.totalorder %s160, %s161
      %p175 = scmp.eq.s32.totalorder %s22, 1
      %p176 = por %p174, %p175
      %p178 = scmp.ne.s32.totalorder %s161, %s177
      %p179 = scmp.eq.s32.totalorder %s22, 0
      %p180 = por %p178, %p179
      %p181 = scmp.le.s32.totalorder 1, %s16
      %p182 = scmp.lt.s32.totalorder %s16, 3
      %p183 = pnand %p181, %p182
      %p184 = pneg %p183
      // Predicated region
      $region9: #{tpu_custom_call.1} parent=5 // pred_check
        _
      $region10: #{tpu_custom_call.1} parent=5 // pred_check_branch
        %186 = sbr.rel (%p183) target = $region12
      $region11: #{tpu_custom_call.1} parent=5 // pred_region
        %s187 = ssub.s32 %s16, 1
        // Predicated region
        $region13: #{tpu_custom_call.1} parent=11 // pred_check
          %p188 = pneg %p63
        $region14: #{tpu_custom_call.1} parent=11 // pred_check_branch
          %190 = sbr.rel (%p188) target = $region16
        $region15: #{tpu_custom_call.1} parent=11 // pred_region
          _
        $region16: #{tpu_custom_call.1} parent=11 // pred_fallthru
          _
        // Predicated region
        $region17: #{tpu_custom_call.1} parent=11 // pred_check
          %p191 = pneg %p84
        $region18: #{tpu_custom_call.1} parent=11 // pred_check_branch
          %193 = sbr.rel (%p191) target = $region20
        $region19: #{tpu_custom_call.1} parent=11 // pred_region
          _
        $region20: #{tpu_custom_call.1} parent=11 // pred_fallthru
          _
        // Predicated region
        $region21: #{tpu_custom_call.1} parent=11 // pred_check
          %p194 = pneg %p105
        $region22: #{tpu_custom_call.1} parent=11 // pred_check_branch
          %196 = sbr.rel (%p194) target = $region24
        $region23: #{tpu_custom_call.1} parent=11 // pred_region
          _
        $region24: #{tpu_custom_call.1} parent=11 // pred_fallthru
          _
        // Predicated region
        $region25: #{tpu_custom_call.1} parent=11 // pred_check
          %p197 = pneg %p126
        $region26: #{tpu_custom_call.1} parent=11 // pred_check_branch
          %199 = sbr.rel (%p197) target = $region28
        $region27: #{tpu_custom_call.1} parent=11 // pred_region
          _
        $region28: #{tpu_custom_call.1} parent=11 // pred_fallthru
          _
        // Predicated region
        $region29: #{tpu_custom_call.1} parent=11 // pred_check
          %p200 = pneg %p147
        $region30: #{tpu_custom_call.1} parent=11 // pred_check_branch
          %202 = sbr.rel (%p200) target = $region32
        $region31: #{tpu_custom_call.1} parent=11 // pred_region
          %204 = vsyncadd [#allocation6], 0
          %s205 = sshll.u32 %s5, 4
          %s206 = int_to_ptr.hbm [resolvable:$true] %s205
          %s207 = sshll.u32 [#allocation5], 4
          %s208 = int_to_ptr.vmem [resolvable:$true] %s207
          %213 = dma.hbm_to_vmem [thread:$0]  %s206, 8192, %s208, [#allocation6], 256, 256, 16
        $region32: #{tpu_custom_call.1} parent=11 // pred_fallthru
          _
      $region12: #{tpu_custom_call.1} parent=5 // pred_fallthru
        _
      %p214 = scmp.lt.s32.totalorder %s16, 2
      // Predicated region
      $region33: #{tpu_custom_call.1} parent=5 // pred_check
        %p215 = pneg %p214
      $region34: #{tpu_custom_call.1} parent=5 // pred_check_branch
        %217 = sbr.rel (%p215) target = $region36
      $region35: #{tpu_custom_call.1} parent=5 // pred_region
        // Predicated region
        $region37: #{tpu_custom_call.1} parent=35 // pred_check
          %p218 = pneg %p36
        $region38: #{tpu_custom_call.1} parent=35 // pred_check_branch
          %220 = sbr.rel (%p218) target = $region40
        $region39: #{tpu_custom_call.1} parent=35 // pred_region
          %s221 = smul.u32 2, %s16
          %p222 = scmp.lt.s32.totalorder %s221, 3
          %s223 = scalar_select %p222, %s221, 3
          %s224 = smul.addr %s223, 2
          %s225 = smul.addr %s224, 4
          %s226 = scalar_lea.vmem %s0, %s225
          %s227 = smul.u32 2, %s16
        $region40: #{tpu_custom_call.1} parent=35 // pred_fallthru
          _
      $region36: #{tpu_custom_call.1} parent=5 // pred_fallthru
        _
      %p228 = scmp.le.s32.totalorder 1, %s16
      %p229 = scmp.lt.s32.totalorder %s16, 3
      %p230 = pnand %p228, %p229
      %p231 = pneg %p230
      // Predicated region
      $region41: #{tpu_custom_call.1} parent=5 // pred_check
        _
      $region42: #{tpu_custom_call.1} parent=5 // pred_check_branch
        %233 = sbr.rel (%p230) target = $region44
      $region43: #{tpu_custom_call.1} parent=5 // pred_region
        %s234 = ssub.s32 %s16, 1
        // Predicated region
        $region45: #{tpu_custom_call.1} parent=43 // pred_check
          %p235 = pneg %p147
        $region46: #{tpu_custom_call.1} parent=43 // pred_check_branch
          %237 = sbr.rel (%p235) target = $region48
        $region47: #{tpu_custom_call.1} parent=43 // pred_region
          %239 = dma.done [#allocation6], 8192
        $region48: #{tpu_custom_call.1} parent=43 // pred_fallthru
          _
        %s240 = smul.u32 2, %s21
        %p241 = scmp.lt.s32.totalorder %s240, 3
        %s242 = scalar_select %p241, %s240, 3
        %s243 = smul.addr %s242, 2
        %s244 = smul.addr %s243, 4
        %s245 = scalar_lea.vmem %s0, %s244
        %p246 = pneg %p42
        %p247 = pneg %p39
        %p248 = pneg %p63
        %p249 = pneg %p60
        %p250 = pneg %p84
        %p251 = pneg %p81
        %p252 = pneg %p105
        %p253 = pneg %p102
        %p254 = pneg %p126
        %p255 = pneg %p123
        %p256 = pneg %p147
        %p257 = pneg %p144
        %p258 = pneg %p173
        %p259 = pneg %p170
        %s260 = sand.u32 %s160, 1
        %s261 = scalar_lea.sflag [#allocation7], %s260
        %s262 = sand.u32 %s160, 1
        %s263 = smul.addr %s262, 8
        %s264 = scalar_lea.vmem [#allocation8], %s263
        %s265 = smul.u32 2, %s21
        %p266 = scmp.lt.s32.totalorder %s265, 3
        %s267 = scalar_select %p266, %s265, 3
        %s268 = smul.addr %s267, 2
        %s269 = smul.addr %s268, 4
        %s270 = scalar_lea.vmem %s0, %s269
        %s271 = smul.u32 2, %s21
        %s272 = smul.u32 2, %s21
        %v273 = vld [vmem:[%s270] sm:$0xff]
        %v274 = vld [vmem:[%s1 + $0x40] sm:$0xf]
        %v275 = vld [vmem:[%s1 + $0x44] sm:$0xf]
        %v276 = vld [vmem:[%s1 + $0x48] sm:$0xf]
        %v277 = vld [vmem:[%s1 + $0x4c] sm:$0xf]
        %v278 = vld [vmem:[%s1 + $0x50] sm:$0xf]
        %v279 = vld [vmem:[%s1 + $0x54] sm:$0xf]
        %v280 = vld [vmem:[%s1 + $0x58] sm:$0xf]
        %v281 = vld [vmem:[%s1 + $0x5c] sm:$0xf]
        %v282 = vld [vmem:[%s1 + $0x60] sm:$0xf]
        %v283 = vld [vmem:[%s1 + $0x64] sm:$0xf]
        %v284 = vld [vmem:[%s1 + $0x68] sm:$0xf]
        %v285 = vld [vmem:[%s1 + $0x6c] sm:$0xf]
        %v286 = vld [vmem:[%s1 + $0x70] sm:$0xf]
        %v287 = vld [vmem:[%s1 + $0x74] sm:$0xf]
        %v288 = vld [vmem:[%s1 + $0x78] sm:$0xf]
        %v289 = vld [vmem:[%s1 + $0x7c] sm:$0xf]
        %v290 = vunpack.c.l.bf16 %v274
        %v291 = vunpack.c.l.bf16 %v275
        %v292 = vunpack.c.l.bf16 %v276
        %v293 = vunpack.c.l.bf16 %v277
        %v294 = vunpack.c.l.bf16 %v278
        %v295 = vunpack.c.l.bf16 %v279
        %v296 = vunpack.c.l.bf16 %v280
        %v297 = vunpack.c.l.bf16 %v281
        %v298 = vunpack.c.l.bf16 %v282
        %v299 = vunpack.c.l.bf16 %v283
        %v300 = vunpack.c.l.bf16 %v284
        %v301 = vunpack.c.l.bf16 %v285
        %v302 = vunpack.c.l.bf16 %v286
        %v303 = vunpack.c.l.bf16 %v287
        %v304 = vunpack.c.l.bf16 %v288
        %v305 = vunpack.c.l.bf16 %v289
        %307 = vset.pattern.permute.xlu0 0
        %308 = vperm.xlu0 %307, %v290
        %v309 = vpop.permute.xlu0 %308
        %312 = vset.pattern.permute.xlu0 0
        %313 = vperm.xlu0 %312, %v291
        %v314 = vpop.permute.xlu0 %313
        %317 = vset.pattern.permute.xlu0 0
        %318 = vperm.xlu0 %317, %v292
        %v319 = vpop.permute.xlu0 %318
        %322 = vset.pattern.permute.xlu0 0
        %323 = vperm.xlu0 %322, %v293
        %v324 = vpop.permute.xlu0 %323
        %327 = vset.pattern.permute.xlu0 0
        %328 = vperm.xlu0 %327, %v294
        %v329 = vpop.permute.xlu0 %328
        %332 = vset.pattern.permute.xlu0 0
        %333 = vperm.xlu0 %332, %v295
        %v334 = vpop.permute.xlu0 %333
        %337 = vset.pattern.permute.xlu0 0
        %338 = vperm.xlu0 %337, %v296
        %v339 = vpop.permute.xlu0 %338
        %342 = vset.pattern.permute.xlu0 0
        %343 = vperm.xlu0 %342, %v297
        %v344 = vpop.permute.xlu0 %343
        %347 = vset.pattern.permute.xlu0 0
        %348 = vperm.xlu0 %347, %v298
        %v349 = vpop.permute.xlu0 %348
        %352 = vset.pattern.permute.xlu0 0
        %353 = vperm.xlu0 %352, %v299
        %v354 = vpop.permute.xlu0 %353
        %357 = vset.pattern.permute.xlu0 0
        %358 = vperm.xlu0 %357, %v300
        %v359 = vpop.permute.xlu0 %358
        %362 = vset.pattern.permute.xlu0 0
        %363 = vperm.xlu0 %362, %v301
        %v364 = vpop.permute.xlu0 %363
        %367 = vset.pattern.permute.xlu0 0
        %368 = vperm.xlu0 %367, %v302
        %v369 = vpop.permute.xlu0 %368
        %372 = vset.pattern.permute.xlu0 0
        %373 = vperm.xlu0 %372, %v303
        %v374 = vpop.permute.xlu0 %373
        %377 = vset.pattern.permute.xlu0 0
        %378 = vperm.xlu0 %377, %v304
        %v379 = vpop.permute.xlu0 %378
        %382 = vset.pattern.permute.xlu0 0
        %383 = vperm.xlu0 %382, %v305
        %v384 = vpop.permute.xlu0 %383
        %v387 = vperm.slane %v273, 0
        %v388 = vperm.slane %v273, 4
        %v391 = vperm.slane %v387, 0
        %v392 = vperm.slane %v388, 0
        %v393 = vmul.f32 %v309, %v391
        %v394 = vmul.f32 %v309, %v392
        %v395 = vmul.f32 %v314, %v391
        %v396 = vmul.f32 %v314, %v392
        %v397 = vmul.f32 %v319, %v391
        %v398 = vmul.f32 %v319, %v392
        %v399 = vmul.f32 %v324, %v391
        %v400 = vmul.f32 %v324, %v392
        %v401 = vmul.f32 %v329, %v391
        %v402 = vmul.f32 %v329, %v392
        %v403 = vmul.f32 %v334, %v391
        %v404 = vmul.f32 %v334, %v392
        %v405 = vmul.f32 %v339, %v391
        %v406 = vmul.f32 %v339, %v392
        %v407 = vmul.f32 %v344, %v391
        %v408 = vmul.f32 %v344, %v392
        %v409 = vmul.f32 %v349, %v391
        %v410 = vmul.f32 %v349, %v392
        %v411 = vmul.f32 %v354, %v391
        %v412 = vmul.f32 %v354, %v392
        %v413 = vmul.f32 %v359, %v391
        %v414 = vmul.f32 %v359, %v392
        %v415 = vmul.f32 %v364, %v391
        %v416 = vmul.f32 %v364, %v392
        %v417 = vmul.f32 %v369, %v391
        %v418 = vmul.f32 %v369, %v392
        %v419 = vmul.f32 %v374, %v391
        %v420 = vmul.f32 %v374, %v392
        %v421 = vmul.f32 %v379, %v391
        %v422 = vmul.f32 %v379, %v392
        %v423 = vmul.f32 %v384, %v391
        %v424 = vmul.f32 %v384, %v392
        %425 = vset.pattern.permute.xlu0 1
        %426 = vperm.xlu0 %425, %v290
        %v427 = vpop.permute.xlu0 %426
        %429 = vset.pattern.permute.xlu0 1
        %430 = vperm.xlu0 %429, %v291
        %v431 = vpop.permute.xlu0 %430
        %433 = vset.pattern.permute.xlu0 1
        %434 = vperm.xlu0 %433, %v292
        %v435 = vpop.permute.xlu0 %434
        %437 = vset.pattern.permute.xlu0 1
        %438 = vperm.xlu0 %437, %v293
        %v439 = vpop.permute.xlu0 %438
        %441 = vset.pattern.permute.xlu0 1
        %442 = vperm.xlu0 %441, %v294
        %v443 = vpop.permute.xlu0 %442
        %445 = vset.pattern.permute.xlu0 1
        %446 = vperm.xlu0 %445, %v295
        %v447 = vpop.permute.xlu0 %446
        %449 = vset.pattern.permute.xlu0 1
        %450 = vperm.xlu0 %449, %v296
        %v451 = vpop.permute.xlu0 %450
        %453 = vset.pattern.permute.xlu0 1
        %454 = vperm.xlu0 %453, %v297
        %v455 = vpop.permute.xlu0 %454
        %457 = vset.pattern.permute.xlu0 1
        %458 = vperm.xlu0 %457, %v298
        %v459 = vpop.permute.xlu0 %458
        %461 = vset.pattern.permute.xlu0 1
        %462 = vperm.xlu0 %461, %v299
        %v463 = vpop.permute.xlu0 %462
        %465 = vset.pattern.permute.xlu0 1
        %466 = vperm.xlu0 %465, %v300
        %v467 = vpop.permute.xlu0 %466
        %469 = vset.pattern.permute.xlu0 1
        %470 = vperm.xlu0 %469, %v301
        %v471 = vpop.permute.xlu0 %470
        %473 = vset.pattern.permute.xlu0 1
        %474 = vperm.xlu0 %473, %v302
        %v475 = vpop.permute.xlu0 %474
        %477 = vset.pattern.permute.xlu0 1
        %478 = vperm.xlu0 %477, %v303
        %v479 = vpop.permute.xlu0 %478
        %481 = vset.pattern.permute.xlu0 1
        %482 = vperm.xlu0 %481, %v304
        %v483 = vpop.permute.xlu0 %482
        %485 = vset.pattern.permute.xlu0 1
        %486 = vperm.xlu0 %485, %v305
        %v487 = vpop.permute.xlu0 %486
        %v489 = vperm.slane %v273, 1
        %v490 = vperm.slane %v273, 5
        %v493 = vperm.slane %v489, 1
        %v494 = vperm.slane %v490, 1
        %v495 = vmul.f32 %v427, %v493
        %v496 = vmul.f32 %v427, %v494
        %v497 = vmul.f32 %v431, %v493
        %v498 = vmul.f32 %v431, %v494
        %v499 = vmul.f32 %v435, %v493
        %v500 = vmul.f32 %v435, %v494
        %v501 = vmul.f32 %v439, %v493
        %v502 = vmul.f32 %v439, %v494
        %v503 = vmul.f32 %v443, %v493
        %v504 = vmul.f32 %v443, %v494
        %v505 = vmul.f32 %v447, %v493
        %v506 = vmul.f32 %v447, %v494
        %v507 = vmul.f32 %v451, %v493
        %v508 = vmul.f32 %v451, %v494
        %v509 = vmul.f32 %v455, %v493
        %v510 = vmul.f32 %v455, %v494
        %v511 = vmul.f32 %v459, %v493
        %v512 = vmul.f32 %v459, %v494
        %v513 = vmul.f32 %v463, %v493
        %v514 = vmul.f32 %v463, %v494
        %v515 = vmul.f32 %v467, %v493
        %v516 = vmul.f32 %v467, %v494
        %v517 = vmul.f32 %v471, %v493
        %v518 = vmul.f32 %v471, %v494
        %v519 = vmul.f32 %v475, %v493
        %v520 = vmul.f32 %v475, %v494
        %v521 = vmul.f32 %v479, %v493
        %v522 = vmul.f32 %v479, %v494
        %v523 = vmul.f32 %v483, %v493
        %v524 = vmul.f32 %v483, %v494
        %v525 = vmul.f32 %v487, %v493
        %v526 = vmul.f32 %v487, %v494
        %v527 = vadd.f32 %v393, %v495
        %v528 = vadd.f32 %v394, %v496
        %v529 = vadd.f32 %v395, %v497
        %v530 = vadd.f32 %v396, %v498
        %v531 = vadd.f32 %v397, %v499
        %v532 = vadd.f32 %v398, %v500
        %v533 = vadd.f32 %v399, %v501
        %v534 = vadd.f32 %v400, %v502
        %v535 = vadd.f32 %v401, %v503
        %v536 = vadd.f32 %v402, %v504
        %v537 = vadd.f32 %v403, %v505
        %v538 = vadd.f32 %v404, %v506
        %v539 = vadd.f32 %v405, %v507
        %v540 = vadd.f32 %v406, %v508
        %v541 = vadd.f32 %v407, %v509
        %v542 = vadd.f32 %v408, %v510
        %v543 = vadd.f32 %v409, %v511
        %v544 = vadd.f32 %v410, %v512
        %v545 = vadd.f32 %v411, %v513
        %v546 = vadd.f32 %v412, %v514
        %v547 = vadd.f32 %v413, %v515
        %v548 = vadd.f32 %v414, %v516
        %v549 = vadd.f32 %v415, %v517
        %v550 = vadd.f32 %v416, %v518
        %v551 = vadd.f32 %v417, %v519
        %v552 = vadd.f32 %v418, %v520
        %v553 = vadd.f32 %v419, %v521
        %v554 = vadd.f32 %v420, %v522
        %v555 = vadd.f32 %v421, %v523
        %v556 = vadd.f32 %v422, %v524
        %v557 = vadd.f32 %v423, %v525
        %v558 = vadd.f32 %v424, %v526
        %559 = vset.pattern.permute.xlu0 2
        %560 = vperm.xlu0 %559, %v290
        %v561 = vpop.permute.xlu0 %560
        %563 = vset.pattern.permute.xlu0 2
        %564 = vperm.xlu0 %563, %v291
        %v565 = vpop.permute.xlu0 %564
        %567 = vset.pattern.permute.xlu0 2
        %568 = vperm.xlu0 %567, %v292
        %v569 = vpop.permute.xlu0 %568
        %571 = vset.pattern.permute.xlu0 2
        %572 = vperm.xlu0 %571, %v293
        %v573 = vpop.permute.xlu0 %572
        %575 = vset.pattern.permute.xlu0 2
        %576 = vperm.xlu0 %575, %v294
        %v577 = vpop.permute.xlu0 %576
        %579 = vset.pattern.permute.xlu0 2
        %580 = vperm.xlu0 %579, %v295
        %v581 = vpop.permute.xlu0 %580
        %583 = vset.pattern.permute.xlu0 2
        %584 = vperm.xlu0 %583, %v296
        %v585 = vpop.permute.xlu0 %584
        %587 = vset.pattern.permute.xlu0 2
        %588 = vperm.xlu0 %587, %v297
        %v589 = vpop.permute.xlu0 %588
        %591 = vset.pattern.permute.xlu0 2
        %592 = vperm.xlu0 %591, %v298
        %v593 = vpop.permute.xlu0 %592
        %595 = vset.pattern.permute.xlu0 2
        %596 = vperm.xlu0 %595, %v299
        %v597 = vpop.permute.xlu0 %596
        %599 = vset.pattern.permute.xlu0 2
        %600 = vperm.xlu0 %599, %v300
        %v601 = vpop.permute.xlu0 %600
        %603 = vset.pattern.permute.xlu0 2
        %604 = vperm.xlu0 %603, %v301
        %v605 = vpop.permute.xlu0 %604
        %607 = vset.pattern.permute.xlu0 2
        %608 = vperm.xlu0 %607, %v302
        %v609 = vpop.permute.xlu0 %608
        %611 = vset.pattern.permute.xlu0 2
        %612 = vperm.xlu0 %611, %v303
        %v613 = vpop.permute.xlu0 %612
        %615 = vset.pattern.permute.xlu0 2
        %616 = vperm.xlu0 %615, %v304
        %v617 = vpop.permute.xlu0 %616
        %619 = vset.pattern.permute.xlu0 2
        %620 = vperm.xlu0 %619, %v305
        %v621 = vpop.permute.xlu0 %620
        %v623 = vperm.slane %v273, 2
        %v624 = vperm.slane %v273, 6
        %v627 = vperm.slane %v623, 2
        %v628 = vperm.slane %v624, 2
        %v629 = vmul.f32 %v561, %v627
        %v630 = vmul.f32 %v561, %v628
        %v631 = vmul.f32 %v565, %v627
        %v632 = vmul.f32 %v565, %v628
        %v633 = vmul.f32 %v569, %v627
        %v634 = vmul.f32 %v569, %v628
        %v635 = vmul.f32 %v573, %v627
        %v636 = vmul.f32 %v573, %v628
        %v637 = vmul.f32 %v577, %v627
        %v638 = vmul.f32 %v577, %v628
        %v639 = vmul.f32 %v581, %v627
        %v640 = vmul.f32 %v581, %v628
        %v641 = vmul.f32 %v585, %v627
        %v642 = vmul.f32 %v585, %v628
        %v643 = vmul.f32 %v589, %v627
        %v644 = vmul.f32 %v589, %v628
        %v645 = vmul.f32 %v593, %v627
        %v646 = vmul.f32 %v593, %v628
        %v647 = vmul.f32 %v597, %v627
        %v648 = vmul.f32 %v597, %v628
        %v649 = vmul.f32 %v601, %v627
        %v650 = vmul.f32 %v601, %v628
        %v651 = vmul.f32 %v605, %v627
        %v652 = vmul.f32 %v605, %v628
        %v653 = vmul.f32 %v609, %v627
        %v654 = vmul.f32 %v609, %v628
        %v655 = vmul.f32 %v613, %v627
        %v656 = vmul.f32 %v613, %v628
        %v657 = vmul.f32 %v617, %v627
        %v658 = vmul.f32 %v617, %v628
        %v659 = vmul.f32 %v621, %v627
        %v660 = vmul.f32 %v621, %v628
        %v661 = vadd.f32 %v527, %v629
        %v662 = vadd.f32 %v528, %v630
        %v663 = vadd.f32 %v529, %v631
        %v664 = vadd.f32 %v530, %v632
        %v665 = vadd.f32 %v531, %v633
        %v666 = vadd.f32 %v532, %v634
        %v667 = vadd.f32 %v533, %v635
        %v668 = vadd.f32 %v534, %v636
        %v669 = vadd.f32 %v535, %v637
        %v670 = vadd.f32 %v536, %v638
        %v671 = vadd.f32 %v537, %v639
        %v672 = vadd.f32 %v538, %v640
        %v673 = vadd.f32 %v539, %v641
        %v674 = vadd.f32 %v540, %v642
        %v675 = vadd.f32 %v541, %v643
        %v676 = vadd.f32 %v542, %v644
        %v677 = vadd.f32 %v543, %v645
        %v678 = vadd.f32 %v544, %v646
        %v679 = vadd.f32 %v545, %v647
        %v680 = vadd.f32 %v546, %v648
        %v681 = vadd.f32 %v547, %v649
        %v682 = vadd.f32 %v548, %v650
        %v683 = vadd.f32 %v549, %v651
        %v684 = vadd.f32 %v550, %v652
        %v685 = vadd.f32 %v551, %v653
        %v686 = vadd.f32 %v552, %v654
        %v687 = vadd.f32 %v553, %v655
        %v688 = vadd.f32 %v554, %v656
        %v689 = vadd.f32 %v555, %v657
        %v690 = vadd.f32 %v556, %v658
        %v691 = vadd.f32 %v557, %v659
        %v692 = vadd.f32 %v558, %v660
        %693 = vset.pattern.permute.xlu0 3
        %694 = vperm.xlu0 %693, %v290
        %v695 = vpop.permute.xlu0 %694
        %697 = vset.pattern.permute.xlu0 3
        %698 = vperm.xlu0 %697, %v291
        %v699 = vpop.permute.xlu0 %698
        %701 = vset.pattern.permute.xlu0 3
        %702 = vperm.xlu0 %701, %v292
        %v703 = vpop.permute.xlu0 %702
        %705 = vset.pattern.permute.xlu0 3
        %706 = vperm.xlu0 %705, %v293
        %v707 = vpop.permute.xlu0 %706
        %709 = vset.pattern.permute.xlu0 3
        %710 = vperm.xlu0 %709, %v294
        %v711 = vpop.permute.xlu0 %710
        %713 = vset.pattern.permute.xlu0 3
        %714 = vperm.xlu0 %713, %v295
        %v715 = vpop.permute.xlu0 %714
        %717 = vset.pattern.permute.xlu0 3
        %718 = vperm.xlu0 %717, %v296
        %v719 = vpop.permute.xlu0 %718
        %721 = vset.pattern.permute.xlu0 3
        %722 = vperm.xlu0 %721, %v297
        %v723 = vpop.permute.xlu0 %722
        %725 = vset.pattern.permute.xlu0 3
        %726 = vperm.xlu0 %725, %v298
        %v727 = vpop.permute.xlu0 %726
        %729 = vset.pattern.permute.xlu0 3
        %730 = vperm.xlu0 %729, %v299
        %v731 = vpop.permute.xlu0 %730
        %733 = vset.pattern.permute.xlu0 3
        %734 = vperm.xlu0 %733, %v300
        %v735 = vpop.permute.xlu0 %734
        %737 = vset.pattern.permute.xlu0 3
        %738 = vperm.xlu0 %737, %v301
        %v739 = vpop.permute.xlu0 %738
        %741 = vset.pattern.permute.xlu0 3
        %742 = vperm.xlu0 %741, %v302
        %v743 = vpop.permute.xlu0 %742
        %745 = vset.pattern.permute.xlu0 3
        %746 = vperm.xlu0 %745, %v303
        %v747 = vpop.permute.xlu0 %746
        %749 = vset.pattern.permute.xlu0 3
        %750 = vperm.xlu0 %749, %v304
        %v751 = vpop.permute.xlu0 %750
        %753 = vset.pattern.permute.xlu0 3
        %754 = vperm.xlu0 %753, %v305
        %v755 = vpop.permute.xlu0 %754
        %v757 = vperm.slane %v273, 3
        %v758 = vperm.slane %v273, 7
        %v761 = vperm.slane %v757, 3
        %v762 = vperm.slane %v758, 3
        %v763 = vmul.f32 %v695, %v761
        %v764 = vmul.f32 %v695, %v762
        %v765 = vmul.f32 %v699, %v761
        %v766 = vmul.f32 %v699, %v762
        %v767 = vmul.f32 %v703, %v761
        %v768 = vmul.f32 %v703, %v762
        %v769 = vmul.f32 %v707, %v761
        %v770 = vmul.f32 %v707, %v762
        %v771 = vmul.f32 %v711, %v761
        %v772 = vmul.f32 %v711, %v762
        %v773 = vmul.f32 %v715, %v761
        %v774 = vmul.f32 %v715, %v762
        %v775 = vmul.f32 %v719, %v761
        %v776 = vmul.f32 %v719, %v762
        %v777 = vmul.f32 %v723, %v761
        %v778 = vmul.f32 %v723, %v762
        %v779 = vmul.f32 %v727, %v761
        %v780 = vmul.f32 %v727, %v762
        %v781 = vmul.f32 %v731, %v761
        %v782 = vmul.f32 %v731, %v762
        %v783 = vmul.f32 %v735, %v761
        %v784 = vmul.f32 %v735, %v762
        %v785 = vmul.f32 %v739, %v761
        %v786 = vmul.f32 %v739, %v762
        %v787 = vmul.f32 %v743, %v761
        %v788 = vmul.f32 %v743, %v762
        %v789 = vmul.f32 %v747, %v761
        %v790 = vmul.f32 %v747, %v762
        %v791 = vmul.f32 %v751, %v761
        %v792 = vmul.f32 %v751, %v762
        %v793 = vmul.f32 %v755, %v761
        %v794 = vmul.f32 %v755, %v762
        %v795 = vadd.f32 %v661, %v763
        %v796 = vadd.f32 %v662, %v764
        %v797 = vadd.f32 %v663, %v765
        %v798 = vadd.f32 %v664, %v766
        %v799 = vadd.f32 %v665, %v767
        %v800 = vadd.f32 %v666, %v768
        %v801 = vadd.f32 %v667, %v769
        %v802 = vadd.f32 %v668, %v770
        %v803 = vadd.f32 %v669, %v771
        %v804 = vadd.f32 %v670, %v772
        %v805 = vadd.f32 %v671, %v773
        %v806 = vadd.f32 %v672, %v774
        %v807 = vadd.f32 %v673, %v775
        %v808 = vadd.f32 %v674, %v776
        %v809 = vadd.f32 %v675, %v777
        %v810 = vadd.f32 %v676, %v778
        %v811 = vadd.f32 %v677, %v779
        %v812 = vadd.f32 %v678, %v780
        %v813 = vadd.f32 %v679, %v781
        %v814 = vadd.f32 %v680, %v782
        %v815 = vadd.f32 %v681, %v783
        %v816 = vadd.f32 %v682, %v784
        %v817 = vadd.f32 %v683, %v785
        %v818 = vadd.f32 %v684, %v786
        %v819 = vadd.f32 %v685, %v787
        %v820 = vadd.f32 %v686, %v788
        %v821 = vadd.f32 %v687, %v789
        %v822 = vadd.f32 %v688, %v790
        %v823 = vadd.f32 %v689, %v791
        %v824 = vadd.f32 %v690, %v792
        %v825 = vadd.f32 %v691, %v793
        %v826 = vadd.f32 %v692, %v794
        %v827 = vmax.f32 %v795, %v796
        %828 = vmax.xlane.f32.xlu0 %v827
        %v829 = vpop.xlane.xlu0 %828
        %v830 = vmax.f32 %v797, %v798
        %831 = vmax.xlane.f32.xlu0 %v830
        %v832 = vpop.xlane.xlu0 %831
        %v833 = vmax.f32 %v799, %v800
        %834 = vmax.xlane.f32.xlu0 %v833
        %v835 = vpop.xlane.xlu0 %834
        %v836 = vmax.f32 %v801, %v802
        %837 = vmax.xlane.f32.xlu0 %v836
        %v838 = vpop.xlane.xlu0 %837
        %v839 = vmax.f32 %v803, %v804
        %840 = vmax.xlane.f32.xlu0 %v839
        %v841 = vpop.xlane.xlu0 %840
        %v842 = vmax.f32 %v805, %v806
        %843 = vmax.xlane.f32.xlu0 %v842
        %v844 = vpop.xlane.xlu0 %843
        %v845 = vmax.f32 %v807, %v808
        %846 = vmax.xlane.f32.xlu0 %v845
        %v847 = vpop.xlane.xlu0 %846
        %v848 = vmax.f32 %v809, %v810
        %849 = vmax.xlane.f32.xlu0 %v848
        %v850 = vpop.xlane.xlu0 %849
        %v851 = vmax.f32 %v811, %v812
        %852 = vmax.xlane.f32.xlu0 %v851
        %v853 = vpop.xlane.xlu0 %852
        %v854 = vmax.f32 %v813, %v814
        %855 = vmax.xlane.f32.xlu0 %v854
        %v856 = vpop.xlane.xlu0 %855
        %v857 = vmax.f32 %v815, %v816
        %858 = vmax.xlane.f32.xlu0 %v857
        %v859 = vpop.xlane.xlu0 %858
        %v860 = vmax.f32 %v817, %v818
        %861 = vmax.xlane.f32.xlu0 %v860
        %v862 = vpop.xlane.xlu0 %861
        %v863 = vmax.f32 %v819, %v820
        %864 = vmax.xlane.f32.xlu0 %v863
        %v865 = vpop.xlane.xlu0 %864
        %v866 = vmax.f32 %v821, %v822
        %867 = vmax.xlane.f32.xlu0 %v866
        %v868 = vpop.xlane.xlu0 %867
        %v869 = vmax.f32 %v823, %v824
        %870 = vmax.xlane.f32.xlu0 %v869
        %v871 = vpop.xlane.xlu0 %870
        %v872 = vmax.f32 %v825, %v826
        %873 = vmax.xlane.f32.xlu0 %v872
        %v874 = vpop.xlane.xlu0 %873
        %v875 = vsub.f32 %v795, %v829
        %v876 = vsub.f32 %v796, %v829
        %v877 = vsub.f32 %v797, %v832
        %v878 = vsub.f32 %v798, %v832
        %v879 = vsub.f32 %v799, %v835
        %v880 = vsub.f32 %v800, %v835
        %v881 = vsub.f32 %v801, %v838
        %v882 = vsub.f32 %v802, %v838
        %v883 = vsub.f32 %v803, %v841
        %v884 = vsub.f32 %v804, %v841
        %v885 = vsub.f32 %v805, %v844
        %v886 = vsub.f32 %v806, %v844
        %v887 = vsub.f32 %v807, %v847
        %v888 = vsub.f32 %v808, %v847
        %v889 = vsub.f32 %v809, %v850
        %v890 = vsub.f32 %v810, %v850
        %v891 = vsub.f32 %v811, %v853
        %v892 = vsub.f32 %v812, %v853
        %v893 = vsub.f32 %v813, %v856
        %v894 = vsub.f32 %v814, %v856
        %v895 = vsub.f32 %v815, %v859
        %v896 = vsub.f32 %v816, %v859
        %v897 = vsub.f32 %v817, %v862
        %v898 = vsub.f32 %v818, %v862
        %v899 = vsub.f32 %v819, %v865
        %v900 = vsub.f32 %v820, %v865
        %v901 = vsub.f32 %v821, %v868
        %v902 = vsub.f32 %v822, %v868
        %v903 = vsub.f32 %v823, %v871
        %v904 = vsub.f32 %v824, %v871
        %v905 = vsub.f32 %v825, %v874
        %v906 = vsub.f32 %v826, %v874
        %v907 = vmul.f32 %v875, 1.442695
        %v908 = vpow.pop %v907
        %v909 = vmul.f32 %v876, 1.442695
        %v910 = vpow.pop %v909
        %v911 = vmul.f32 %v877, 1.442695
        %v912 = vpow.pop %v911
        %v913 = vmul.f32 %v878, 1.442695
        %v914 = vpow.pop %v913
        %v915 = vmul.f32 %v879, 1.442695
        %v916 = vpow.pop %v915
        %v917 = vmul.f32 %v880, 1.442695
        %v918 = vpow.pop %v917
        %v919 = vmul.f32 %v881, 1.442695
        %v920 = vpow.pop %v919
        %v921 = vmul.f32 %v882, 1.442695
        %v922 = vpow.pop %v921
        %v923 = vmul.f32 %v883, 1.442695
        %v924 = vpow.pop %v923
        %v925 = vmul.f32 %v884, 1.442695
        %v926 = vpow.pop %v925
        %v927 = vmul.f32 %v885, 1.442695
        %v928 = vpow.pop %v927
        %v929 = vmul.f32 %v886, 1.442695
        %v930 = vpow.pop %v929
        %v931 = vmul.f32 %v887, 1.442695
        %v932 = vpow.pop %v931
        %v933 = vmul.f32 %v888, 1.442695
        %v934 = vpow.pop %v933
        %v935 = vmul.f32 %v889, 1.442695
        %v936 = vpow.pop %v935
        %v937 = vmul.f32 %v890, 1.442695
        %v938 = vpow.pop %v937
        %v939 = vmul.f32 %v891, 1.442695
        %v940 = vpow.pop %v939
        %v941 = vmul.f32 %v892, 1.442695
        %v942 = vpow.pop %v941
        %v943 = vmul.f32 %v893, 1.442695
        %v944 = vpow.pop %v943
        %v945 = vmul.f32 %v894, 1.442695
        %v946 = vpow.pop %v945
        %v947 = vmul.f32 %v895, 1.442695
        %v948 = vpow.pop %v947
        %v949 = vmul.f32 %v896, 1.442695
        %v950 = vpow.pop %v949
        %v951 = vmul.f32 %v897, 1.442695
        %v952 = vpow.pop %v951
        %v953 = vmul.f32 %v898, 1.442695
        %v954 = vpow.pop %v953
        %v955 = vmul.f32 %v899, 1.442695
        %v956 = vpow.pop %v955
        %v957 = vmul.f32 %v900, 1.442695
        %v958 = vpow.pop %v957
        %v959 = vmul.f32 %v901, 1.442695
        %v960 = vpow.pop %v959
        %v961 = vmul.f32 %v902, 1.442695
        %v962 = vpow.pop %v961
        %v963 = vmul.f32 %v903, 1.442695
        %v964 = vpow.pop %v963
        %v965 = vmul.f32 %v904, 1.442695
        %v966 = vpow.pop %v965
        %v967 = vmul.f32 %v905, 1.442695
        %v968 = vpow.pop %v967
        %v969 = vmul.f32 %v906, 1.442695
        %v970 = vpow.pop %v969
        %v971 = vadd.f32 %v908, %v910
        %972 = vadd.xlane.f32.xlu0 %v971
        %v973 = vpop.xlane.xlu0 %972
        %v974 = vadd.f32 %v912, %v914
        %975 = vadd.xlane.f32.xlu0 %v974
        %v976 = vpop.xlane.xlu0 %975
        %v977 = vadd.f32 %v916, %v918
        %978 = vadd.xlane.f32.xlu0 %v977
        %v979 = vpop.xlane.xlu0 %978
        %v980 = vadd.f32 %v920, %v922
        %981 = vadd.xlane.f32.xlu0 %v980
        %v982 = vpop.xlane.xlu0 %981
        %v983 = vadd.f32 %v924, %v926
        %984 = vadd.xlane.f32.xlu0 %v983
        %v985 = vpop.xlane.xlu0 %984
        %v986 = vadd.f32 %v928, %v930
        %987 = vadd.xlane.f32.xlu0 %v986
        %v988 = vpop.xlane.xlu0 %987
        %v989 = vadd.f32 %v932, %v934
        %990 = vadd.xlane.f32.xlu0 %v989
        %v991 = vpop.xlane.xlu0 %990
        %v992 = vadd.f32 %v936, %v938
        %993 = vadd.xlane.f32.xlu0 %v992
        %v994 = vpop.xlane.xlu0 %993
        %v995 = vadd.f32 %v940, %v942
        %996 = vadd.xlane.f32.xlu0 %v995
        %v997 = vpop.xlane.xlu0 %996
        %v998 = vadd.f32 %v944, %v946
        %999 = vadd.xlane.f32.xlu0 %v998
        %v1000 = vpop.xlane.xlu0 %999
        %v1001 = vadd.f32 %v948, %v950
        %1002 = vadd.xlane.f32.xlu0 %v1001
        %v1003 = vpop.xlane.xlu0 %1002
        %v1004 = vadd.f32 %v952, %v954
        %1005 = vadd.xlane.f32.xlu0 %v1004
        %v1006 = vpop.xlane.xlu0 %1005
        %v1007 = vadd.f32 %v956, %v958
        %1008 = vadd.xlane.f32.xlu0 %v1007
        %v1009 = vpop.xlane.xlu0 %1008
        %v1010 = vadd.f32 %v960, %v962
        %1011 = vadd.xlane.f32.xlu0 %v1010
        %v1012 = vpop.xlane.xlu0 %1011
        %v1013 = vadd.f32 %v964, %v966
        %1014 = vadd.xlane.f32.xlu0 %v1013
        %v1015 = vpop.xlane.xlu0 %1014
        %v1016 = vadd.f32 %v968, %v970
        %1017 = vadd.xlane.f32.xlu0 %v1016
        %v1018 = vpop.xlane.xlu0 %1017
        %v1019 = vrcp.pop %v973
        %v1020 = vrcp.pop %v976
        %v1021 = vrcp.pop %v979
        %v1022 = vrcp.pop %v982
        %v1023 = vrcp.pop %v985
        %v1024 = vrcp.pop %v988
        %v1025 = vrcp.pop %v991
        %v1026 = vrcp.pop %v994
        %v1027 = vrcp.pop %v997
        %v1028 = vrcp.pop %v1000
        %v1029 = vrcp.pop %v1003
        %v1030 = vrcp.pop %v1006
        %v1031 = vrcp.pop %v1009
        %v1032 = vrcp.pop %v1012
        %v1033 = vrcp.pop %v1015
        %v1034 = vrcp.pop %v1018
        %v1035 = vpack.c.bf16 %v910, %v908
        %v1036 = vpack.c.bf16 %v914, %v912
        %v1037 = vpack.c.bf16 %v918, %v916
        %v1038 = vpack.c.bf16 %v922, %v920
        %v1039 = vpack.c.bf16 %v926, %v924
        %v1040 = vpack.c.bf16 %v930, %v928
        %v1041 = vpack.c.bf16 %v934, %v932
        %v1042 = vpack.c.bf16 %v938, %v936
        %v1043 = vpack.c.bf16 %v942, %v940
        %v1044 = vpack.c.bf16 %v946, %v944
        %v1045 = vpack.c.bf16 %v950, %v948
        %v1046 = vpack.c.bf16 %v954, %v952
        %v1047 = vpack.c.bf16 %v958, %v956
        %v1048 = vpack.c.bf16 %v962, %v960
        %v1049 = vpack.c.bf16 %v966, %v964
        %v1050 = vpack.c.bf16 %v970, %v968
        %1051 = vst [vmem:[#allocation3] sm:$0xff] %v1035
        %1052 = vst [vmem:[#allocation3 + $0x8] sm:$0xff] %v1036
        %1053 = vst [vmem:[#allocation3 + $0x10] sm:$0xff] %v1037
        %1054 = vst [vmem:[#allocation3 + $0x18] sm:$0xff] %v1038
        %1055 = vst [vmem:[#allocation3 + $0x20] sm:$0xff] %v1039
        %1056 = vst [vmem:[#allocation3 + $0x28] sm:$0xff] %v1040
        %1057 = vst [vmem:[#allocation3 + $0x30] sm:$0xff] %v1041
        %1058 = vst [vmem:[#allocation3 + $0x38] sm:$0xff] %v1042
        %1059 = vst [vmem:[#allocation3 + $0x40] sm:$0xff] %v1043
        %1060 = vst [vmem:[#allocation3 + $0x48] sm:$0xff] %v1044
        %1061 = vst [vmem:[#allocation3 + $0x50] sm:$0xff] %v1045
        %1062 = vst [vmem:[#allocation3 + $0x58] sm:$0xff] %v1046
        %1063 = vst [vmem:[#allocation3 + $0x60] sm:$0xff] %v1047
        %1064 = vst [vmem:[#allocation3 + $0x68] sm:$0xff] %v1048
        %1065 = vst [vmem:[#allocation3 + $0x70] sm:$0xff] %v1049
        %1066 = vst [vmem:[#allocation3 + $0x78] sm:$0xff] %v1050
        %v1067 = vld [vmem:[%s1] sm:$0xf]
        %v1068 = vld [vmem:[%s1 + $0x4] sm:$0xf]
        %v1069 = vld [vmem:[%s1 + $0x8] sm:$0xf]
        %v1070 = vld [vmem:[%s1 + $0xc] sm:$0xf]
        %v1071 = vld [vmem:[%s1 + $0x10] sm:$0xf]
        %v1072 = vld [vmem:[%s1 + $0x14] sm:$0xf]
        %v1073 = vld [vmem:[%s1 + $0x18] sm:$0xf]
        %v1074 = vld [vmem:[%s1 + $0x1c] sm:$0xf]
        %v1075 = vld [vmem:[%s1 + $0x20] sm:$0xf]
        %v1076 = vld [vmem:[%s1 + $0x24] sm:$0xf]
        %v1077 = vld [vmem:[%s1 + $0x28] sm:$0xf]
        %v1078 = vld [vmem:[%s1 + $0x2c] sm:$0xf]
        %v1079 = vld [vmem:[%s1 + $0x30] sm:$0xf]
        %v1080 = vld [vmem:[%s1 + $0x34] sm:$0xf]
        %v1081 = vld [vmem:[%s1 + $0x38] sm:$0xf]
        %v1082 = vld [vmem:[%s1 + $0x3c] sm:$0xf]
        %v1083 = vunpack.c.l.bf16 %v1067
        %v1084 = vunpack.c.l.bf16 %v1068
        %v1085 = vunpack.c.l.bf16 %v1069
        %v1086 = vunpack.c.l.bf16 %v1070
        %v1087 = vunpack.c.l.bf16 %v1071
        %v1088 = vunpack.c.l.bf16 %v1072
        %v1089 = vunpack.c.l.bf16 %v1073
        %v1090 = vunpack.c.l.bf16 %v1074
        %v1091 = vunpack.c.l.bf16 %v1075
        %v1092 = vunpack.c.l.bf16 %v1076
        %v1093 = vunpack.c.l.bf16 %v1077
        %v1094 = vunpack.c.l.bf16 %v1078
        %v1095 = vunpack.c.l.bf16 %v1079
        %v1096 = vunpack.c.l.bf16 %v1080
        %v1097 = vunpack.c.l.bf16 %v1081
        %v1098 = vunpack.c.l.bf16 %v1082
        %1100 = vset.pattern.permute.xlu0 0
        %1101 = vperm.xlu0 %1100, %v1083
        %v1102 = vpop.permute.xlu0 %1101
        %1105 = vset.pattern.permute.xlu0 0
        %1106 = vperm.xlu0 %1105, %v1084
        %v1107 = vpop.permute.xlu0 %1106
        %1110 = vset.pattern.permute.xlu0 0
        %1111 = vperm.xlu0 %1110, %v1085
        %v1112 = vpop.permute.xlu0 %1111
        %1115 = vset.pattern.permute.xlu0 0
        %1116 = vperm.xlu0 %1115, %v1086
        %v1117 = vpop.permute.xlu0 %1116
        %1120 = vset.pattern.permute.xlu0 0
        %1121 = vperm.xlu0 %1120, %v1087
        %v1122 = vpop.permute.xlu0 %1121
        %1125 = vset.pattern.permute.xlu0 0
        %1126 = vperm.xlu0 %1125, %v1088
        %v1127 = vpop.permute.xlu0 %1126
        %1130 = vset.pattern.permute.xlu0 0
        %1131 = vperm.xlu0 %1130, %v1089
        %v1132 = vpop.permute.xlu0 %1131
        %1135 = vset.pattern.permute.xlu0 0
        %1136 = vperm.xlu0 %1135, %v1090
        %v1137 = vpop.permute.xlu0 %1136
        %1140 = vset.pattern.permute.xlu0 0
        %1141 = vperm.xlu0 %1140, %v1091
        %v1142 = vpop.permute.xlu0 %1141
        %1145 = vset.pattern.permute.xlu0 0
        %1146 = vperm.xlu0 %1145, %v1092
        %v1147 = vpop.permute.xlu0 %1146
        %1150 = vset.pattern.permute.xlu0 0
        %1151 = vperm.xlu0 %1150, %v1093
        %v1152 = vpop.permute.xlu0 %1151
        %1155 = vset.pattern.permute.xlu0 0
        %1156 = vperm.xlu0 %1155, %v1094
        %v1157 = vpop.permute.xlu0 %1156
        %1160 = vset.pattern.permute.xlu0 0
        %1161 = vperm.xlu0 %1160, %v1095
        %v1162 = vpop.permute.xlu0 %1161
        %1165 = vset.pattern.permute.xlu0 0
        %1166 = vperm.xlu0 %1165, %v1096
        %v1167 = vpop.permute.xlu0 %1166
        %1170 = vset.pattern.permute.xlu0 0
        %1171 = vperm.xlu0 %1170, %v1097
        %v1172 = vpop.permute.xlu0 %1171
        %1175 = vset.pattern.permute.xlu0 0
        %1176 = vperm.xlu0 %1175, %v1098
        %v1177 = vpop.permute.xlu0 %1176
        %v1179 = vmul.f32 %v1102, %v391
        %v1180 = vmul.f32 %v1102, %v392
        %v1181 = vmul.f32 %v1107, %v391
        %v1182 = vmul.f32 %v1107, %v392
        %v1183 = vmul.f32 %v1112, %v391
        %v1184 = vmul.f32 %v1112, %v392
        %v1185 = vmul.f32 %v1117, %v391
        %v1186 = vmul.f32 %v1117, %v392
        %v1187 = vmul.f32 %v1122, %v391
        %v1188 = vmul.f32 %v1122, %v392
        %v1189 = vmul.f32 %v1127, %v391
        %v1190 = vmul.f32 %v1127, %v392
        %v1191 = vmul.f32 %v1132, %v391
        %v1192 = vmul.f32 %v1132, %v392
        %v1193 = vmul.f32 %v1137, %v391
        %v1194 = vmul.f32 %v1137, %v392
        %v1195 = vmul.f32 %v1142, %v391
        %v1196 = vmul.f32 %v1142, %v392
        %v1197 = vmul.f32 %v1147, %v391
        %v1198 = vmul.f32 %v1147, %v392
        %v1199 = vmul.f32 %v1152, %v391
        %v1200 = vmul.f32 %v1152, %v392
        %v1201 = vmul.f32 %v1157, %v391
        %v1202 = vmul.f32 %v1157, %v392
        %v1203 = vmul.f32 %v1162, %v391
        %v1204 = vmul.f32 %v1162, %v392
        %v1205 = vmul.f32 %v1167, %v391
        %v1206 = vmul.f32 %v1167, %v392
        %v1207 = vmul.f32 %v1172, %v391
        %v1208 = vmul.f32 %v1172, %v392
        %v1209 = vmul.f32 %v1177, %v391
        %v1210 = vmul.f32 %v1177, %v392
        %1211 = vset.pattern.permute.xlu0 1
        %1212 = vperm.xlu0 %1211, %v1083
        %v1213 = vpop.permute.xlu0 %1212
        %1215 = vset.pattern.permute.xlu0 1
        %1216 = vperm.xlu0 %1215, %v1084
        %v1217 = vpop.permute.xlu0 %1216
        %1219 = vset.pattern.permute.xlu0 1
        %1220 = vperm.xlu0 %1219, %v1085
        %v1221 = vpop.permute.xlu0 %1220
        %1223 = vset.pattern.permute.xlu0 1
        %1224 = vperm.xlu0 %1223, %v1086
        %v1225 = vpop.permute.xlu0 %1224
        %1227 = vset.pattern.permute.xlu0 1
        %1228 = vperm.xlu0 %1227, %v1087
        %v1229 = vpop.permute.xlu0 %1228
        %1231 = vset.pattern.permute.xlu0 1
        %1232 = vperm.xlu0 %1231, %v1088
        %v1233 = vpop.permute.xlu0 %1232
        %1235 = vset.pattern.permute.xlu0 1
        %1236 = vperm.xlu0 %1235, %v1089
        %v1237 = vpop.permute.xlu0 %1236
        %1239 = vset.pattern.permute.xlu0 1
        %1240 = vperm.xlu0 %1239, %v1090
        %v1241 = vpop.permute.xlu0 %1240
        %1243 = vset.pattern.permute.xlu0 1
        %1244 = vperm.xlu0 %1243, %v1091
        %v1245 = vpop.permute.xlu0 %1244
        %1247 = vset.pattern.permute.xlu0 1
        %1248 = vperm.xlu0 %1247, %v1092
        %v1249 = vpop.permute.xlu0 %1248
        %1251 = vset.pattern.permute.xlu0 1
        %1252 = vperm.xlu0 %1251, %v1093
        %v1253 = vpop.permute.xlu0 %1252
        %1255 = vset.pattern.permute.xlu0 1
        %1256 = vperm.xlu0 %1255, %v1094
        %v1257 = vpop.permute.xlu0 %1256
        %1259 = vset.pattern.permute.xlu0 1
        %1260 = vperm.xlu0 %1259, %v1095
        %v1261 = vpop.permute.xlu0 %1260
        %1263 = vset.pattern.permute.xlu0 1
        %1264 = vperm.xlu0 %1263, %v1096
        %v1265 = vpop.permute.xlu0 %1264
        %1267 = vset.pattern.permute.xlu0 1
        %1268 = vperm.xlu0 %1267, %v1097
        %v1269 = vpop.permute.xlu0 %1268
        %1271 = vset.pattern.permute.xlu0 1
        %1272 = vperm.xlu0 %1271, %v1098
        %v1273 = vpop.permute.xlu0 %1272
        %v1275 = vmul.f32 %v1213, %v493
        %v1276 = vmul.f32 %v1213, %v494
        %v1277 = vmul.f32 %v1217, %v493
        %v1278 = vmul.f32 %v1217, %v494
        %v1279 = vmul.f32 %v1221, %v493
        %v1280 = vmul.f32 %v1221, %v494
        %v1281 = vmul.f32 %v1225, %v493
        %v1282 = vmul.f32 %v1225, %v494
        %v1283 = vmul.f32 %v1229, %v493
        %v1284 = vmul.f32 %v1229, %v494
        %v1285 = vmul.f32 %v1233, %v493
        %v1286 = vmul.f32 %v1233, %v494
        %v1287 = vmul.f32 %v1237, %v493
        %v1288 = vmul.f32 %v1237, %v494
        %v1289 = vmul.f32 %v1241, %v493
        %v1290 = vmul.f32 %v1241, %v494
        %v1291 = vmul.f32 %v1245, %v493
        %v1292 = vmul.f32 %v1245, %v494
        %v1293 = vmul.f32 %v1249, %v493
        %v1294 = vmul.f32 %v1249, %v494
        %v1295 = vmul.f32 %v1253, %v493
        %v1296 = vmul.f32 %v1253, %v494
        %v1297 = vmul.f32 %v1257, %v493
        %v1298 = vmul.f32 %v1257, %v494
        %v1299 = vmul.f32 %v1261, %v493
        %v1300 = vmul.f32 %v1261, %v494
        %v1301 = vmul.f32 %v1265, %v493
        %v1302 = vmul.f32 %v1265, %v494
        %v1303 = vmul.f32 %v1269, %v493
        %v1304 = vmul.f32 %v1269, %v494
        %v1305 = vmul.f32 %v1273, %v493
        %v1306 = vmul.f32 %v1273, %v494
        %v1307 = vadd.f32 %v1179, %v1275
        %v1308 = vadd.f32 %v1180, %v1276
        %v1309 = vadd.f32 %v1181, %v1277
        %v1310 = vadd.f32 %v1182, %v1278
        %v1311 = vadd.f32 %v1183, %v1279
        %v1312 = vadd.f32 %v1184, %v1280
        %v1313 = vadd.f32 %v1185, %v1281
        %v1314 = vadd.f32 %v1186, %v1282
        %v1315 = vadd.f32 %v1187, %v1283
        %v1316 = vadd.f32 %v1188, %v1284
        %v1317 = vadd.f32 %v1189, %v1285
        %v1318 = vadd.f32 %v1190, %v1286
        %v1319 = vadd.f32 %v1191, %v1287
        %v1320 = vadd.f32 %v1192, %v1288
        %v1321 = vadd.f32 %v1193, %v1289
        %v1322 = vadd.f32 %v1194, %v1290
        %v1323 = vadd.f32 %v1195, %v1291
        %v1324 = vadd.f32 %v1196, %v1292
        %v1325 = vadd.f32 %v1197, %v1293
        %v1326 = vadd.f32 %v1198, %v1294
        %v1327 = vadd.f32 %v1199, %v1295
        %v1328 = vadd.f32 %v1200, %v1296
        %v1329 = vadd.f32 %v1201, %v1297
        %v1330 = vadd.f32 %v1202, %v1298
        %v1331 = vadd.f32 %v1203, %v1299
        %v1332 = vadd.f32 %v1204, %v1300
        %v1333 = vadd.f32 %v1205, %v1301
        %v1334 = vadd.f32 %v1206, %v1302
        %v1335 = vadd.f32 %v1207, %v1303
        %v1336 = vadd.f32 %v1208, %v1304
        %v1337 = vadd.f32 %v1209, %v1305
        %v1338 = vadd.f32 %v1210, %v1306
        %1339 = vset.pattern.permute.xlu0 2
        %1340 = vperm.xlu0 %1339, %v1083
        %v1341 = vpop.permute.xlu0 %1340
        %1343 = vset.pattern.permute.xlu0 2
        %1344 = vperm.xlu0 %1343, %v1084
        %v1345 = vpop.permute.xlu0 %1344
        %1347 = vset.pattern.permute.xlu0 2
        %1348 = vperm.xlu0 %1347, %v1085
        %v1349 = vpop.permute.xlu0 %1348
        %1351 = vset.pattern.permute.xlu0 2
        %1352 = vperm.xlu0 %1351, %v1086
        %v1353 = vpop.permute.xlu0 %1352
        %1355 = vset.pattern.permute.xlu0 2
        %1356 = vperm.xlu0 %1355, %v1087
        %v1357 = vpop.permute.xlu0 %1356
        %1359 = vset.pattern.permute.xlu0 2
        %1360 = vperm.xlu0 %1359, %v1088
        %v1361 = vpop.permute.xlu0 %1360
        %1363 = vset.pattern.permute.xlu0 2
        %1364 = vperm.xlu0 %1363, %v1089
        %v1365 = vpop.permute.xlu0 %1364
        %1367 = vset.pattern.permute.xlu0 2
        %1368 = vperm.xlu0 %1367, %v1090
        %v1369 = vpop.permute.xlu0 %1368
        %1371 = vset.pattern.permute.xlu0 2
        %1372 = vperm.xlu0 %1371, %v1091
        %v1373 = vpop.permute.xlu0 %1372
        %1375 = vset.pattern.permute.xlu0 2
        %1376 = vperm.xlu0 %1375, %v1092
        %v1377 = vpop.permute.xlu0 %1376
        %1379 = vset.pattern.permute.xlu0 2
        %1380 = vperm.xlu0 %1379, %v1093
        %v1381 = vpop.permute.xlu0 %1380
        %1383 = vset.pattern.permute.xlu0 2
        %1384 = vperm.xlu0 %1383, %v1094
        %v1385 = vpop.permute.xlu0 %1384
        %1387 = vset.pattern.permute.xlu0 2
        %1388 = vperm.xlu0 %1387, %v1095
        %v1389 = vpop.permute.xlu0 %1388
        %1391 = vset.pattern.permute.xlu0 2
        %1392 = vperm.xlu0 %1391, %v1096
        %v1393 = vpop.permute.xlu0 %1392
        %1395 = vset.pattern.permute.xlu0 2
        %1396 = vperm.xlu0 %1395, %v1097
        %v1397 = vpop.permute.xlu0 %1396
        %1399 = vset.pattern.permute.xlu0 2
        %1400 = vperm.xlu0 %1399, %v1098
        %v1401 = vpop.permute.xlu0 %1400
        %v1403 = vmul.f32 %v1341, %v627
        %v1404 = vmul.f32 %v1341, %v628
        %v1405 = vmul.f32 %v1345, %v627
        %v1406 = vmul.f32 %v1345, %v628
        %v1407 = vmul.f32 %v1349, %v627
        %v1408 = vmul.f32 %v1349, %v628
        %v1409 = vmul.f32 %v1353, %v627
        %v1410 = vmul.f32 %v1353, %v628
        %v1411 = vmul.f32 %v1357, %v627
        %v1412 = vmul.f32 %v1357, %v628
        %v1413 = vmul.f32 %v1361, %v627
        %v1414 = vmul.f32 %v1361, %v628
        %v1415 = vmul.f32 %v1365, %v627
        %v1416 = vmul.f32 %v1365, %v628
        %v1417 = vmul.f32 %v1369, %v627
        %v1418 = vmul.f32 %v1369, %v628
        %v1419 = vmul.f32 %v1373, %v627
        %v1420 = vmul.f32 %v1373, %v628
        %v1421 = vmul.f32 %v1377, %v627
        %v1422 = vmul.f32 %v1377, %v628
        %v1423 = vmul.f32 %v1381, %v627
        %v1424 = vmul.f32 %v1381, %v628
        %v1425 = vmul.f32 %v1385, %v627
        %v1426 = vmul.f32 %v1385, %v628
        %v1427 = vmul.f32 %v1389, %v627
        %v1428 = vmul.f32 %v1389, %v628
        %v1429 = vmul.f32 %v1393, %v627
        %v1430 = vmul.f32 %v1393, %v628
        %v1431 = vmul.f32 %v1397, %v627
        %v1432 = vmul.f32 %v1397, %v628
        %v1433 = vmul.f32 %v1401, %v627
        %v1434 = vmul.f32 %v1401, %v628
        %v1435 = vadd.f32 %v1307, %v1403
        %v1436 = vadd.f32 %v1308, %v1404
        %v1437 = vadd.f32 %v1309, %v1405
        %v1438 = vadd.f32 %v1310, %v1406
        %v1439 = vadd.f32 %v1311, %v1407
        %v1440 = vadd.f32 %v1312, %v1408
        %v1441 = vadd.f32 %v1313, %v1409
        %v1442 = vadd.f32 %v1314, %v1410
        %v1443 = vadd.f32 %v1315, %v1411
        %v1444 = vadd.f32 %v1316, %v1412
        %v1445 = vadd.f32 %v1317, %v1413
        %v1446 = vadd.f32 %v1318, %v1414
        %v1447 = vadd.f32 %v1319, %v1415
        %v1448 = vadd.f32 %v1320, %v1416
        %v1449 = vadd.f32 %v1321, %v1417
        %v1450 = vadd.f32 %v1322, %v1418
        %v1451 = vadd.f32 %v1323, %v1419
        %v1452 = vadd.f32 %v1324, %v1420
        %v1453 = vadd.f32 %v1325, %v1421
        %v1454 = vadd.f32 %v1326, %v1422
        %v1455 = vadd.f32 %v1327, %v1423
        %v1456 = vadd.f32 %v1328, %v1424
        %v1457 = vadd.f32 %v1329, %v1425
        %v1458 = vadd.f32 %v1330, %v1426
        %v1459 = vadd.f32 %v1331, %v1427
        %v1460 = vadd.f32 %v1332, %v1428
        %v1461 = vadd.f32 %v1333, %v1429
        %v1462 = vadd.f32 %v1334, %v1430
        %v1463 = vadd.f32 %v1335, %v1431
        %v1464 = vadd.f32 %v1336, %v1432
        %v1465 = vadd.f32 %v1337, %v1433
        %v1466 = vadd.f32 %v1338, %v1434
        %1467 = vset.pattern.permute.xlu0 3
        %1468 = vperm.xlu0 %1467, %v1083
        %v1469 = vpop.permute.xlu0 %1468
        %1471 = vset.pattern.permute.xlu0 3
        %1472 = vperm.xlu0 %1471, %v1084
        %v1473 = vpop.permute.xlu0 %1472
        %1475 = vset.pattern.permute.xlu0 3
        %1476 = vperm.xlu0 %1475, %v1085
        %v1477 = vpop.permute.xlu0 %1476
        %1479 = vset.pattern.permute.xlu0 3
        %1480 = vperm.xlu0 %1479, %v1086
        %v1481 = vpop.permute.xlu0 %1480
        %1483 = vset.pattern.permute.xlu0 3
        %1484 = vperm.xlu0 %1483, %v1087
        %v1485 = vpop.permute.xlu0 %1484
        %1487 = vset.pattern.permute.xlu0 3
        %1488 = vperm.xlu0 %1487, %v1088
        %v1489 = vpop.permute.xlu0 %1488
        %1491 = vset.pattern.permute.xlu0 3
        %1492 = vperm.xlu0 %1491, %v1089
        %v1493 = vpop.permute.xlu0 %1492
        %1495 = vset.pattern.permute.xlu0 3
        %1496 = vperm.xlu0 %1495, %v1090
        %v1497 = vpop.permute.xlu0 %1496
        %1499 = vset.pattern.permute.xlu0 3
        %1500 = vperm.xlu0 %1499, %v1091
        %v1501 = vpop.permute.xlu0 %1500
        %1503 = vset.pattern.permute.xlu0 3
        %1504 = vperm.xlu0 %1503, %v1092
        %v1505 = vpop.permute.xlu0 %1504
        %1507 = vset.pattern.permute.xlu0 3
        %1508 = vperm.xlu0 %1507, %v1093
        %v1509 = vpop.permute.xlu0 %1508
        %1511 = vset.pattern.permute.xlu0 3
        %1512 = vperm.xlu0 %1511, %v1094
        %v1513 = vpop.permute.xlu0 %1512
        %1515 = vset.pattern.permute.xlu0 3
        %1516 = vperm.xlu0 %1515, %v1095
        %v1517 = vpop.permute.xlu0 %1516
        %1519 = vset.pattern.permute.xlu0 3
        %1520 = vperm.xlu0 %1519, %v1096
        %v1521 = vpop.permute.xlu0 %1520
        %1523 = vset.pattern.permute.xlu0 3
        %1524 = vperm.xlu0 %1523, %v1097
        %v1525 = vpop.permute.xlu0 %1524
        %1527 = vset.pattern.permute.xlu0 3
        %1528 = vperm.xlu0 %1527, %v1098
        %v1529 = vpop.permute.xlu0 %1528
        %v1531 = vmul.f32 %v1469, %v761
        %v1532 = vmul.f32 %v1469, %v762
        %v1533 = vmul.f32 %v1473, %v761
        %v1534 = vmul.f32 %v1473, %v762
        %v1535 = vmul.f32 %v1477, %v761
        %v1536 = vmul.f32 %v1477, %v762
        %v1537 = vmul.f32 %v1481, %v761
        %v1538 = vmul.f32 %v1481, %v762
        %v1539 = vmul.f32 %v1485, %v761
        %v1540 = vmul.f32 %v1485, %v762
        %v1541 = vmul.f32 %v1489, %v761
        %v1542 = vmul.f32 %v1489, %v762
        %v1543 = vmul.f32 %v1493, %v761
        %v1544 = vmul.f32 %v1493, %v762
        %v1545 = vmul.f32 %v1497, %v761
        %v1546 = vmul.f32 %v1497, %v762
        %v1547 = vmul.f32 %v1501, %v761
        %v1548 = vmul.f32 %v1501, %v762
        %v1549 = vmul.f32 %v1505, %v761
        %v1550 = vmul.f32 %v1505, %v762
        %v1551 = vmul.f32 %v1509, %v761
        %v1552 = vmul.f32 %v1509, %v762
        %v1553 = vmul.f32 %v1513, %v761
        %v1554 = vmul.f32 %v1513, %v762
        %v1555 = vmul.f32 %v1517, %v761
        %v1556 = vmul.f32 %v1517, %v762
        %v1557 = vmul.f32 %v1521, %v761
        %v1558 = vmul.f32 %v1521, %v762
        %v1559 = vmul.f32 %v1525, %v761
        %v1560 = vmul.f32 %v1525, %v762
        %v1561 = vmul.f32 %v1529, %v761
        %v1562 = vmul.f32 %v1529, %v762
        %v1563 = vadd.f32 %v1435, %v1531
        %v1564 = vadd.f32 %v1436, %v1532
        %v1565 = vadd.f32 %v1437, %v1533
        %v1566 = vadd.f32 %v1438, %v1534
        %v1567 = vadd.f32 %v1439, %v1535
        %v1568 = vadd.f32 %v1440, %v1536
        %v1569 = vadd.f32 %v1441, %v1537
        %v1570 = vadd.f32 %v1442, %v1538
        %v1571 = vadd.f32 %v1443, %v1539
        %v1572 = vadd.f32 %v1444, %v1540
        %v1573 = vadd.f32 %v1445, %v1541
        %v1574 = vadd.f32 %v1446, %v1542
        %v1575 = vadd.f32 %v1447, %v1543
        %v1576 = vadd.f32 %v1448, %v1544
        %v1577 = vadd.f32 %v1449, %v1545
        %v1578 = vadd.f32 %v1450, %v1546
        %v1579 = vadd.f32 %v1451, %v1547
        %v1580 = vadd.f32 %v1452, %v1548
        %v1581 = vadd.f32 %v1453, %v1549
        %v1582 = vadd.f32 %v1454, %v1550
        %v1583 = vadd.f32 %v1455, %v1551
        %v1584 = vadd.f32 %v1456, %v1552
        %v1585 = vadd.f32 %v1457, %v1553
        %v1586 = vadd.f32 %v1458, %v1554
        %v1587 = vadd.f32 %v1459, %v1555
        %v1588 = vadd.f32 %v1460, %v1556
        %v1589 = vadd.f32 %v1461, %v1557
        %v1590 = vadd.f32 %v1462, %v1558
        %v1591 = vadd.f32 %v1463, %v1559
        %v1592 = vadd.f32 %v1464, %v1560
        %v1593 = vadd.f32 %v1465, %v1561
        %v1594 = vadd.f32 %v1466, %v1562
        %v1595 = vmax.f32 %v1563, %v1565
        %v1596 = vmax.f32 %v1595, %v1567
        %v1597 = vmax.f32 %v1596, %v1569
        %v1598 = vrot.slane %v1597, 4
        %v1599 = vmax.f32 %v1597, %v1598
        %v1600 = vrot.slane %v1599, 2
        %v1601 = vmax.f32 %v1599, %v1600
        %v1602 = vrot.slane %v1601, 1
        %v1603 = vmax.f32 %v1601, %v1602
        %v1604 = vmax.f32 %v1564, %v1566
        %v1605 = vmax.f32 %v1604, %v1568
        %v1606 = vmax.f32 %v1605, %v1570
        %v1607 = vrot.slane %v1606, 4
        %v1608 = vmax.f32 %v1606, %v1607
        %v1609 = vrot.slane %v1608, 2
        %v1610 = vmax.f32 %v1608, %v1609
        %v1611 = vrot.slane %v1610, 1
        %v1612 = vmax.f32 %v1610, %v1611
        %v1613 = vmax.f32 %v1571, %v1573
        %v1614 = vmax.f32 %v1613, %v1575
        %v1615 = vmax.f32 %v1614, %v1577
        %v1616 = vrot.slane %v1615, 4
        %v1617 = vmax.f32 %v1615, %v1616
        %v1618 = vrot.slane %v1617, 2
        %v1619 = vmax.f32 %v1617, %v1618
        %v1620 = vrot.slane %v1619, 1
        %v1621 = vmax.f32 %v1619, %v1620
        %v1622 = vmax.f32 %v1572, %v1574
        %v1623 = vmax.f32 %v1622, %v1576
        %v1624 = vmax.f32 %v1623, %v1578
        %v1625 = vrot.slane %v1624, 4
        %v1626 = vmax.f32 %v1624, %v1625
        %v1627 = vrot.slane %v1626, 2
        %v1628 = vmax.f32 %v1626, %v1627
        %v1629 = vrot.slane %v1628, 1
        %v1630 = vmax.f32 %v1628, %v1629
        %v1631 = vmax.f32 %v1579, %v1581
        %v1632 = vmax.f32 %v1631, %v1583
        %v1633 = vmax.f32 %v1632, %v1585
        %v1634 = vrot.slane %v1633, 4
        %v1635 = vmax.f32 %v1633, %v1634
        %v1636 = vrot.slane %v1635, 2
        %v1637 = vmax.f32 %v1635, %v1636
        %v1638 = vrot.slane %v1637, 1
        %v1639 = vmax.f32 %v1637, %v1638
        %v1640 = vmax.f32 %v1580, %v1582
        %v1641 = vmax.f32 %v1640, %v1584
        %v1642 = vmax.f32 %v1641, %v1586
        %v1643 = vrot.slane %v1642, 4
        %v1644 = vmax.f32 %v1642, %v1643
        %v1645 = vrot.slane %v1644, 2
        %v1646 = vmax.f32 %v1644, %v1645
        %v1647 = vrot.slane %v1646, 1
        %v1648 = vmax.f32 %v1646, %v1647
        %v1649 = vmax.f32 %v1587, %v1589
        %v1650 = vmax.f32 %v1649, %v1591
        %v1651 = vmax.f32 %v1650, %v1593
        %v1652 = vrot.slane %v1651, 4
        %v1653 = vmax.f32 %v1651, %v1652
        %v1654 = vrot.slane %v1653, 2
        %v1655 = vmax.f32 %v1653, %v1654
        %v1656 = vrot.slane %v1655, 1
        %v1657 = vmax.f32 %v1655, %v1656
        %v1658 = vmax.f32 %v1588, %v1590
        %v1659 = vmax.f32 %v1658, %v1592
        %v1660 = vmax.f32 %v1659, %v1594
        %v1661 = vrot.slane %v1660, 4
        %v1662 = vmax.f32 %v1660, %v1661
        %v1663 = vrot.slane %v1662, 2
        %v1664 = vmax.f32 %v1662, %v1663
        %v1665 = vrot.slane %v1664, 1
        %v1666 = vmax.f32 %v1664, %v1665
        %v1667 = vsub.f32 %v1563, %v1603
        %v1668 = vsub.f32 %v1564, %v1612
        %v1669 = vsub.f32 %v1565, %v1603
        %v1670 = vsub.f32 %v1566, %v1612
        %v1671 = vsub.f32 %v1567, %v1603
        %v1672 = vsub.f32 %v1568, %v1612
        %v1673 = vsub.f32 %v1569, %v1603
        %v1674 = vsub.f32 %v1570, %v1612
        %v1675 = vsub.f32 %v1571, %v1621
        %v1676 = vsub.f32 %v1572, %v1630
        %v1677 = vsub.f32 %v1573, %v1621
        %v1678 = vsub.f32 %v1574, %v1630
        %v1679 = vsub.f32 %v1575, %v1621
        %v1680 = vsub.f32 %v1576, %v1630
        %v1681 = vsub.f32 %v1577, %v1621
        %v1682 = vsub.f32 %v1578, %v1630
        %v1683 = vsub.f32 %v1579, %v1639
        %v1684 = vsub.f32 %v1580, %v1648
        %v1685 = vsub.f32 %v1581, %v1639
        %v1686 = vsub.f32 %v1582, %v1648
        %v1687 = vsub.f32 %v1583, %v1639
        %v1688 = vsub.f32 %v1584, %v1648
        %v1689 = vsub.f32 %v1585, %v1639
        %v1690 = vsub.f32 %v1586, %v1648
        %v1691 = vsub.f32 %v1587, %v1657
        %v1692 = vsub.f32 %v1588, %v1666
        %v1693 = vsub.f32 %v1589, %v1657
        %v1694 = vsub.f32 %v1590, %v1666
        %v1695 = vsub.f32 %v1591, %v1657
        %v1696 = vsub.f32 %v1592, %v1666
        %v1697 = vsub.f32 %v1593, %v1657
        %v1698 = vsub.f32 %v1594, %v1666
        %v1699 = vmul.f32 %v1667, 1.442695
        %v1700 = vpow.pop %v1699
        %v1701 = vmul.f32 %v1668, 1.442695
        %v1702 = vpow.pop %v1701
        %v1703 = vmul.f32 %v1669, 1.442695
        %v1704 = vpow.pop %v1703
        %v1705 = vmul.f32 %v1670, 1.442695
        %v1706 = vpow.pop %v1705
        %v1707 = vmul.f32 %v1671, 1.442695
        %v1708 = vpow.pop %v1707
        %v1709 = vmul.f32 %v1672, 1.442695
        %v1710 = vpow.pop %v1709
        %v1711 = vmul.f32 %v1673, 1.442695
        %v1712 = vpow.pop %v1711
        %v1713 = vmul.f32 %v1674, 1.442695
        %v1714 = vpow.pop %v1713
        %v1715 = vmul.f32 %v1675, 1.442695
        %v1716 = vpow.pop %v1715
        %v1717 = vmul.f32 %v1676, 1.442695
        %v1718 = vpow.pop %v1717
        %v1719 = vmul.f32 %v1677, 1.442695
        %v1720 = vpow.pop %v1719
        %v1721 = vmul.f32 %v1678, 1.442695
        %v1722 = vpow.pop %v1721
        %v1723 = vmul.f32 %v1679, 1.442695
        %v1724 = vpow.pop %v1723
        %v1725 = vmul.f32 %v1680, 1.442695
        %v1726 = vpow.pop %v1725
        %v1727 = vmul.f32 %v1681, 1.442695
        %v1728 = vpow.pop %v1727
        %v1729 = vmul.f32 %v1682, 1.442695
        %v1730 = vpow.pop %v1729
        %v1731 = vmul.f32 %v1683, 1.442695
        %v1732 = vpow.pop %v1731
        %v1733 = vmul.f32 %v1684, 1.442695
        %v1734 = vpow.pop %v1733
        %v1735 = vmul.f32 %v1685, 1.442695
        %v1736 = vpow.pop %v1735
        %v1737 = vmul.f32 %v1686, 1.442695
        %v1738 = vpow.pop %v1737
        %v1739 = vmul.f32 %v1687, 1.442695
        %v1740 = vpow.pop %v1739
        %v1741 = vmul.f32 %v1688, 1.442695
        %v1742 = vpow.pop %v1741
        %v1743 = vmul.f32 %v1689, 1.442695
        %v1744 = vpow.pop %v1743
        %v1745 = vmul.f32 %v1690, 1.442695
        %v1746 = vpow.pop %v1745
        %v1747 = vmul.f32 %v1691, 1.442695
        %v1748 = vpow.pop %v1747
        %v1749 = vmul.f32 %v1692, 1.442695
        %v1750 = vpow.pop %v1749
        %v1751 = vmul.f32 %v1693, 1.442695
        %v1752 = vpow.pop %v1751
        %v1753 = vmul.f32 %v1694, 1.442695
        %v1754 = vpow.pop %v1753
        %v1755 = vmul.f32 %v1695, 1.442695
        %v1756 = vpow.pop %v1755
        %v1757 = vmul.f32 %v1696, 1.442695
        %v1758 = vpow.pop %v1757
        %v1759 = vmul.f32 %v1697, 1.442695
        %v1760 = vpow.pop %v1759
        %v1761 = vmul.f32 %v1698, 1.442695
        %v1762 = vpow.pop %v1761
        %v1763 = vadd.f32 %v1700, %v1704
        %v1764 = vadd.f32 %v1763, %v1708
        %v1765 = vadd.f32 %v1764, %v1712
        %v1766 = vrot.slane %v1765, 4
        %v1767 = vadd.f32 %v1765, %v1766
        %v1768 = vrot.slane %v1767, 2
        %v1769 = vadd.f32 %v1767, %v1768
        %v1770 = vrot.slane %v1769, 1
        %v1771 = vadd.f32 %v1769, %v1770
        %v1772 = vadd.f32 %v1702, %v1706
        %v1773 = vadd.f32 %v1772, %v1710
        %v1774 = vadd.f32 %v1773, %v1714
        %v1775 = vrot.slane %v1774, 4
        %v1776 = vadd.f32 %v1774, %v1775
        %v1777 = vrot.slane %v1776, 2
        %v1778 = vadd.f32 %v1776, %v1777
        %v1779 = vrot.slane %v1778, 1
        %v1780 = vadd.f32 %v1778, %v1779
        %v1781 = vadd.f32 %v1716, %v1720
        %v1782 = vadd.f32 %v1781, %v1724
        %v1783 = vadd.f32 %v1782, %v1728
        %v1784 = vrot.slane %v1783, 4
        %v1785 = vadd.f32 %v1783, %v1784
        %v1786 = vrot.slane %v1785, 2
        %v1787 = vadd.f32 %v1785, %v1786
        %v1788 = vrot.slane %v1787, 1
        %v1789 = vadd.f32 %v1787, %v1788
        %v1790 = vadd.f32 %v1718, %v1722
        %v1791 = vadd.f32 %v1790, %v1726
        %v1792 = vadd.f32 %v1791, %v1730
        %v1793 = vrot.slane %v1792, 4
        %v1794 = vadd.f32 %v1792, %v1793
        %v1795 = vrot.slane %v1794, 2
        %v1796 = vadd.f32 %v1794, %v1795
        %v1797 = vrot.slane %v1796, 1
        %v1798 = vadd.f32 %v1796, %v1797
        %v1799 = vadd.f32 %v1732, %v1736
        %v1800 = vadd.f32 %v1799, %v1740
        %v1801 = vadd.f32 %v1800, %v1744
        %v1802 = vrot.slane %v1801, 4
        %v1803 = vadd.f32 %v1801, %v1802
        %v1804 = vrot.slane %v1803, 2
        %v1805 = vadd.f32 %v1803, %v1804
        %v1806 = vrot.slane %v1805, 1
        %v1807 = vadd.f32 %v1805, %v1806
        %v1808 = vadd.f32 %v1734, %v1738
        %v1809 = vadd.f32 %v1808, %v1742
        %v1810 = vadd.f32 %v1809, %v1746
        %v1811 = vrot.slane %v1810, 4
        %v1812 = vadd.f32 %v1810, %v1811
        %v1813 = vrot.slane %v1812, 2
        %v1814 = vadd.f32 %v1812, %v1813
        %v1815 = vrot.slane %v1814, 1
        %v1816 = vadd.f32 %v1814, %v1815
        %v1817 = vadd.f32 %v1748, %v1752
        %v1818 = vadd.f32 %v1817, %v1756
        %v1819 = vadd.f32 %v1818, %v1760
        %v1820 = vrot.slane %v1819, 4
        %v1821 = vadd.f32 %v1819, %v1820
        %v1822 = vrot.slane %v1821, 2
        %v1823 = vadd.f32 %v1821, %v1822
        %v1824 = vrot.slane %v1823, 1
        %v1825 = vadd.f32 %v1823, %v1824
        %v1826 = vadd.f32 %v1750, %v1754
        %v1827 = vadd.f32 %v1826, %v1758
        %v1828 = vadd.f32 %v1827, %v1762
        %v1829 = vrot.slane %v1828, 4
        %v1830 = vadd.f32 %v1828, %v1829
        %v1831 = vrot.slane %v1830, 2
        %v1832 = vadd.f32 %v1830, %v1831
        %v1833 = vrot.slane %v1832, 1
        %v1834 = vadd.f32 %v1832, %v1833
        %v1835 = vrcp.pop %v1771
        %v1836 = vrcp.pop %v1780
        %v1837 = vrcp.pop %v1789
        %v1838 = vrcp.pop %v1798
        %v1839 = vrcp.pop %v1807
        %v1840 = vrcp.pop %v1816
        %v1841 = vrcp.pop %v1825
        %v1842 = vrcp.pop %v1834
        %v1843 = vmul.f32 %v1700, %v1835
        %v1844 = vmul.f32 %v1702, %v1836
        %v1845 = vmul.f32 %v1704, %v1835
        %v1846 = vmul.f32 %v1706, %v1836
        %v1847 = vmul.f32 %v1708, %v1835
        %v1848 = vmul.f32 %v1710, %v1836
        %v1849 = vmul.f32 %v1712, %v1835
        %v1850 = vmul.f32 %v1714, %v1836
        %v1851 = vmul.f32 %v1716, %v1837
        %v1852 = vmul.f32 %v1718, %v1838
        %v1853 = vmul.f32 %v1720, %v1837
        %v1854 = vmul.f32 %v1722, %v1838
        %v1855 = vmul.f32 %v1724, %v1837
        %v1856 = vmul.f32 %v1726, %v1838
        %v1857 = vmul.f32 %v1728, %v1837
        %v1858 = vmul.f32 %v1730, %v1838
        %v1859 = vmul.f32 %v1732, %v1839
        %v1860 = vmul.f32 %v1734, %v1840
        %v1861 = vmul.f32 %v1736, %v1839
        %v1862 = vmul.f32 %v1738, %v1840
        %v1863 = vmul.f32 %v1740, %v1839
        %v1864 = vmul.f32 %v1742, %v1840
        %v1865 = vmul.f32 %v1744, %v1839
        %v1866 = vmul.f32 %v1746, %v1840
        %v1867 = vmul.f32 %v1748, %v1841
        %v1868 = vmul.f32 %v1750, %v1842
        %v1869 = vmul.f32 %v1752, %v1841
        %v1870 = vmul.f32 %v1754, %v1842
        %v1871 = vmul.f32 %v1756, %v1841
        %v1872 = vmul.f32 %v1758, %v1842
        %v1873 = vmul.f32 %v1760, %v1841
        %v1874 = vmul.f32 %v1762, %v1842
        %v1875 = vmul.f32 %v1843, %v1019
        %v1876 = vmul.f32 %v1844, %v1019
        %v1877 = vmul.f32 %v1845, %v1020
        %v1878 = vmul.f32 %v1846, %v1020
        %v1879 = vmul.f32 %v1847, %v1021
        %v1880 = vmul.f32 %v1848, %v1021
        %v1881 = vmul.f32 %v1849, %v1022
        %v1882 = vmul.f32 %v1850, %v1022
        %v1883 = vmul.f32 %v1851, %v1023
        %v1884 = vmul.f32 %v1852, %v1023
        %v1885 = vmul.f32 %v1853, %v1024
        %v1886 = vmul.f32 %v1854, %v1024
        %v1887 = vmul.f32 %v1855, %v1025
        %v1888 = vmul.f32 %v1856, %v1025
        %v1889 = vmul.f32 %v1857, %v1026
        %v1890 = vmul.f32 %v1858, %v1026
        %v1891 = vmul.f32 %v1859, %v1027
        %v1892 = vmul.f32 %v1860, %v1027
        %v1893 = vmul.f32 %v1861, %v1028
        %v1894 = vmul.f32 %v1862, %v1028
        %v1895 = vmul.f32 %v1863, %v1029
        %v1896 = vmul.f32 %v1864, %v1029
        %v1897 = vmul.f32 %v1865, %v1030
        %v1898 = vmul.f32 %v1866, %v1030
        %v1899 = vmul.f32 %v1867, %v1031
        %v1900 = vmul.f32 %v1868, %v1031
        %v1901 = vmul.f32 %v1869, %v1032
        %v1902 = vmul.f32 %v1870, %v1032
        %v1903 = vmul.f32 %v1871, %v1033
        %v1904 = vmul.f32 %v1872, %v1033
        %v1905 = vmul.f32 %v1873, %v1034
        %v1906 = vmul.f32 %v1874, %v1034
        %v1907 = vpack.c.bf16 %v1876, %v1875
        %v1908 = vpack.c.bf16 %v1878, %v1877
        %v1909 = vpack.c.bf16 %v1880, %v1879
        %v1910 = vpack.c.bf16 %v1882, %v1881
        %v1911 = vpack.c.bf16 %v1884, %v1883
        %v1912 = vpack.c.bf16 %v1886, %v1885
        %v1913 = vpack.c.bf16 %v1888, %v1887
        %v1914 = vpack.c.bf16 %v1890, %v1889
        %v1915 = vpack.c.bf16 %v1892, %v1891
        %v1916 = vpack.c.bf16 %v1894, %v1893
        %v1917 = vpack.c.bf16 %v1896, %v1895
        %v1918 = vpack.c.bf16 %v1898, %v1897
        %v1919 = vpack.c.bf16 %v1900, %v1899
        %v1920 = vpack.c.bf16 %v1902, %v1901
        %v1921 = vpack.c.bf16 %v1904, %v1903
        %v1922 = vpack.c.bf16 %v1906, %v1905
        %1923 = vst [vmem:[#allocation2] sm:$0xff] %v1907
        %1924 = vst [vmem:[#allocation2 + $0x8] sm:$0xff] %v1908
        %1925 = vst [vmem:[#allocation2 + $0x10] sm:$0xff] %v1909
        %1926 = vst [vmem:[#allocation2 + $0x18] sm:$0xff] %v1910
        %1927 = vst [vmem:[#allocation2 + $0x20] sm:$0xff] %v1911
        %1928 = vst [vmem:[#allocation2 + $0x28] sm:$0xff] %v1912
        %1929 = vst [vmem:[#allocation2 + $0x30] sm:$0xff] %v1913
        %1930 = vst [vmem:[#allocation2 + $0x38] sm:$0xff] %v1914
        %1931 = vst [vmem:[#allocation2 + $0x40] sm:$0xff] %v1915
        %1932 = vst [vmem:[#allocation2 + $0x48] sm:$0xff] %v1916
        %1933 = vst [vmem:[#allocation2 + $0x50] sm:$0xff] %v1917
        %1934 = vst [vmem:[#allocation2 + $0x58] sm:$0xff] %v1918
        %1935 = vst [vmem:[#allocation2 + $0x60] sm:$0xff] %v1919
        %1936 = vst [vmem:[#allocation2 + $0x68] sm:$0xff] %v1920
        %1937 = vst [vmem:[#allocation2 + $0x70] sm:$0xff] %v1921
        %1938 = vst [vmem:[#allocation2 + $0x78] sm:$0xff] %v1922
        %v1939 = vld [vmem:[%s1 + $0x80] sm:$0xf]
        %v1940 = vld [vmem:[%s1 + $0x84] sm:$0xf]
        %v1941 = vld [vmem:[%s1 + $0x88] sm:$0xf]
        %v1942 = vld [vmem:[%s1 + $0x8c] sm:$0xf]
        %v1943 = vld [vmem:[%s1 + $0x90] sm:$0xf]
        %v1944 = vld [vmem:[%s1 + $0x94] sm:$0xf]
        %v1945 = vld [vmem:[%s1 + $0x98] sm:$0xf]
        %v1946 = vld [vmem:[%s1 + $0x9c] sm:$0xf]
        %v1947 = vld [vmem:[%s1 + $0xa0] sm:$0xf]
        %v1948 = vld [vmem:[%s1 + $0xa4] sm:$0xf]
        %v1949 = vld [vmem:[%s1 + $0xa8] sm:$0xf]
        %v1950 = vld [vmem:[%s1 + $0xac] sm:$0xf]
        %v1951 = vld [vmem:[%s1 + $0xb0] sm:$0xf]
        %v1952 = vld [vmem:[%s1 + $0xb4] sm:$0xf]
        %v1953 = vld [vmem:[%s1 + $0xb8] sm:$0xf]
        %v1954 = vld [vmem:[%s1 + $0xbc] sm:$0xf]
        %v1955 = vunpack.c.l.bf16 %v1939
        %v1956 = vunpack.c.l.bf16 %v1940
        %v1957 = vunpack.c.l.bf16 %v1941
        %v1958 = vunpack.c.l.bf16 %v1942
        %v1959 = vunpack.c.l.bf16 %v1943
        %v1960 = vunpack.c.l.bf16 %v1944
        %v1961 = vunpack.c.l.bf16 %v1945
        %v1962 = vunpack.c.l.bf16 %v1946
        %v1963 = vunpack.c.l.bf16 %v1947
        %v1964 = vunpack.c.l.bf16 %v1948
        %v1965 = vunpack.c.l.bf16 %v1949
        %v1966 = vunpack.c.l.bf16 %v1950
        %v1967 = vunpack.c.l.bf16 %v1951
        %v1968 = vunpack.c.l.bf16 %v1952
        %v1969 = vunpack.c.l.bf16 %v1953
        %v1970 = vunpack.c.l.bf16 %v1954
        %1972 = vset.pattern.permute.xlu0 0
        %1973 = vperm.xlu0 %1972, %v1955
        %v1974 = vpop.permute.xlu0 %1973
        %1977 = vset.pattern.permute.xlu0 0
        %1978 = vperm.xlu0 %1977, %v1956
        %v1979 = vpop.permute.xlu0 %1978
        %1982 = vset.pattern.permute.xlu0 0
        %1983 = vperm.xlu0 %1982, %v1957
        %v1984 = vpop.permute.xlu0 %1983
        %1987 = vset.pattern.permute.xlu0 0
        %1988 = vperm.xlu0 %1987, %v1958
        %v1989 = vpop.permute.xlu0 %1988
        %1992 = vset.pattern.permute.xlu0 0
        %1993 = vperm.xlu0 %1992, %v1959
        %v1994 = vpop.permute.xlu0 %1993
        %1997 = vset.pattern.permute.xlu0 0
        %1998 = vperm.xlu0 %1997, %v1960
        %v1999 = vpop.permute.xlu0 %1998
        %2002 = vset.pattern.permute.xlu0 0
        %2003 = vperm.xlu0 %2002, %v1961
        %v2004 = vpop.permute.xlu0 %2003
        %2007 = vset.pattern.permute.xlu0 0
        %2008 = vperm.xlu0 %2007, %v1962
        %v2009 = vpop.permute.xlu0 %2008
        %2012 = vset.pattern.permute.xlu0 0
        %2013 = vperm.xlu0 %2012, %v1963
        %v2014 = vpop.permute.xlu0 %2013
        %2017 = vset.pattern.permute.xlu0 0
        %2018 = vperm.xlu0 %2017, %v1964
        %v2019 = vpop.permute.xlu0 %2018
        %2022 = vset.pattern.permute.xlu0 0
        %2023 = vperm.xlu0 %2022, %v1965
        %v2024 = vpop.permute.xlu0 %2023
        %2027 = vset.pattern.permute.xlu0 0
        %2028 = vperm.xlu0 %2027, %v1966
        %v2029 = vpop.permute.xlu0 %2028
        %2032 = vset.pattern.permute.xlu0 0
        %2033 = vperm.xlu0 %2032, %v1967
        %v2034 = vpop.permute.xlu0 %2033
        %2037 = vset.pattern.permute.xlu0 0
        %2038 = vperm.xlu0 %2037, %v1968
        %v2039 = vpop.permute.xlu0 %2038
        %2042 = vset.pattern.permute.xlu0 0
        %2043 = vperm.xlu0 %2042, %v1969
        %v2044 = vpop.permute.xlu0 %2043
        %2047 = vset.pattern.permute.xlu0 0
        %2048 = vperm.xlu0 %2047, %v1970
        %v2049 = vpop.permute.xlu0 %2048
        %v2051 = vmul.f32 %v1974, %v391
        %v2052 = vmul.f32 %v1974, %v392
        %v2053 = vmul.f32 %v1979, %v391
        %v2054 = vmul.f32 %v1979, %v392
        %v2055 = vmul.f32 %v1984, %v391
        %v2056 = vmul.f32 %v1984, %v392
        %v2057 = vmul.f32 %v1989, %v391
        %v2058 = vmul.f32 %v1989, %v392
        %v2059 = vmul.f32 %v1994, %v391
        %v2060 = vmul.f32 %v1994, %v392
        %v2061 = vmul.f32 %v1999, %v391
        %v2062 = vmul.f32 %v1999, %v392
        %v2063 = vmul.f32 %v2004, %v391
        %v2064 = vmul.f32 %v2004, %v392
        %v2065 = vmul.f32 %v2009, %v391
        %v2066 = vmul.f32 %v2009, %v392
        %v2067 = vmul.f32 %v2014, %v391
        %v2068 = vmul.f32 %v2014, %v392
        %v2069 = vmul.f32 %v2019, %v391
        %v2070 = vmul.f32 %v2019, %v392
        %v2071 = vmul.f32 %v2024, %v391
        %v2072 = vmul.f32 %v2024, %v392
        %v2073 = vmul.f32 %v2029, %v391
        %v2074 = vmul.f32 %v2029, %v392
        %v2075 = vmul.f32 %v2034, %v391
        %v2076 = vmul.f32 %v2034, %v392
        %v2077 = vmul.f32 %v2039, %v391
        %v2078 = vmul.f32 %v2039, %v392
        %v2079 = vmul.f32 %v2044, %v391
        %v2080 = vmul.f32 %v2044, %v392
        %v2081 = vmul.f32 %v2049, %v391
        %v2082 = vmul.f32 %v2049, %v392
        %2083 = vset.pattern.permute.xlu0 1
        %2084 = vperm.xlu0 %2083, %v1955
        %v2085 = vpop.permute.xlu0 %2084
        %2087 = vset.pattern.permute.xlu0 1
        %2088 = vperm.xlu0 %2087, %v1956
        %v2089 = vpop.permute.xlu0 %2088
        %2091 = vset.pattern.permute.xlu0 1
        %2092 = vperm.xlu0 %2091, %v1957
        %v2093 = vpop.permute.xlu0 %2092
        %2095 = vset.pattern.permute.xlu0 1
        %2096 = vperm.xlu0 %2095, %v1958
        %v2097 = vpop.permute.xlu0 %2096
        %2099 = vset.pattern.permute.xlu0 1
        %2100 = vperm.xlu0 %2099, %v1959
        %v2101 = vpop.permute.xlu0 %2100
        %2103 = vset.pattern.permute.xlu0 1
        %2104 = vperm.xlu0 %2103, %v1960
        %v2105 = vpop.permute.xlu0 %2104
        %2107 = vset.pattern.permute.xlu0 1
        %2108 = vperm.xlu0 %2107, %v1961
        %v2109 = vpop.permute.xlu0 %2108
        %2111 = vset.pattern.permute.xlu0 1
        %2112 = vperm.xlu0 %2111, %v1962
        %v2113 = vpop.permute.xlu0 %2112
        %2115 = vset.pattern.permute.xlu0 1
        %2116 = vperm.xlu0 %2115, %v1963
        %v2117 = vpop.permute.xlu0 %2116
        %2119 = vset.pattern.permute.xlu0 1
        %2120 = vperm.xlu0 %2119, %v1964
        %v2121 = vpop.permute.xlu0 %2120
        %2123 = vset.pattern.permute.xlu0 1
        %2124 = vperm.xlu0 %2123, %v1965
        %v2125 = vpop.permute.xlu0 %2124
        %2127 = vset.pattern.permute.xlu0 1
        %2128 = vperm.xlu0 %2127, %v1966
        %v2129 = vpop.permute.xlu0 %2128
        %2131 = vset.pattern.permute.xlu0 1
        %2132 = vperm.xlu0 %2131, %v1967
        %v2133 = vpop.permute.xlu0 %2132
        %2135 = vset.pattern.permute.xlu0 1
        %2136 = vperm.xlu0 %2135, %v1968
        %v2137 = vpop.permute.xlu0 %2136
        %2139 = vset.pattern.permute.xlu0 1
        %2140 = vperm.xlu0 %2139, %v1969
        %v2141 = vpop.permute.xlu0 %2140
        %2143 = vset.pattern.permute.xlu0 1
        %2144 = vperm.xlu0 %2143, %v1970
        %v2145 = vpop.permute.xlu0 %2144
        %v2147 = vmul.f32 %v2085, %v493
        %v2148 = vmul.f32 %v2085, %v494
        %v2149 = vmul.f32 %v2089, %v493
        %v2150 = vmul.f32 %v2089, %v494
        %v2151 = vmul.f32 %v2093, %v493
        %v2152 = vmul.f32 %v2093, %v494
        %v2153 = vmul.f32 %v2097, %v493
        %v2154 = vmul.f32 %v2097, %v494
        %v2155 = vmul.f32 %v2101, %v493
        %v2156 = vmul.f32 %v2101, %v494
        %v2157 = vmul.f32 %v2105, %v493
        %v2158 = vmul.f32 %v2105, %v494
        %v2159 = vmul.f32 %v2109, %v493
        %v2160 = vmul.f32 %v2109, %v494
        %v2161 = vmul.f32 %v2113, %v493
        %v2162 = vmul.f32 %v2113, %v494
        %v2163 = vmul.f32 %v2117, %v493
        %v2164 = vmul.f32 %v2117, %v494
        %v2165 = vmul.f32 %v2121, %v493
        %v2166 = vmul.f32 %v2121, %v494
        %v2167 = vmul.f32 %v2125, %v493
        %v2168 = vmul.f32 %v2125, %v494
        %v2169 = vmul.f32 %v2129, %v493
        %v2170 = vmul.f32 %v2129, %v494
        %v2171 = vmul.f32 %v2133, %v493
        %v2172 = vmul.f32 %v2133, %v494
        %v2173 = vmul.f32 %v2137, %v493
        %v2174 = vmul.f32 %v2137, %v494
        %v2175 = vmul.f32 %v2141, %v493
        %v2176 = vmul.f32 %v2141, %v494
        %v2177 = vmul.f32 %v2145, %v493
        %v2178 = vmul.f32 %v2145, %v494
        %v2179 = vadd.f32 %v2051, %v2147
        %v2180 = vadd.f32 %v2052, %v2148
        %v2181 = vadd.f32 %v2053, %v2149
        %v2182 = vadd.f32 %v2054, %v2150
        %v2183 = vadd.f32 %v2055, %v2151
        %v2184 = vadd.f32 %v2056, %v2152
        %v2185 = vadd.f32 %v2057, %v2153
        %v2186 = vadd.f32 %v2058, %v2154
        %v2187 = vadd.f32 %v2059, %v2155
        %v2188 = vadd.f32 %v2060, %v2156
        %v2189 = vadd.f32 %v2061, %v2157
        %v2190 = vadd.f32 %v2062, %v2158
        %v2191 = vadd.f32 %v2063, %v2159
        %v2192 = vadd.f32 %v2064, %v2160
        %v2193 = vadd.f32 %v2065, %v2161
        %v2194 = vadd.f32 %v2066, %v2162
        %v2195 = vadd.f32 %v2067, %v2163
        %v2196 = vadd.f32 %v2068, %v2164
        %v2197 = vadd.f32 %v2069, %v2165
        %v2198 = vadd.f32 %v2070, %v2166
        %v2199 = vadd.f32 %v2071, %v2167
        %v2200 = vadd.f32 %v2072, %v2168
        %v2201 = vadd.f32 %v2073, %v2169
        %v2202 = vadd.f32 %v2074, %v2170
        %v2203 = vadd.f32 %v2075, %v2171
        %v2204 = vadd.f32 %v2076, %v2172
        %v2205 = vadd.f32 %v2077, %v2173
        %v2206 = vadd.f32 %v2078, %v2174
        %v2207 = vadd.f32 %v2079, %v2175
        %v2208 = vadd.f32 %v2080, %v2176
        %v2209 = vadd.f32 %v2081, %v2177
        %v2210 = vadd.f32 %v2082, %v2178
        %2211 = vset.pattern.permute.xlu0 2
        %2212 = vperm.xlu0 %2211, %v1955
        %v2213 = vpop.permute.xlu0 %2212
        %2215 = vset.pattern.permute.xlu0 2
        %2216 = vperm.xlu0 %2215, %v1956
        %v2217 = vpop.permute.xlu0 %2216
        %2219 = vset.pattern.permute.xlu0 2
        %2220 = vperm.xlu0 %2219, %v1957
        %v2221 = vpop.permute.xlu0 %2220
        %2223 = vset.pattern.permute.xlu0 2
        %2224 = vperm.xlu0 %2223, %v1958
        %v2225 = vpop.permute.xlu0 %2224
        %2227 = vset.pattern.permute.xlu0 2
        %2228 = vperm.xlu0 %2227, %v1959
        %v2229 = vpop.permute.xlu0 %2228
        %2231 = vset.pattern.permute.xlu0 2
        %2232 = vperm.xlu0 %2231, %v1960
        %v2233 = vpop.permute.xlu0 %2232
        %2235 = vset.pattern.permute.xlu0 2
        %2236 = vperm.xlu0 %2235, %v1961
        %v2237 = vpop.permute.xlu0 %2236
        %2239 = vset.pattern.permute.xlu0 2
        %2240 = vperm.xlu0 %2239, %v1962
        %v2241 = vpop.permute.xlu0 %2240
        %2243 = vset.pattern.permute.xlu0 2
        %2244 = vperm.xlu0 %2243, %v1963
        %v2245 = vpop.permute.xlu0 %2244
        %2247 = vset.pattern.permute.xlu0 2
        %2248 = vperm.xlu0 %2247, %v1964
        %v2249 = vpop.permute.xlu0 %2248
        %2251 = vset.pattern.permute.xlu0 2
        %2252 = vperm.xlu0 %2251, %v1965
        %v2253 = vpop.permute.xlu0 %2252
        %2255 = vset.pattern.permute.xlu0 2
        %2256 = vperm.xlu0 %2255, %v1966
        %v2257 = vpop.permute.xlu0 %2256
        %2259 = vset.pattern.permute.xlu0 2
        %2260 = vperm.xlu0 %2259, %v1967
        %v2261 = vpop.permute.xlu0 %2260
        %2263 = vset.pattern.permute.xlu0 2
        %2264 = vperm.xlu0 %2263, %v1968
        %v2265 = vpop.permute.xlu0 %2264
        %2267 = vset.pattern.permute.xlu0 2
        %2268 = vperm.xlu0 %2267, %v1969
        %v2269 = vpop.permute.xlu0 %2268
        %2271 = vset.pattern.permute.xlu0 2
        %2272 = vperm.xlu0 %2271, %v1970
        %v2273 = vpop.permute.xlu0 %2272
        %v2275 = vmul.f32 %v2213, %v627
        %v2276 = vmul.f32 %v2213, %v628
        %v2277 = vmul.f32 %v2217, %v627
        %v2278 = vmul.f32 %v2217, %v628
        %v2279 = vmul.f32 %v2221, %v627
        %v2280 = vmul.f32 %v2221, %v628
        %v2281 = vmul.f32 %v2225, %v627
        %v2282 = vmul.f32 %v2225, %v628
        %v2283 = vmul.f32 %v2229, %v627
        %v2284 = vmul.f32 %v2229, %v628
        %v2285 = vmul.f32 %v2233, %v627
        %v2286 = vmul.f32 %v2233, %v628
        %v2287 = vmul.f32 %v2237, %v627
        %v2288 = vmul.f32 %v2237, %v628
        %v2289 = vmul.f32 %v2241, %v627
        %v2290 = vmul.f32 %v2241, %v628
        %v2291 = vmul.f32 %v2245, %v627
        %v2292 = vmul.f32 %v2245, %v628
        %v2293 = vmul.f32 %v2249, %v627
        %v2294 = vmul.f32 %v2249, %v628
        %v2295 = vmul.f32 %v2253, %v627
        %v2296 = vmul.f32 %v2253, %v628
        %v2297 = vmul.f32 %v2257, %v627
        %v2298 = vmul.f32 %v2257, %v628
        %v2299 = vmul.f32 %v2261, %v627
        %v2300 = vmul.f32 %v2261, %v628
        %v2301 = vmul.f32 %v2265, %v627
        %v2302 = vmul.f32 %v2265, %v628
        %v2303 = vmul.f32 %v2269, %v627
        %v2304 = vmul.f32 %v2269, %v628
        %v2305 = vmul.f32 %v2273, %v627
        %v2306 = vmul.f32 %v2273, %v628
        %v2307 = vadd.f32 %v2179, %v2275
        %v2308 = vadd.f32 %v2180, %v2276
        %v2309 = vadd.f32 %v2181, %v2277
        %v2310 = vadd.f32 %v2182, %v2278
        %v2311 = vadd.f32 %v2183, %v2279
        %v2312 = vadd.f32 %v2184, %v2280
        %v2313 = vadd.f32 %v2185, %v2281
        %v2314 = vadd.f32 %v2186, %v2282
        %v2315 = vadd.f32 %v2187, %v2283
        %v2316 = vadd.f32 %v2188, %v2284
        %v2317 = vadd.f32 %v2189, %v2285
        %v2318 = vadd.f32 %v2190, %v2286
        %v2319 = vadd.f32 %v2191, %v2287
        %v2320 = vadd.f32 %v2192, %v2288
        %v2321 = vadd.f32 %v2193, %v2289
        %v2322 = vadd.f32 %v2194, %v2290
        %v2323 = vadd.f32 %v2195, %v2291
        %v2324 = vadd.f32 %v2196, %v2292
        %v2325 = vadd.f32 %v2197, %v2293
        %v2326 = vadd.f32 %v2198, %v2294
        %v2327 = vadd.f32 %v2199, %v2295
        %v2328 = vadd.f32 %v2200, %v2296
        %v2329 = vadd.f32 %v2201, %v2297
        %v2330 = vadd.f32 %v2202, %v2298
        %v2331 = vadd.f32 %v2203, %v2299
        %v2332 = vadd.f32 %v2204, %v2300
        %v2333 = vadd.f32 %v2205, %v2301
        %v2334 = vadd.f32 %v2206, %v2302
        %v2335 = vadd.f32 %v2207, %v2303
        %v2336 = vadd.f32 %v2208, %v2304
        %v2337 = vadd.f32 %v2209, %v2305
        %v2338 = vadd.f32 %v2210, %v2306
        %2339 = vset.pattern.permute.xlu0 3
        %2340 = vperm.xlu0 %2339, %v1955
        %v2341 = vpop.permute.xlu0 %2340
        %2343 = vset.pattern.permute.xlu0 3
        %2344 = vperm.xlu0 %2343, %v1956
        %v2345 = vpop.permute.xlu0 %2344
        %2347 = vset.pattern.permute.xlu0 3
        %2348 = vperm.xlu0 %2347, %v1957
        %v2349 = vpop.permute.xlu0 %2348
        %2351 = vset.pattern.permute.xlu0 3
        %2352 = vperm.xlu0 %2351, %v1958
        %v2353 = vpop.permute.xlu0 %2352
        %2355 = vset.pattern.permute.xlu0 3
        %2356 = vperm.xlu0 %2355, %v1959
        %v2357 = vpop.permute.xlu0 %2356
        %2359 = vset.pattern.permute.xlu0 3
        %2360 = vperm.xlu0 %2359, %v1960
        %v2361 = vpop.permute.xlu0 %2360
        %2363 = vset.pattern.permute.xlu0 3
        %2364 = vperm.xlu0 %2363, %v1961
        %v2365 = vpop.permute.xlu0 %2364
        %2367 = vset.pattern.permute.xlu0 3
        %2368 = vperm.xlu0 %2367, %v1962
        %v2369 = vpop.permute.xlu0 %2368
        %2371 = vset.pattern.permute.xlu0 3
        %2372 = vperm.xlu0 %2371, %v1963
        %v2373 = vpop.permute.xlu0 %2372
        %2375 = vset.pattern.permute.xlu0 3
        %2376 = vperm.xlu0 %2375, %v1964
        %v2377 = vpop.permute.xlu0 %2376
        %2379 = vset.pattern.permute.xlu0 3
        %2380 = vperm.xlu0 %2379, %v1965
        %v2381 = vpop.permute.xlu0 %2380
        %2383 = vset.pattern.permute.xlu0 3
        %2384 = vperm.xlu0 %2383, %v1966
        %v2385 = vpop.permute.xlu0 %2384
        %2387 = vset.pattern.permute.xlu0 3
        %2388 = vperm.xlu0 %2387, %v1967
        %v2389 = vpop.permute.xlu0 %2388
        %2391 = vset.pattern.permute.xlu0 3
        %2392 = vperm.xlu0 %2391, %v1968
        %v2393 = vpop.permute.xlu0 %2392
        %2395 = vset.pattern.permute.xlu0 3
        %2396 = vperm.xlu0 %2395, %v1969
        %v2397 = vpop.permute.xlu0 %2396
        %2399 = vset.pattern.permute.xlu0 3
        %2400 = vperm.xlu0 %2399, %v1970
        %v2401 = vpop.permute.xlu0 %2400
        %v2403 = vmul.f32 %v2341, %v761
        %v2404 = vmul.f32 %v2341, %v762
        %v2405 = vmul.f32 %v2345, %v761
        %v2406 = vmul.f32 %v2345, %v762
        %v2407 = vmul.f32 %v2349, %v761
        %v2408 = vmul.f32 %v2349, %v762
        %v2409 = vmul.f32 %v2353, %v761
        %v2410 = vmul.f32 %v2353, %v762
        %v2411 = vmul.f32 %v2357, %v761
        %v2412 = vmul.f32 %v2357, %v762
        %v2413 = vmul.f32 %v2361, %v761
        %v2414 = vmul.f32 %v2361, %v762
        %v2415 = vmul.f32 %v2365, %v761
        %v2416 = vmul.f32 %v2365, %v762
        %v2417 = vmul.f32 %v2369, %v761
        %v2418 = vmul.f32 %v2369, %v762
        %v2419 = vmul.f32 %v2373, %v761
        %v2420 = vmul.f32 %v2373, %v762
        %v2421 = vmul.f32 %v2377, %v761
        %v2422 = vmul.f32 %v2377, %v762
        %v2423 = vmul.f32 %v2381, %v761
        %v2424 = vmul.f32 %v2381, %v762
        %v2425 = vmul.f32 %v2385, %v761
        %v2426 = vmul.f32 %v2385, %v762
        %v2427 = vmul.f32 %v2389, %v761
        %v2428 = vmul.f32 %v2389, %v762
        %v2429 = vmul.f32 %v2393, %v761
        %v2430 = vmul.f32 %v2393, %v762
        %v2431 = vmul.f32 %v2397, %v761
        %v2432 = vmul.f32 %v2397, %v762
        %v2433 = vmul.f32 %v2401, %v761
        %v2434 = vmul.f32 %v2401, %v762
        %v2435 = vadd.f32 %v2307, %v2403
        %v2436 = vadd.f32 %v2308, %v2404
        %v2437 = vadd.f32 %v2309, %v2405
        %v2438 = vadd.f32 %v2310, %v2406
        %v2439 = vadd.f32 %v2311, %v2407
        %v2440 = vadd.f32 %v2312, %v2408
        %v2441 = vadd.f32 %v2313, %v2409
        %v2442 = vadd.f32 %v2314, %v2410
        %v2443 = vadd.f32 %v2315, %v2411
        %v2444 = vadd.f32 %v2316, %v2412
        %v2445 = vadd.f32 %v2317, %v2413
        %v2446 = vadd.f32 %v2318, %v2414
        %v2447 = vadd.f32 %v2319, %v2415
        %v2448 = vadd.f32 %v2320, %v2416
        %v2449 = vadd.f32 %v2321, %v2417
        %v2450 = vadd.f32 %v2322, %v2418
        %v2451 = vadd.f32 %v2323, %v2419
        %v2452 = vadd.f32 %v2324, %v2420
        %v2453 = vadd.f32 %v2325, %v2421
        %v2454 = vadd.f32 %v2326, %v2422
        %v2455 = vadd.f32 %v2327, %v2423
        %v2456 = vadd.f32 %v2328, %v2424
        %v2457 = vadd.f32 %v2329, %v2425
        %v2458 = vadd.f32 %v2330, %v2426
        %v2459 = vadd.f32 %v2331, %v2427
        %v2460 = vadd.f32 %v2332, %v2428
        %v2461 = vadd.f32 %v2333, %v2429
        %v2462 = vadd.f32 %v2334, %v2430
        %v2463 = vadd.f32 %v2335, %v2431
        %v2464 = vadd.f32 %v2336, %v2432
        %v2465 = vadd.f32 %v2337, %v2433
        %v2466 = vadd.f32 %v2338, %v2434
        %v2467 = vpack.c.bf16 %v2436, %v2435
        %v2468 = vpack.c.bf16 %v2438, %v2437
        %v2469 = vpack.c.bf16 %v2440, %v2439
        %v2470 = vpack.c.bf16 %v2442, %v2441
        %v2471 = vpack.c.bf16 %v2444, %v2443
        %v2472 = vpack.c.bf16 %v2446, %v2445
        %v2473 = vpack.c.bf16 %v2448, %v2447
        %v2474 = vpack.c.bf16 %v2450, %v2449
        %v2475 = vpack.c.bf16 %v2452, %v2451
        %v2476 = vpack.c.bf16 %v2454, %v2453
        %v2477 = vpack.c.bf16 %v2456, %v2455
        %v2478 = vpack.c.bf16 %v2458, %v2457
        %v2479 = vpack.c.bf16 %v2460, %v2459
        %v2480 = vpack.c.bf16 %v2462, %v2461
        %v2481 = vpack.c.bf16 %v2464, %v2463
        %v2482 = vpack.c.bf16 %v2466, %v2465
        %2483 = vst [vmem:[#allocation4] sm:$0xff] %v2467
        %2484 = vst [vmem:[#allocation4 + $0x8] sm:$0xff] %v2468
        %2485 = vst [vmem:[#allocation4 + $0x10] sm:$0xff] %v2469
        %2486 = vst [vmem:[#allocation4 + $0x18] sm:$0xff] %v2470
        %2487 = vst [vmem:[#allocation4 + $0x20] sm:$0xff] %v2471
        %2488 = vst [vmem:[#allocation4 + $0x28] sm:$0xff] %v2472
        %2489 = vst [vmem:[#allocation4 + $0x30] sm:$0xff] %v2473
        %2490 = vst [vmem:[#allocation4 + $0x38] sm:$0xff] %v2474
        %2491 = vst [vmem:[#allocation4 + $0x40] sm:$0xff] %v2475
        %2492 = vst [vmem:[#allocation4 + $0x48] sm:$0xff] %v2476
        %2493 = vst [vmem:[#allocation4 + $0x50] sm:$0xff] %v2477
        %2494 = vst [vmem:[#allocation4 + $0x58] sm:$0xff] %v2478
        %2495 = vst [vmem:[#allocation4 + $0x60] sm:$0xff] %v2479
        %2496 = vst [vmem:[#allocation4 + $0x68] sm:$0xff] %v2480
        %2497 = vst [vmem:[#allocation4 + $0x70] sm:$0xff] %v2481
        %2498 = vst [vmem:[#allocation4 + $0x78] sm:$0xff] %v2482
        %s2499 = scalar_lea.vmem %s270, 8
        %v2500 = vld [vmem:[%s2499] sm:$0xff]
        %v2501 = vld [vmem:[%s1 + $0x40] sm:$0xf]
        %v2502 = vld [vmem:[%s1 + $0x44] sm:$0xf]
        %v2503 = vld [vmem:[%s1 + $0x48] sm:$0xf]
        %v2504 = vld [vmem:[%s1 + $0x4c] sm:$0xf]
        %v2505 = vld [vmem:[%s1 + $0x50] sm:$0xf]
        %v2506 = vld [vmem:[%s1 + $0x54] sm:$0xf]
        %v2507 = vld [vmem:[%s1 + $0x58] sm:$0xf]
        %v2508 = vld [vmem:[%s1 + $0x5c] sm:$0xf]
        %v2509 = vld [vmem:[%s1 + $0x60] sm:$0xf]
        %v2510 = vld [vmem:[%s1 + $0x64] sm:$0xf]
        %v2511 = vld [vmem:[%s1 + $0x68] sm:$0xf]
        %v2512 = vld [vmem:[%s1 + $0x6c] sm:$0xf]
        %v2513 = vld [vmem:[%s1 + $0x70] sm:$0xf]
        %v2514 = vld [vmem:[%s1 + $0x74] sm:$0xf]
        %v2515 = vld [vmem:[%s1 + $0x78] sm:$0xf]
        %v2516 = vld [vmem:[%s1 + $0x7c] sm:$0xf]
        %v2517 = vunpack.c.l.bf16 %v2501
        %v2518 = vunpack.c.l.bf16 %v2502
        %v2519 = vunpack.c.l.bf16 %v2503
        %v2520 = vunpack.c.l.bf16 %v2504
        %v2521 = vunpack.c.l.bf16 %v2505
        %v2522 = vunpack.c.l.bf16 %v2506
        %v2523 = vunpack.c.l.bf16 %v2507
        %v2524 = vunpack.c.l.bf16 %v2508
        %v2525 = vunpack.c.l.bf16 %v2509
        %v2526 = vunpack.c.l.bf16 %v2510
        %v2527 = vunpack.c.l.bf16 %v2511
        %v2528 = vunpack.c.l.bf16 %v2512
        %v2529 = vunpack.c.l.bf16 %v2513
        %v2530 = vunpack.c.l.bf16 %v2514
        %v2531 = vunpack.c.l.bf16 %v2515
        %v2532 = vunpack.c.l.bf16 %v2516
        %2534 = vset.pattern.permute.xlu0 0
        %2535 = vperm.xlu0 %2534, %v2517
        %v2536 = vpop.permute.xlu0 %2535
        %2539 = vset.pattern.permute.xlu0 0
        %2540 = vperm.xlu0 %2539, %v2518
        %v2541 = vpop.permute.xlu0 %2540
        %2544 = vset.pattern.permute.xlu0 0
        %2545 = vperm.xlu0 %2544, %v2519
        %v2546 = vpop.permute.xlu0 %2545
        %2549 = vset.pattern.permute.xlu0 0
        %2550 = vperm.xlu0 %2549, %v2520
        %v2551 = vpop.permute.xlu0 %2550
        %2554 = vset.pattern.permute.xlu0 0
        %2555 = vperm.xlu0 %2554, %v2521
        %v2556 = vpop.permute.xlu0 %2555
        %2559 = vset.pattern.permute.xlu0 0
        %2560 = vperm.xlu0 %2559, %v2522
        %v2561 = vpop.permute.xlu0 %2560
        %2564 = vset.pattern.permute.xlu0 0
        %2565 = vperm.xlu0 %2564, %v2523
        %v2566 = vpop.permute.xlu0 %2565
        %2569 = vset.pattern.permute.xlu0 0
        %2570 = vperm.xlu0 %2569, %v2524
        %v2571 = vpop.permute.xlu0 %2570
        %2574 = vset.pattern.permute.xlu0 0
        %2575 = vperm.xlu0 %2574, %v2525
        %v2576 = vpop.permute.xlu0 %2575
        %2579 = vset.pattern.permute.xlu0 0
        %2580 = vperm.xlu0 %2579, %v2526
        %v2581 = vpop.permute.xlu0 %2580
        %2584 = vset.pattern.permute.xlu0 0
        %2585 = vperm.xlu0 %2584, %v2527
        %v2586 = vpop.permute.xlu0 %2585
        %2589 = vset.pattern.permute.xlu0 0
        %2590 = vperm.xlu0 %2589, %v2528
        %v2591 = vpop.permute.xlu0 %2590
        %2594 = vset.pattern.permute.xlu0 0
        %2595 = vperm.xlu0 %2594, %v2529
        %v2596 = vpop.permute.xlu0 %2595
        %2599 = vset.pattern.permute.xlu0 0
        %2600 = vperm.xlu0 %2599, %v2530
        %v2601 = vpop.permute.xlu0 %2600
        %2604 = vset.pattern.permute.xlu0 0
        %2605 = vperm.xlu0 %2604, %v2531
        %v2606 = vpop.permute.xlu0 %2605
        %2609 = vset.pattern.permute.xlu0 0
        %2610 = vperm.xlu0 %2609, %v2532
        %v2611 = vpop.permute.xlu0 %2610
        %v2614 = vperm.slane %v2500, 0
        %v2615 = vperm.slane %v2500, 4
        %v2618 = vperm.slane %v2614, 0
        %v2619 = vperm.slane %v2615, 0
        %v2620 = vmul.f32 %v2536, %v2618
        %v2621 = vmul.f32 %v2536, %v2619
        %v2622 = vmul.f32 %v2541, %v2618
        %v2623 = vmul.f32 %v2541, %v2619
        %v2624 = vmul.f32 %v2546, %v2618
        %v2625 = vmul.f32 %v2546, %v2619
        %v2626 = vmul.f32 %v2551, %v2618
        %v2627 = vmul.f32 %v2551, %v2619
        %v2628 = vmul.f32 %v2556, %v2618
        %v2629 = vmul.f32 %v2556, %v2619
        %v2630 = vmul.f32 %v2561, %v2618
        %v2631 = vmul.f32 %v2561, %v2619
        %v2632 = vmul.f32 %v2566, %v2618
        %v2633 = vmul.f32 %v2566, %v2619
        %v2634 = vmul.f32 %v2571, %v2618
        %v2635 = vmul.f32 %v2571, %v2619
        %v2636 = vmul.f32 %v2576, %v2618
        %v2637 = vmul.f32 %v2576, %v2619
        %v2638 = vmul.f32 %v2581, %v2618
        %v2639 = vmul.f32 %v2581, %v2619
        %v2640 = vmul.f32 %v2586, %v2618
        %v2641 = vmul.f32 %v2586, %v2619
        %v2642 = vmul.f32 %v2591, %v2618
        %v2643 = vmul.f32 %v2591, %v2619
        %v2644 = vmul.f32 %v2596, %v2618
        %v2645 = vmul.f32 %v2596, %v2619
        %v2646 = vmul.f32 %v2601, %v2618
        %v2647 = vmul.f32 %v2601, %v2619
        %v2648 = vmul.f32 %v2606, %v2618
        %v2649 = vmul.f32 %v2606, %v2619
        %v2650 = vmul.f32 %v2611, %v2618
        %v2651 = vmul.f32 %v2611, %v2619
        %2652 = vset.pattern.permute.xlu0 1
        %2653 = vperm.xlu0 %2652, %v2517
        %v2654 = vpop.permute.xlu0 %2653
        %2656 = vset.pattern.permute.xlu0 1
        %2657 = vperm.xlu0 %2656, %v2518
        %v2658 = vpop.permute.xlu0 %2657
        %2660 = vset.pattern.permute.xlu0 1
        %2661 = vperm.xlu0 %2660, %v2519
        %v2662 = vpop.permute.xlu0 %2661
        %2664 = vset.pattern.permute.xlu0 1
        %2665 = vperm.xlu0 %2664, %v2520
        %v2666 = vpop.permute.xlu0 %2665
        %2668 = vset.pattern.permute.xlu0 1
        %2669 = vperm.xlu0 %2668, %v2521
        %v2670 = vpop.permute.xlu0 %2669
        %2672 = vset.pattern.permute.xlu0 1
        %2673 = vperm.xlu0 %2672, %v2522
        %v2674 = vpop.permute.xlu0 %2673
        %2676 = vset.pattern.permute.xlu0 1
        %2677 = vperm.xlu0 %2676, %v2523
        %v2678 = vpop.permute.xlu0 %2677
        %2680 = vset.pattern.permute.xlu0 1
        %2681 = vperm.xlu0 %2680, %v2524
        %v2682 = vpop.permute.xlu0 %2681
        %2684 = vset.pattern.permute.xlu0 1
        %2685 = vperm.xlu0 %2684, %v2525
        %v2686 = vpop.permute.xlu0 %2685
        %2688 = vset.pattern.permute.xlu0 1
        %2689 = vperm.xlu0 %2688, %v2526
        %v2690 = vpop.permute.xlu0 %2689
        %2692 = vset.pattern.permute.xlu0 1
        %2693 = vperm.xlu0 %2692, %v2527
        %v2694 = vpop.permute.xlu0 %2693
        %2696 = vset.pattern.permute.xlu0 1
        %2697 = vperm.xlu0 %2696, %v2528
        %v2698 = vpop.permute.xlu0 %2697
        %2700 = vset.pattern.permute.xlu0 1
        %2701 = vperm.xlu0 %2700, %v2529
        %v2702 = vpop.permute.xlu0 %2701
        %2704 = vset.pattern.permute.xlu0 1
        %2705 = vperm.xlu0 %2704, %v2530
        %v2706 = vpop.permute.xlu0 %2705
        %2708 = vset.pattern.permute.xlu0 1
        %2709 = vperm.xlu0 %2708, %v2531
        %v2710 = vpop.permute.xlu0 %2709
        %2712 = vset.pattern.permute.xlu0 1
        %2713 = vperm.xlu0 %2712, %v2532
        %v2714 = vpop.permute.xlu0 %2713
        %v2716 = vperm.slane %v2500, 1
        %v2717 = vperm.slane %v2500, 5
        %v2720 = vperm.slane %v2716, 1
        %v2721 = vperm.slane %v2717, 1
        %v2722 = vmul.f32 %v2654, %v2720
        %v2723 = vmul.f32 %v2654, %v2721
        %v2724 = vmul.f32 %v2658, %v2720
        %v2725 = vmul.f32 %v2658, %v2721
        %v2726 = vmul.f32 %v2662, %v2720
        %v2727 = vmul.f32 %v2662, %v2721
        %v2728 = vmul.f32 %v2666, %v2720
        %v2729 = vmul.f32 %v2666, %v2721
        %v2730 = vmul.f32 %v2670, %v2720
        %v2731 = vmul.f32 %v2670, %v2721
        %v2732 = vmul.f32 %v2674, %v2720
        %v2733 = vmul.f32 %v2674, %v2721
        %v2734 = vmul.f32 %v2678, %v2720
        %v2735 = vmul.f32 %v2678, %v2721
        %v2736 = vmul.f32 %v2682, %v2720
        %v2737 = vmul.f32 %v2682, %v2721
        %v2738 = vmul.f32 %v2686, %v2720
        %v2739 = vmul.f32 %v2686, %v2721
        %v2740 = vmul.f32 %v2690, %v2720
        %v2741 = vmul.f32 %v2690, %v2721
        %v2742 = vmul.f32 %v2694, %v2720
        %v2743 = vmul.f32 %v2694, %v2721
        %v2744 = vmul.f32 %v2698, %v2720
        %v2745 = vmul.f32 %v2698, %v2721
        %v2746 = vmul.f32 %v2702, %v2720
        %v2747 = vmul.f32 %v2702, %v2721
        %v2748 = vmul.f32 %v2706, %v2720
        %v2749 = vmul.f32 %v2706, %v2721
        %v2750 = vmul.f32 %v2710, %v2720
        %v2751 = vmul.f32 %v2710, %v2721
        %v2752 = vmul.f32 %v2714, %v2720
        %v2753 = vmul.f32 %v2714, %v2721
        %v2754 = vadd.f32 %v2620, %v2722
        %v2755 = vadd.f32 %v2621, %v2723
        %v2756 = vadd.f32 %v2622, %v2724
        %v2757 = vadd.f32 %v2623, %v2725
        %v2758 = vadd.f32 %v2624, %v2726
        %v2759 = vadd.f32 %v2625, %v2727
        %v2760 = vadd.f32 %v2626, %v2728
        %v2761 = vadd.f32 %v2627, %v2729
        %v2762 = vadd.f32 %v2628, %v2730
        %v2763 = vadd.f32 %v2629, %v2731
        %v2764 = vadd.f32 %v2630, %v2732
        %v2765 = vadd.f32 %v2631, %v2733
        %v2766 = vadd.f32 %v2632, %v2734
        %v2767 = vadd.f32 %v2633, %v2735
        %v2768 = vadd.f32 %v2634, %v2736
        %v2769 = vadd.f32 %v2635, %v2737
        %v2770 = vadd.f32 %v2636, %v2738
        %v2771 = vadd.f32 %v2637, %v2739
        %v2772 = vadd.f32 %v2638, %v2740
        %v2773 = vadd.f32 %v2639, %v2741
        %v2774 = vadd.f32 %v2640, %v2742
        %v2775 = vadd.f32 %v2641, %v2743
        %v2776 = vadd.f32 %v2642, %v2744
        %v2777 = vadd.f32 %v2643, %v2745
        %v2778 = vadd.f32 %v2644, %v2746
        %v2779 = vadd.f32 %v2645, %v2747
        %v2780 = vadd.f32 %v2646, %v2748
        %v2781 = vadd.f32 %v2647, %v2749
        %v2782 = vadd.f32 %v2648, %v2750
        %v2783 = vadd.f32 %v2649, %v2751
        %v2784 = vadd.f32 %v2650, %v2752
        %v2785 = vadd.f32 %v2651, %v2753
        %2786 = vset.pattern.permute.xlu0 2
        %2787 = vperm.xlu0 %2786, %v2517
        %v2788 = vpop.permute.xlu0 %2787
        %2790 = vset.pattern.permute.xlu0 2
        %2791 = vperm.xlu0 %2790, %v2518
        %v2792 = vpop.permute.xlu0 %2791
        %2794 = vset.pattern.permute.xlu0 2
        %2795 = vperm.xlu0 %2794, %v2519
        %v2796 = vpop.permute.xlu0 %2795
        %2798 = vset.pattern.permute.xlu0 2
        %2799 = vperm.xlu0 %2798, %v2520
        %v2800 = vpop.permute.xlu0 %2799
        %2802 = vset.pattern.permute.xlu0 2
        %2803 = vperm.xlu0 %2802, %v2521
        %v2804 = vpop.permute.xlu0 %2803
        %2806 = vset.pattern.permute.xlu0 2
        %2807 = vperm.xlu0 %2806, %v2522
        %v2808 = vpop.permute.xlu0 %2807
        %2810 = vset.pattern.permute.xlu0 2
        %2811 = vperm.xlu0 %2810, %v2523
        %v2812 = vpop.permute.xlu0 %2811
        %2814 = vset.pattern.permute.xlu0 2
        %2815 = vperm.xlu0 %2814, %v2524
        %v2816 = vpop.permute.xlu0 %2815
        %2818 = vset.pattern.permute.xlu0 2
        %2819 = vperm.xlu0 %2818, %v2525
        %v2820 = vpop.permute.xlu0 %2819
        %2822 = vset.pattern.permute.xlu0 2
        %2823 = vperm.xlu0 %2822, %v2526
        %v2824 = vpop.permute.xlu0 %2823
        %2826 = vset.pattern.permute.xlu0 2
        %2827 = vperm.xlu0 %2826, %v2527
        %v2828 = vpop.permute.xlu0 %2827
        %2830 = vset.pattern.permute.xlu0 2
        %2831 = vperm.xlu0 %2830, %v2528
        %v2832 = vpop.permute.xlu0 %2831
        %2834 = vset.pattern.permute.xlu0 2
        %2835 = vperm.xlu0 %2834, %v2529
        %v2836 = vpop.permute.xlu0 %2835
        %2838 = vset.pattern.permute.xlu0 2
        %2839 = vperm.xlu0 %2838, %v2530
        %v2840 = vpop.permute.xlu0 %2839
        %2842 = vset.pattern.permute.xlu0 2
        %2843 = vperm.xlu0 %2842, %v2531
        %v2844 = vpop.permute.xlu0 %2843
        %2846 = vset.pattern.permute.xlu0 2
        %2847 = vperm.xlu0 %2846, %v2532
        %v2848 = vpop.permute.xlu0 %2847
        %v2850 = vperm.slane %v2500, 2
        %v2851 = vperm.slane %v2500, 6
        %v2854 = vperm.slane %v2850, 2
        %v2855 = vperm.slane %v2851, 2
        %v2856 = vmul.f32 %v2788, %v2854
        %v2857 = vmul.f32 %v2788, %v2855
        %v2858 = vmul.f32 %v2792, %v2854
        %v2859 = vmul.f32 %v2792, %v2855
        %v2860 = vmul.f32 %v2796, %v2854
        %v2861 = vmul.f32 %v2796, %v2855
        %v2862 = vmul.f32 %v2800, %v2854
        %v2863 = vmul.f32 %v2800, %v2855
        %v2864 = vmul.f32 %v2804, %v2854
        %v2865 = vmul.f32 %v2804, %v2855
        %v2866 = vmul.f32 %v2808, %v2854
        %v2867 = vmul.f32 %v2808, %v2855
        %v2868 = vmul.f32 %v2812, %v2854
        %v2869 = vmul.f32 %v2812, %v2855
        %v2870 = vmul.f32 %v2816, %v2854
        %v2871 = vmul.f32 %v2816, %v2855
        %v2872 = vmul.f32 %v2820, %v2854
        %v2873 = vmul.f32 %v2820, %v2855
        %v2874 = vmul.f32 %v2824, %v2854
        %v2875 = vmul.f32 %v2824, %v2855
        %v2876 = vmul.f32 %v2828, %v2854
        %v2877 = vmul.f32 %v2828, %v2855
        %v2878 = vmul.f32 %v2832, %v2854
        %v2879 = vmul.f32 %v2832, %v2855
        %v2880 = vmul.f32 %v2836, %v2854
        %v2881 = vmul.f32 %v2836, %v2855
        %v2882 = vmul.f32 %v2840, %v2854
        %v2883 = vmul.f32 %v2840, %v2855
        %v2884 = vmul.f32 %v2844, %v2854
        %v2885 = vmul.f32 %v2844, %v2855
        %v2886 = vmul.f32 %v2848, %v2854
        %v2887 = vmul.f32 %v2848, %v2855
        %v2888 = vadd.f32 %v2754, %v2856
        %v2889 = vadd.f32 %v2755, %v2857
        %v2890 = vadd.f32 %v2756, %v2858
        %v2891 = vadd.f32 %v2757, %v2859
        %v2892 = vadd.f32 %v2758, %v2860
        %v2893 = vadd.f32 %v2759, %v2861
        %v2894 = vadd.f32 %v2760, %v2862
        %v2895 = vadd.f32 %v2761, %v2863
        %v2896 = vadd.f32 %v2762, %v2864
        %v2897 = vadd.f32 %v2763, %v2865
        %v2898 = vadd.f32 %v2764, %v2866
        %v2899 = vadd.f32 %v2765, %v2867
        %v2900 = vadd.f32 %v2766, %v2868
        %v2901 = vadd.f32 %v2767, %v2869
        %v2902 = vadd.f32 %v2768, %v2870
        %v2903 = vadd.f32 %v2769, %v2871
        %v2904 = vadd.f32 %v2770, %v2872
        %v2905 = vadd.f32 %v2771, %v2873
        %v2906 = vadd.f32 %v2772, %v2874
        %v2907 = vadd.f32 %v2773, %v2875
        %v2908 = vadd.f32 %v2774, %v2876
        %v2909 = vadd.f32 %v2775, %v2877
        %v2910 = vadd.f32 %v2776, %v2878
        %v2911 = vadd.f32 %v2777, %v2879
        %v2912 = vadd.f32 %v2778, %v2880
        %v2913 = vadd.f32 %v2779, %v2881
        %v2914 = vadd.f32 %v2780, %v2882
        %v2915 = vadd.f32 %v2781, %v2883
        %v2916 = vadd.f32 %v2782, %v2884
        %v2917 = vadd.f32 %v2783, %v2885
        %v2918 = vadd.f32 %v2784, %v2886
        %v2919 = vadd.f32 %v2785, %v2887
        %2920 = vset.pattern.permute.xlu0 3
        %2921 = vperm.xlu0 %2920, %v2517
        %v2922 = vpop.permute.xlu0 %2921
        %2924 = vset.pattern.permute.xlu0 3
        %2925 = vperm.xlu0 %2924, %v2518
        %v2926 = vpop.permute.xlu0 %2925
        %2928 = vset.pattern.permute.xlu0 3
        %2929 = vperm.xlu0 %2928, %v2519
        %v2930 = vpop.permute.xlu0 %2929
        %2932 = vset.pattern.permute.xlu0 3
        %2933 = vperm.xlu0 %2932, %v2520
        %v2934 = vpop.permute.xlu0 %2933
        %2936 = vset.pattern.permute.xlu0 3
        %2937 = vperm.xlu0 %2936, %v2521
        %v2938 = vpop.permute.xlu0 %2937
        %2940 = vset.pattern.permute.xlu0 3
        %2941 = vperm.xlu0 %2940, %v2522
        %v2942 = vpop.permute.xlu0 %2941
        %2944 = vset.pattern.permute.xlu0 3
        %2945 = vperm.xlu0 %2944, %v2523
        %v2946 = vpop.permute.xlu0 %2945
        %2948 = vset.pattern.permute.xlu0 3
        %2949 = vperm.xlu0 %2948, %v2524
        %v2950 = vpop.permute.xlu0 %2949
        %2952 = vset.pattern.permute.xlu0 3
        %2953 = vperm.xlu0 %2952, %v2525
        %v2954 = vpop.permute.xlu0 %2953
        %2956 = vset.pattern.permute.xlu0 3
        %2957 = vperm.xlu0 %2956, %v2526
        %v2958 = vpop.permute.xlu0 %2957
        %2960 = vset.pattern.permute.xlu0 3
        %2961 = vperm.xlu0 %2960, %v2527
        %v2962 = vpop.permute.xlu0 %2961
        %2964 = vset.pattern.permute.xlu0 3
        %2965 = vperm.xlu0 %2964, %v2528
        %v2966 = vpop.permute.xlu0 %2965
        %2968 = vset.pattern.permute.xlu0 3
        %2969 = vperm.xlu0 %2968, %v2529
        %v2970 = vpop.permute.xlu0 %2969
        %2972 = vset.pattern.permute.xlu0 3
        %2973 = vperm.xlu0 %2972, %v2530
        %v2974 = vpop.permute.xlu0 %2973
        %2976 = vset.pattern.permute.xlu0 3
        %2977 = vperm.xlu0 %2976, %v2531
        %v2978 = vpop.permute.xlu0 %2977
        %2980 = vset.pattern.permute.xlu0 3
        %2981 = vperm.xlu0 %2980, %v2532
        %v2982 = vpop.permute.xlu0 %2981
        %v2984 = vperm.slane %v2500, 3
        %v2985 = vperm.slane %v2500, 7
        %v2988 = vperm.slane %v2984, 3
        %v2989 = vperm.slane %v2985, 3
        %v2990 = vmul.f32 %v2922, %v2988
        %v2991 = vmul.f32 %v2922, %v2989
        %v2992 = vmul.f32 %v2926, %v2988
        %v2993 = vmul.f32 %v2926, %v2989
        %v2994 = vmul.f32 %v2930, %v2988
        %v2995 = vmul.f32 %v2930, %v2989
        %v2996 = vmul.f32 %v2934, %v2988
        %v2997 = vmul.f32 %v2934, %v2989
        %v2998 = vmul.f32 %v2938, %v2988
        %v2999 = vmul.f32 %v2938, %v2989
        %v3000 = vmul.f32 %v2942, %v2988
        %v3001 = vmul.f32 %v2942, %v2989
        %v3002 = vmul.f32 %v2946, %v2988
        %v3003 = vmul.f32 %v2946, %v2989
        %v3004 = vmul.f32 %v2950, %v2988
        %v3005 = vmul.f32 %v2950, %v2989
        %v3006 = vmul.f32 %v2954, %v2988
        %v3007 = vmul.f32 %v2954, %v2989
        %v3008 = vmul.f32 %v2958, %v2988
        %v3009 = vmul.f32 %v2958, %v2989
        %v3010 = vmul.f32 %v2962, %v2988
        %v3011 = vmul.f32 %v2962, %v2989
        %v3012 = vmul.f32 %v2966, %v2988
        %v3013 = vmul.f32 %v2966, %v2989
        %v3014 = vmul.f32 %v2970, %v2988
        %v3015 = vmul.f32 %v2970, %v2989
        %v3016 = vmul.f32 %v2974, %v2988
        %v3017 = vmul.f32 %v2974, %v2989
        %v3018 = vmul.f32 %v2978, %v2988
        %v3019 = vmul.f32 %v2978, %v2989
        %v3020 = vmul.f32 %v2982, %v2988
        %v3021 = vmul.f32 %v2982, %v2989
        %v3022 = vadd.f32 %v2888, %v2990
        %v3023 = vadd.f32 %v2889, %v2991
        %v3024 = vadd.f32 %v2890, %v2992
        %v3025 = vadd.f32 %v2891, %v2993
        %v3026 = vadd.f32 %v2892, %v2994
        %v3027 = vadd.f32 %v2893, %v2995
        %v3028 = vadd.f32 %v2894, %v2996
        %v3029 = vadd.f32 %v2895, %v2997
        %v3030 = vadd.f32 %v2896, %v2998
        %v3031 = vadd.f32 %v2897, %v2999
        %v3032 = vadd.f32 %v2898, %v3000
        %v3033 = vadd.f32 %v2899, %v3001
        %v3034 = vadd.f32 %v2900, %v3002
        %v3035 = vadd.f32 %v2901, %v3003
        %v3036 = vadd.f32 %v2902, %v3004
        %v3037 = vadd.f32 %v2903, %v3005
        %v3038 = vadd.f32 %v2904, %v3006
        %v3039 = vadd.f32 %v2905, %v3007
        %v3040 = vadd.f32 %v2906, %v3008
        %v3041 = vadd.f32 %v2907, %v3009
        %v3042 = vadd.f32 %v2908, %v3010
        %v3043 = vadd.f32 %v2909, %v3011
        %v3044 = vadd.f32 %v2910, %v3012
        %v3045 = vadd.f32 %v2911, %v3013
        %v3046 = vadd.f32 %v2912, %v3014
        %v3047 = vadd.f32 %v2913, %v3015
        %v3048 = vadd.f32 %v2914, %v3016
        %v3049 = vadd.f32 %v2915, %v3017
        %v3050 = vadd.f32 %v2916, %v3018
        %v3051 = vadd.f32 %v2917, %v3019
        %v3052 = vadd.f32 %v2918, %v3020
        %v3053 = vadd.f32 %v2919, %v3021
        %v3054 = vmax.f32 %v3022, %v3023
        %3055 = vmax.xlane.f32.xlu0 %v3054
        %v3056 = vpop.xlane.xlu0 %3055
        %v3057 = vmax.f32 %v3024, %v3025
        %3058 = vmax.xlane.f32.xlu0 %v3057
        %v3059 = vpop.xlane.xlu0 %3058
        %v3060 = vmax.f32 %v3026, %v3027
        %3061 = vmax.xlane.f32.xlu0 %v3060
        %v3062 = vpop.xlane.xlu0 %3061
        %v3063 = vmax.f32 %v3028, %v3029
        %3064 = vmax.xlane.f32.xlu0 %v3063
        %v3065 = vpop.xlane.xlu0 %3064
        %v3066 = vmax.f32 %v3030, %v3031
        %3067 = vmax.xlane.f32.xlu0 %v3066
        %v3068 = vpop.xlane.xlu0 %3067
        %v3069 = vmax.f32 %v3032, %v3033
        %3070 = vmax.xlane.f32.xlu0 %v3069
        %v3071 = vpop.xlane.xlu0 %3070
        %v3072 = vmax.f32 %v3034, %v3035
        %3073 = vmax.xlane.f32.xlu0 %v3072
        %v3074 = vpop.xlane.xlu0 %3073
        %v3075 = vmax.f32 %v3036, %v3037
        %3076 = vmax.xlane.f32.xlu0 %v3075
        %v3077 = vpop.xlane.xlu0 %3076
        %v3078 = vmax.f32 %v3038, %v3039
        %3079 = vmax.xlane.f32.xlu0 %v3078
        %v3080 = vpop.xlane.xlu0 %3079
        %v3081 = vmax.f32 %v3040, %v3041
        %3082 = vmax.xlane.f32.xlu0 %v3081
        %v3083 = vpop.xlane.xlu0 %3082
        %v3084 = vmax.f32 %v3042, %v3043
        %3085 = vmax.xlane.f32.xlu0 %v3084
        %v3086 = vpop.xlane.xlu0 %3085
        %v3087 = vmax.f32 %v3044, %v3045
        %3088 = vmax.xlane.f32.xlu0 %v3087
        %v3089 = vpop.xlane.xlu0 %3088
        %v3090 = vmax.f32 %v3046, %v3047
        %3091 = vmax.xlane.f32.xlu0 %v3090
        %v3092 = vpop.xlane.xlu0 %3091
        %v3093 = vmax.f32 %v3048, %v3049
        %3094 = vmax.xlane.f32.xlu0 %v3093
        %v3095 = vpop.xlane.xlu0 %3094
        %v3096 = vmax.f32 %v3050, %v3051
        %3097 = vmax.xlane.f32.xlu0 %v3096
        %v3098 = vpop.xlane.xlu0 %3097
        %v3099 = vmax.f32 %v3052, %v3053
        %3100 = vmax.xlane.f32.xlu0 %v3099
        %v3101 = vpop.xlane.xlu0 %3100
        %v3102 = vsub.f32 %v3022, %v3056
        %v3103 = vsub.f32 %v3023, %v3056
        %v3104 = vsub.f32 %v3024, %v3059
        %v3105 = vsub.f32 %v3025, %v3059
        %v3106 = vsub.f32 %v3026, %v3062
        %v3107 = vsub.f32 %v3027, %v3062
        %v3108 = vsub.f32 %v3028, %v3065
        %v3109 = vsub.f32 %v3029, %v3065
        %v3110 = vsub.f32 %v3030, %v3068
        %v3111 = vsub.f32 %v3031, %v3068
        %v3112 = vsub.f32 %v3032, %v3071
        %v3113 = vsub.f32 %v3033, %v3071
        %v3114 = vsub.f32 %v3034, %v3074
        %v3115 = vsub.f32 %v3035, %v3074
        %v3116 = vsub.f32 %v3036, %v3077
        %v3117 = vsub.f32 %v3037, %v3077
        %v3118 = vsub.f32 %v3038, %v3080
        %v3119 = vsub.f32 %v3039, %v3080
        %v3120 = vsub.f32 %v3040, %v3083
        %v3121 = vsub.f32 %v3041, %v3083
        %v3122 = vsub.f32 %v3042, %v3086
        %v3123 = vsub.f32 %v3043, %v3086
        %v3124 = vsub.f32 %v3044, %v3089
        %v3125 = vsub.f32 %v3045, %v3089
        %v3126 = vsub.f32 %v3046, %v3092
        %v3127 = vsub.f32 %v3047, %v3092
        %v3128 = vsub.f32 %v3048, %v3095
        %v3129 = vsub.f32 %v3049, %v3095
        %v3130 = vsub.f32 %v3050, %v3098
        %v3131 = vsub.f32 %v3051, %v3098
        %v3132 = vsub.f32 %v3052, %v3101
        %v3133 = vsub.f32 %v3053, %v3101
        %v3134 = vmul.f32 %v3102, 1.442695
        %v3135 = vpow.pop %v3134
        %v3136 = vmul.f32 %v3103, 1.442695
        %v3137 = vpow.pop %v3136
        %v3138 = vmul.f32 %v3104, 1.442695
        %v3139 = vpow.pop %v3138
        %v3140 = vmul.f32 %v3105, 1.442695
        %v3141 = vpow.pop %v3140
        %v3142 = vmul.f32 %v3106, 1.442695
        %v3143 = vpow.pop %v3142
        %v3144 = vmul.f32 %v3107, 1.442695
        %v3145 = vpow.pop %v3144
        %v3146 = vmul.f32 %v3108, 1.442695
        %v3147 = vpow.pop %v3146
        %v3148 = vmul.f32 %v3109, 1.442695
        %v3149 = vpow.pop %v3148
        %v3150 = vmul.f32 %v3110, 1.442695
        %v3151 = vpow.pop %v3150
        %v3152 = vmul.f32 %v3111, 1.442695
        %v3153 = vpow.pop %v3152
        %v3154 = vmul.f32 %v3112, 1.442695
        %v3155 = vpow.pop %v3154
        %v3156 = vmul.f32 %v3113, 1.442695
        %v3157 = vpow.pop %v3156
        %v3158 = vmul.f32 %v3114, 1.442695
        %v3159 = vpow.pop %v3158
        %v3160 = vmul.f32 %v3115, 1.442695
        %v3161 = vpow.pop %v3160
        %v3162 = vmul.f32 %v3116, 1.442695
        %v3163 = vpow.pop %v3162
        %v3164 = vmul.f32 %v3117, 1.442695
        %v3165 = vpow.pop %v3164
        %v3166 = vmul.f32 %v3118, 1.442695
        %v3167 = vpow.pop %v3166
        %v3168 = vmul.f32 %v3119, 1.442695
        %v3169 = vpow.pop %v3168
        %v3170 = vmul.f32 %v3120, 1.442695
        %v3171 = vpow.pop %v3170
        %v3172 = vmul.f32 %v3121, 1.442695
        %v3173 = vpow.pop %v3172
        %v3174 = vmul.f32 %v3122, 1.442695
        %v3175 = vpow.pop %v3174
        %v3176 = vmul.f32 %v3123, 1.442695
        %v3177 = vpow.pop %v3176
        %v3178 = vmul.f32 %v3124, 1.442695
        %v3179 = vpow.pop %v3178
        %v3180 = vmul.f32 %v3125, 1.442695
        %v3181 = vpow.pop %v3180
        %v3182 = vmul.f32 %v3126, 1.442695
        %v3183 = vpow.pop %v3182
        %v3184 = vmul.f32 %v3127, 1.442695
        %v3185 = vpow.pop %v3184
        %v3186 = vmul.f32 %v3128, 1.442695
        %v3187 = vpow.pop %v3186
        %v3188 = vmul.f32 %v3129, 1.442695
        %v3189 = vpow.pop %v3188
        %v3190 = vmul.f32 %v3130, 1.442695
        %v3191 = vpow.pop %v3190
        %v3192 = vmul.f32 %v3131, 1.442695
        %v3193 = vpow.pop %v3192
        %v3194 = vmul.f32 %v3132, 1.442695
        %v3195 = vpow.pop %v3194
        %v3196 = vmul.f32 %v3133, 1.442695
        %v3197 = vpow.pop %v3196
        %v3198 = vadd.f32 %v3135, %v3137
        %3199 = vadd.xlane.f32.xlu0 %v3198
        %v3200 = vpop.xlane.xlu0 %3199
        %v3201 = vadd.f32 %v3139, %v3141
        %3202 = vadd.xlane.f32.xlu0 %v3201
        %v3203 = vpop.xlane.xlu0 %3202
        %v3204 = vadd.f32 %v3143, %v3145
        %3205 = vadd.xlane.f32.xlu0 %v3204
        %v3206 = vpop.xlane.xlu0 %3205
        %v3207 = vadd.f32 %v3147, %v3149
        %3208 = vadd.xlane.f32.xlu0 %v3207
        %v3209 = vpop.xlane.xlu0 %3208
        %v3210 = vadd.f32 %v3151, %v3153
        %3211 = vadd.xlane.f32.xlu0 %v3210
        %v3212 = vpop.xlane.xlu0 %3211
        %v3213 = vadd.f32 %v3155, %v3157
        %3214 = vadd.xlane.f32.xlu0 %v3213
        %v3215 = vpop.xlane.xlu0 %3214
        %v3216 = vadd.f32 %v3159, %v3161
        %3217 = vadd.xlane.f32.xlu0 %v3216
        %v3218 = vpop.xlane.xlu0 %3217
        %v3219 = vadd.f32 %v3163, %v3165
        %3220 = vadd.xlane.f32.xlu0 %v3219
        %v3221 = vpop.xlane.xlu0 %3220
        %v3222 = vadd.f32 %v3167, %v3169
        %3223 = vadd.xlane.f32.xlu0 %v3222
        %v3224 = vpop.xlane.xlu0 %3223
        %v3225 = vadd.f32 %v3171, %v3173
        %3226 = vadd.xlane.f32.xlu0 %v3225
        %v3227 = vpop.xlane.xlu0 %3226
        %v3228 = vadd.f32 %v3175, %v3177
        %3229 = vadd.xlane.f32.xlu0 %v3228
        %v3230 = vpop.xlane.xlu0 %3229
        %v3231 = vadd.f32 %v3179, %v3181
        %3232 = vadd.xlane.f32.xlu0 %v3231
        %v3233 = vpop.xlane.xlu0 %3232
        %v3234 = vadd.f32 %v3183, %v3185
        %3235 = vadd.xlane.f32.xlu0 %v3234
        %v3236 = vpop.xlane.xlu0 %3235
        %v3237 = vadd.f32 %v3187, %v3189
        %3238 = vadd.xlane.f32.xlu0 %v3237
        %v3239 = vpop.xlane.xlu0 %3238
        %v3240 = vadd.f32 %v3191, %v3193
        %3241 = vadd.xlane.f32.xlu0 %v3240
        %v3242 = vpop.xlane.xlu0 %3241
        %v3243 = vadd.f32 %v3195, %v3197
        %3244 = vadd.xlane.f32.xlu0 %v3243
        %v3245 = vpop.xlane.xlu0 %3244
        %v3246 = vrcp.pop %v3200
        %v3247 = vrcp.pop %v3203
        %v3248 = vrcp.pop %v3206
        %v3249 = vrcp.pop %v3209
        %v3250 = vrcp.pop %v3212
        %v3251 = vrcp.pop %v3215
        %v3252 = vrcp.pop %v3218
        %v3253 = vrcp.pop %v3221
        %v3254 = vrcp.pop %v3224
        %v3255 = vrcp.pop %v3227
        %v3256 = vrcp.pop %v3230
        %v3257 = vrcp.pop %v3233
        %v3258 = vrcp.pop %v3236
        %v3259 = vrcp.pop %v3239
        %v3260 = vrcp.pop %v3242
        %v3261 = vrcp.pop %v3245
        %v3262 = vpack.c.bf16 %v3137, %v3135
        %v3263 = vpack.c.bf16 %v3141, %v3139
        %v3264 = vpack.c.bf16 %v3145, %v3143
        %v3265 = vpack.c.bf16 %v3149, %v3147
        %v3266 = vpack.c.bf16 %v3153, %v3151
        %v3267 = vpack.c.bf16 %v3157, %v3155
        %v3268 = vpack.c.bf16 %v3161, %v3159
        %v3269 = vpack.c.bf16 %v3165, %v3163
        %v3270 = vpack.c.bf16 %v3169, %v3167
        %v3271 = vpack.c.bf16 %v3173, %v3171
        %v3272 = vpack.c.bf16 %v3177, %v3175
        %v3273 = vpack.c.bf16 %v3181, %v3179
        %v3274 = vpack.c.bf16 %v3185, %v3183
        %v3275 = vpack.c.bf16 %v3189, %v3187
        %v3276 = vpack.c.bf16 %v3193, %v3191
        %v3277 = vpack.c.bf16 %v3197, %v3195
        %3278 = vst [vmem:[#allocation3 + $0x80] sm:$0xff] %v3262
        %3279 = vst [vmem:[#allocation3 + $0x88] sm:$0xff] %v3263
        %3280 = vst [vmem:[#allocation3 + $0x90] sm:$0xff] %v3264
        %3281 = vst [vmem:[#allocation3 + $0x98] sm:$0xff] %v3265
        %3282 = vst [vmem:[#allocation3 + $0xa0] sm:$0xff] %v3266
        %3283 = vst [vmem:[#allocation3 + $0xa8] sm:$0xff] %v3267
        %3284 = vst [vmem:[#allocation3 + $0xb0] sm:$0xff] %v3268
        %3285 = vst [vmem:[#allocation3 + $0xb8] sm:$0xff] %v3269
        %3286 = vst [vmem:[#allocation3 + $0xc0] sm:$0xff] %v3270
        %3287 = vst [vmem:[#allocation3 + $0xc8] sm:$0xff] %v3271
        %3288 = vst [vmem:[#allocation3 + $0xd0] sm:$0xff] %v3272
        %3289 = vst [vmem:[#allocation3 + $0xd8] sm:$0xff] %v3273
        %3290 = vst [vmem:[#allocation3 + $0xe0] sm:$0xff] %v3274
        %3291 = vst [vmem:[#allocation3 + $0xe8] sm:$0xff] %v3275
        %3292 = vst [vmem:[#allocation3 + $0xf0] sm:$0xff] %v3276
        %3293 = vst [vmem:[#allocation3 + $0xf8] sm:$0xff] %v3277
        %v3294 = vld [vmem:[%s1] sm:$0xf]
        %v3295 = vld [vmem:[%s1 + $0x4] sm:$0xf]
        %v3296 = vld [vmem:[%s1 + $0x8] sm:$0xf]
        %v3297 = vld [vmem:[%s1 + $0xc] sm:$0xf]
        %v3298 = vld [vmem:[%s1 + $0x10] sm:$0xf]
        %v3299 = vld [vmem:[%s1 + $0x14] sm:$0xf]
        %v3300 = vld [vmem:[%s1 + $0x18] sm:$0xf]
        %v3301 = vld [vmem:[%s1 + $0x1c] sm:$0xf]
        %v3302 = vld [vmem:[%s1 + $0x20] sm:$0xf]
        %v3303 = vld [vmem:[%s1 + $0x24] sm:$0xf]
        %v3304 = vld [vmem:[%s1 + $0x28] sm:$0xf]
        %v3305 = vld [vmem:[%s1 + $0x2c] sm:$0xf]
        %v3306 = vld [vmem:[%s1 + $0x30] sm:$0xf]
        %v3307 = vld [vmem:[%s1 + $0x34] sm:$0xf]
        %v3308 = vld [vmem:[%s1 + $0x38] sm:$0xf]
        %v3309 = vld [vmem:[%s1 + $0x3c] sm:$0xf]
        %v3310 = vunpack.c.l.bf16 %v3294
        %v3311 = vunpack.c.l.bf16 %v3295
        %v3312 = vunpack.c.l.bf16 %v3296
        %v3313 = vunpack.c.l.bf16 %v3297
        %v3314 = vunpack.c.l.bf16 %v3298
        %v3315 = vunpack.c.l.bf16 %v3299
        %v3316 = vunpack.c.l.bf16 %v3300
        %v3317 = vunpack.c.l.bf16 %v3301
        %v3318 = vunpack.c.l.bf16 %v3302
        %v3319 = vunpack.c.l.bf16 %v3303
        %v3320 = vunpack.c.l.bf16 %v3304
        %v3321 = vunpack.c.l.bf16 %v3305
        %v3322 = vunpack.c.l.bf16 %v3306
        %v3323 = vunpack.c.l.bf16 %v3307
        %v3324 = vunpack.c.l.bf16 %v3308
        %v3325 = vunpack.c.l.bf16 %v3309
        %3327 = vset.pattern.permute.xlu0 0
        %3328 = vperm.xlu0 %3327, %v3310
        %v3329 = vpop.permute.xlu0 %3328
        %3332 = vset.pattern.permute.xlu0 0
        %3333 = vperm.xlu0 %3332, %v3311
        %v3334 = vpop.permute.xlu0 %3333
        %3337 = vset.pattern.permute.xlu0 0
        %3338 = vperm.xlu0 %3337, %v3312
        %v3339 = vpop.permute.xlu0 %3338
        %3342 = vset.pattern.permute.xlu0 0
        %3343 = vperm.xlu0 %3342, %v3313
        %v3344 = vpop.permute.xlu0 %3343
        %3347 = vset.pattern.permute.xlu0 0
        %3348 = vperm.xlu0 %3347, %v3314
        %v3349 = vpop.permute.xlu0 %3348
        %3352 = vset.pattern.permute.xlu0 0
        %3353 = vperm.xlu0 %3352, %v3315
        %v3354 = vpop.permute.xlu0 %3353
        %3357 = vset.pattern.permute.xlu0 0
        %3358 = vperm.xlu0 %3357, %v3316
        %v3359 = vpop.permute.xlu0 %3358
        %3362 = vset.pattern.permute.xlu0 0
        %3363 = vperm.xlu0 %3362, %v3317
        %v3364 = vpop.permute.xlu0 %3363
        %3367 = vset.pattern.permute.xlu0 0
        %3368 = vperm.xlu0 %3367, %v3318
        %v3369 = vpop.permute.xlu0 %3368
        %3372 = vset.pattern.permute.xlu0 0
        %3373 = vperm.xlu0 %3372, %v3319
        %v3374 = vpop.permute.xlu0 %3373
        %3377 = vset.pattern.permute.xlu0 0
        %3378 = vperm.xlu0 %3377, %v3320
        %v3379 = vpop.permute.xlu0 %3378
        %3382 = vset.pattern.permute.xlu0 0
        %3383 = vperm.xlu0 %3382, %v3321
        %v3384 = vpop.permute.xlu0 %3383
        %3387 = vset.pattern.permute.xlu0 0
        %3388 = vperm.xlu0 %3387, %v3322
        %v3389 = vpop.permute.xlu0 %3388
        %3392 = vset.pattern.permute.xlu0 0
        %3393 = vperm.xlu0 %3392, %v3323
        %v3394 = vpop.permute.xlu0 %3393
        %3397 = vset.pattern.permute.xlu0 0
        %3398 = vperm.xlu0 %3397, %v3324
        %v3399 = vpop.permute.xlu0 %3398
        %3402 = vset.pattern.permute.xlu0 0
        %3403 = vperm.xlu0 %3402, %v3325
        %v3404 = vpop.permute.xlu0 %3403
        %v3406 = vmul.f32 %v3329, %v2618
        %v3407 = vmul.f32 %v3329, %v2619
        %v3408 = vmul.f32 %v3334, %v2618
        %v3409 = vmul.f32 %v3334, %v2619
        %v3410 = vmul.f32 %v3339, %v2618
        %v3411 = vmul.f32 %v3339, %v2619
        %v3412 = vmul.f32 %v3344, %v2618
        %v3413 = vmul.f32 %v3344, %v2619
        %v3414 = vmul.f32 %v3349, %v2618
        %v3415 = vmul.f32 %v3349, %v2619
        %v3416 = vmul.f32 %v3354, %v2618
        %v3417 = vmul.f32 %v3354, %v2619
        %v3418 = vmul.f32 %v3359, %v2618
        %v3419 = vmul.f32 %v3359, %v2619
        %v3420 = vmul.f32 %v3364, %v2618
        %v3421 = vmul.f32 %v3364, %v2619
        %v3422 = vmul.f32 %v3369, %v2618
        %v3423 = vmul.f32 %v3369, %v2619
        %v3424 = vmul.f32 %v3374, %v2618
        %v3425 = vmul.f32 %v3374, %v2619
        %v3426 = vmul.f32 %v3379, %v2618
        %v3427 = vmul.f32 %v3379, %v2619
        %v3428 = vmul.f32 %v3384, %v2618
        %v3429 = vmul.f32 %v3384, %v2619
        %v3430 = vmul.f32 %v3389, %v2618
        %v3431 = vmul.f32 %v3389, %v2619
        %v3432 = vmul.f32 %v3394, %v2618
        %v3433 = vmul.f32 %v3394, %v2619
        %v3434 = vmul.f32 %v3399, %v2618
        %v3435 = vmul.f32 %v3399, %v2619
        %v3436 = vmul.f32 %v3404, %v2618
        %v3437 = vmul.f32 %v3404, %v2619
        %3438 = vset.pattern.permute.xlu0 1
        %3439 = vperm.xlu0 %3438, %v3310
        %v3440 = vpop.permute.xlu0 %3439
        %3442 = vset.pattern.permute.xlu0 1
        %3443 = vperm.xlu0 %3442, %v3311
        %v3444 = vpop.permute.xlu0 %3443
        %3446 = vset.pattern.permute.xlu0 1
        %3447 = vperm.xlu0 %3446, %v3312
        %v3448 = vpop.permute.xlu0 %3447
        %3450 = vset.pattern.permute.xlu0 1
        %3451 = vperm.xlu0 %3450, %v3313
        %v3452 = vpop.permute.xlu0 %3451
        %3454 = vset.pattern.permute.xlu0 1
        %3455 = vperm.xlu0 %3454, %v3314
        %v3456 = vpop.permute.xlu0 %3455
        %3458 = vset.pattern.permute.xlu0 1
        %3459 = vperm.xlu0 %3458, %v3315
        %v3460 = vpop.permute.xlu0 %3459
        %3462 = vset.pattern.permute.xlu0 1
        %3463 = vperm.xlu0 %3462, %v3316
        %v3464 = vpop.permute.xlu0 %3463
        %3466 = vset.pattern.permute.xlu0 1
        %3467 = vperm.xlu0 %3466, %v3317
        %v3468 = vpop.permute.xlu0 %3467
        %3470 = vset.pattern.permute.xlu0 1
        %3471 = vperm.xlu0 %3470, %v3318
        %v3472 = vpop.permute.xlu0 %3471
        %3474 = vset.pattern.permute.xlu0 1
        %3475 = vperm.xlu0 %3474, %v3319
        %v3476 = vpop.permute.xlu0 %3475
        %3478 = vset.pattern.permute.xlu0 1
        %3479 = vperm.xlu0 %3478, %v3320
        %v3480 = vpop.permute.xlu0 %3479
        %3482 = vset.pattern.permute.xlu0 1
        %3483 = vperm.xlu0 %3482, %v3321
        %v3484 = vpop.permute.xlu0 %3483
        %3486 = vset.pattern.permute.xlu0 1
        %3487 = vperm.xlu0 %3486, %v3322
        %v3488 = vpop.permute.xlu0 %3487
        %3490 = vset.pattern.permute.xlu0 1
        %3491 = vperm.xlu0 %3490, %v3323
        %v3492 = vpop.permute.xlu0 %3491
        %3494 = vset.pattern.permute.xlu0 1
        %3495 = vperm.xlu0 %3494, %v3324
        %v3496 = vpop.permute.xlu0 %3495
        %3498 = vset.pattern.permute.xlu0 1
        %3499 = vperm.xlu0 %3498, %v3325
        %v3500 = vpop.permute.xlu0 %3499
        %v3502 = vmul.f32 %v3440, %v2720
        %v3503 = vmul.f32 %v3440, %v2721
        %v3504 = vmul.f32 %v3444, %v2720
        %v3505 = vmul.f32 %v3444, %v2721
        %v3506 = vmul.f32 %v3448, %v2720
        %v3507 = vmul.f32 %v3448, %v2721
        %v3508 = vmul.f32 %v3452, %v2720
        %v3509 = vmul.f32 %v3452, %v2721
        %v3510 = vmul.f32 %v3456, %v2720
        %v3511 = vmul.f32 %v3456, %v2721
        %v3512 = vmul.f32 %v3460, %v2720
        %v3513 = vmul.f32 %v3460, %v2721
        %v3514 = vmul.f32 %v3464, %v2720
        %v3515 = vmul.f32 %v3464, %v2721
        %v3516 = vmul.f32 %v3468, %v2720
        %v3517 = vmul.f32 %v3468, %v2721
        %v3518 = vmul.f32 %v3472, %v2720
        %v3519 = vmul.f32 %v3472, %v2721
        %v3520 = vmul.f32 %v3476, %v2720
        %v3521 = vmul.f32 %v3476, %v2721
        %v3522 = vmul.f32 %v3480, %v2720
        %v3523 = vmul.f32 %v3480, %v2721
        %v3524 = vmul.f32 %v3484, %v2720
        %v3525 = vmul.f32 %v3484, %v2721
        %v3526 = vmul.f32 %v3488, %v2720
        %v3527 = vmul.f32 %v3488, %v2721
        %v3528 = vmul.f32 %v3492, %v2720
        %v3529 = vmul.f32 %v3492, %v2721
        %v3530 = vmul.f32 %v3496, %v2720
        %v3531 = vmul.f32 %v3496, %v2721
        %v3532 = vmul.f32 %v3500, %v2720
        %v3533 = vmul.f32 %v3500, %v2721
        %v3534 = vadd.f32 %v3406, %v3502
        %v3535 = vadd.f32 %v3407, %v3503
        %v3536 = vadd.f32 %v3408, %v3504
        %v3537 = vadd.f32 %v3409, %v3505
        %v3538 = vadd.f32 %v3410, %v3506
        %v3539 = vadd.f32 %v3411, %v3507
        %v3540 = vadd.f32 %v3412, %v3508
        %v3541 = vadd.f32 %v3413, %v3509
        %v3542 = vadd.f32 %v3414, %v3510
        %v3543 = vadd.f32 %v3415, %v3511
        %v3544 = vadd.f32 %v3416, %v3512
        %v3545 = vadd.f32 %v3417, %v3513
        %v3546 = vadd.f32 %v3418, %v3514
        %v3547 = vadd.f32 %v3419, %v3515
        %v3548 = vadd.f32 %v3420, %v3516
        %v3549 = vadd.f32 %v3421, %v3517
        %v3550 = vadd.f32 %v3422, %v3518
        %v3551 = vadd.f32 %v3423, %v3519
        %v3552 = vadd.f32 %v3424, %v3520
        %v3553 = vadd.f32 %v3425, %v3521
        %v3554 = vadd.f32 %v3426, %v3522
        %v3555 = vadd.f32 %v3427, %v3523
        %v3556 = vadd.f32 %v3428, %v3524
        %v3557 = vadd.f32 %v3429, %v3525
        %v3558 = vadd.f32 %v3430, %v3526
        %v3559 = vadd.f32 %v3431, %v3527
        %v3560 = vadd.f32 %v3432, %v3528
        %v3561 = vadd.f32 %v3433, %v3529
        %v3562 = vadd.f32 %v3434, %v3530
        %v3563 = vadd.f32 %v3435, %v3531
        %v3564 = vadd.f32 %v3436, %v3532
        %v3565 = vadd.f32 %v3437, %v3533
        %3566 = vset.pattern.permute.xlu0 2
        %3567 = vperm.xlu0 %3566, %v3310
        %v3568 = vpop.permute.xlu0 %3567
        %3570 = vset.pattern.permute.xlu0 2
        %3571 = vperm.xlu0 %3570, %v3311
        %v3572 = vpop.permute.xlu0 %3571
        %3574 = vset.pattern.permute.xlu0 2
        %3575 = vperm.xlu0 %3574, %v3312
        %v3576 = vpop.permute.xlu0 %3575
        %3578 = vset.pattern.permute.xlu0 2
        %3579 = vperm.xlu0 %3578, %v3313
        %v3580 = vpop.permute.xlu0 %3579
        %3582 = vset.pattern.permute.xlu0 2
        %3583 = vperm.xlu0 %3582, %v3314
        %v3584 = vpop.permute.xlu0 %3583
        %3586 = vset.pattern.permute.xlu0 2
        %3587 = vperm.xlu0 %3586, %v3315
        %v3588 = vpop.permute.xlu0 %3587
        %3590 = vset.pattern.permute.xlu0 2
        %3591 = vperm.xlu0 %3590, %v3316
        %v3592 = vpop.permute.xlu0 %3591
        %3594 = vset.pattern.permute.xlu0 2
        %3595 = vperm.xlu0 %3594, %v3317
        %v3596 = vpop.permute.xlu0 %3595
        %3598 = vset.pattern.permute.xlu0 2
        %3599 = vperm.xlu0 %3598, %v3318
        %v3600 = vpop.permute.xlu0 %3599
        %3602 = vset.pattern.permute.xlu0 2
        %3603 = vperm.xlu0 %3602, %v3319
        %v3604 = vpop.permute.xlu0 %3603
        %3606 = vset.pattern.permute.xlu0 2
        %3607 = vperm.xlu0 %3606, %v3320
        %v3608 = vpop.permute.xlu0 %3607
        %3610 = vset.pattern.permute.xlu0 2
        %3611 = vperm.xlu0 %3610, %v3321
        %v3612 = vpop.permute.xlu0 %3611
        %3614 = vset.pattern.permute.xlu0 2
        %3615 = vperm.xlu0 %3614, %v3322
        %v3616 = vpop.permute.xlu0 %3615
        %3618 = vset.pattern.permute.xlu0 2
        %3619 = vperm.xlu0 %3618, %v3323
        %v3620 = vpop.permute.xlu0 %3619
        %3622 = vset.pattern.permute.xlu0 2
        %3623 = vperm.xlu0 %3622, %v3324
        %v3624 = vpop.permute.xlu0 %3623
        %3626 = vset.pattern.permute.xlu0 2
        %3627 = vperm.xlu0 %3626, %v3325
        %v3628 = vpop.permute.xlu0 %3627
        %v3630 = vmul.f32 %v3568, %v2854
        %v3631 = vmul.f32 %v3568, %v2855
        %v3632 = vmul.f32 %v3572, %v2854
        %v3633 = vmul.f32 %v3572, %v2855
        %v3634 = vmul.f32 %v3576, %v2854
        %v3635 = vmul.f32 %v3576, %v2855
        %v3636 = vmul.f32 %v3580, %v2854
        %v3637 = vmul.f32 %v3580, %v2855
        %v3638 = vmul.f32 %v3584, %v2854
        %v3639 = vmul.f32 %v3584, %v2855
        %v3640 = vmul.f32 %v3588, %v2854
        %v3641 = vmul.f32 %v3588, %v2855
        %v3642 = vmul.f32 %v3592, %v2854
        %v3643 = vmul.f32 %v3592, %v2855
        %v3644 = vmul.f32 %v3596, %v2854
        %v3645 = vmul.f32 %v3596, %v2855
        %v3646 = vmul.f32 %v3600, %v2854
        %v3647 = vmul.f32 %v3600, %v2855
        %v3648 = vmul.f32 %v3604, %v2854
        %v3649 = vmul.f32 %v3604, %v2855
        %v3650 = vmul.f32 %v3608, %v2854
        %v3651 = vmul.f32 %v3608, %v2855
        %v3652 = vmul.f32 %v3612, %v2854
        %v3653 = vmul.f32 %v3612, %v2855
        %v3654 = vmul.f32 %v3616, %v2854
        %v3655 = vmul.f32 %v3616, %v2855
        %v3656 = vmul.f32 %v3620, %v2854
        %v3657 = vmul.f32 %v3620, %v2855
        %v3658 = vmul.f32 %v3624, %v2854
        %v3659 = vmul.f32 %v3624, %v2855
        %v3660 = vmul.f32 %v3628, %v2854
        %v3661 = vmul.f32 %v3628, %v2855
        %v3662 = vadd.f32 %v3534, %v3630
        %v3663 = vadd.f32 %v3535, %v3631
        %v3664 = vadd.f32 %v3536, %v3632
        %v3665 = vadd.f32 %v3537, %v3633
        %v3666 = vadd.f32 %v3538, %v3634
        %v3667 = vadd.f32 %v3539, %v3635
        %v3668 = vadd.f32 %v3540, %v3636
        %v3669 = vadd.f32 %v3541, %v3637
        %v3670 = vadd.f32 %v3542, %v3638
        %v3671 = vadd.f32 %v3543, %v3639
        %v3672 = vadd.f32 %v3544, %v3640
        %v3673 = vadd.f32 %v3545, %v3641
        %v3674 = vadd.f32 %v3546, %v3642
        %v3675 = vadd.f32 %v3547, %v3643
        %v3676 = vadd.f32 %v3548, %v3644
        %v3677 = vadd.f32 %v3549, %v3645
        %v3678 = vadd.f32 %v3550, %v3646
        %v3679 = vadd.f32 %v3551, %v3647
        %v3680 = vadd.f32 %v3552, %v3648
        %v3681 = vadd.f32 %v3553, %v3649
        %v3682 = vadd.f32 %v3554, %v3650
        %v3683 = vadd.f32 %v3555, %v3651
        %v3684 = vadd.f32 %v3556, %v3652
        %v3685 = vadd.f32 %v3557, %v3653
        %v3686 = vadd.f32 %v3558, %v3654
        %v3687 = vadd.f32 %v3559, %v3655
        %v3688 = vadd.f32 %v3560, %v3656
        %v3689 = vadd.f32 %v3561, %v3657
        %v3690 = vadd.f32 %v3562, %v3658
        %v3691 = vadd.f32 %v3563, %v3659
        %v3692 = vadd.f32 %v3564, %v3660
        %v3693 = vadd.f32 %v3565, %v3661
        %3694 = vset.pattern.permute.xlu0 3
        %3695 = vperm.xlu0 %3694, %v3310
        %v3696 = vpop.permute.xlu0 %3695
        %3698 = vset.pattern.permute.xlu0 3
        %3699 = vperm.xlu0 %3698, %v3311
        %v3700 = vpop.permute.xlu0 %3699
        %3702 = vset.pattern.permute.xlu0 3
        %3703 = vperm.xlu0 %3702, %v3312
        %v3704 = vpop.permute.xlu0 %3703
        %3706 = vset.pattern.permute.xlu0 3
        %3707 = vperm.xlu0 %3706, %v3313
        %v3708 = vpop.permute.xlu0 %3707
        %3710 = vset.pattern.permute.xlu0 3
        %3711 = vperm.xlu0 %3710, %v3314
        %v3712 = vpop.permute.xlu0 %3711
        %3714 = vset.pattern.permute.xlu0 3
        %3715 = vperm.xlu0 %3714, %v3315
        %v3716 = vpop.permute.xlu0 %3715
        %3718 = vset.pattern.permute.xlu0 3
        %3719 = vperm.xlu0 %3718, %v3316
        %v3720 = vpop.permute.xlu0 %3719
        %3722 = vset.pattern.permute.xlu0 3
        %3723 = vperm.xlu0 %3722, %v3317
        %v3724 = vpop.permute.xlu0 %3723
        %3726 = vset.pattern.permute.xlu0 3
        %3727 = vperm.xlu0 %3726, %v3318
        %v3728 = vpop.permute.xlu0 %3727
        %3730 = vset.pattern.permute.xlu0 3
        %3731 = vperm.xlu0 %3730, %v3319
        %v3732 = vpop.permute.xlu0 %3731
        %3734 = vset.pattern.permute.xlu0 3
        %3735 = vperm.xlu0 %3734, %v3320
        %v3736 = vpop.permute.xlu0 %3735
        %3738 = vset.pattern.permute.xlu0 3
        %3739 = vperm.xlu0 %3738, %v3321
        %v3740 = vpop.permute.xlu0 %3739
        %3742 = vset.pattern.permute.xlu0 3
        %3743 = vperm.xlu0 %3742, %v3322
        %v3744 = vpop.permute.xlu0 %3743
        %3746 = vset.pattern.permute.xlu0 3
        %3747 = vperm.xlu0 %3746, %v3323
        %v3748 = vpop.permute.xlu0 %3747
        %3750 = vset.pattern.permute.xlu0 3
        %3751 = vperm.xlu0 %3750, %v3324
        %v3752 = vpop.permute.xlu0 %3751
        %3754 = vset.pattern.permute.xlu0 3
        %3755 = vperm.xlu0 %3754, %v3325
        %v3756 = vpop.permute.xlu0 %3755
        %v3758 = vmul.f32 %v3696, %v2988
        %v3759 = vmul.f32 %v3696, %v2989
        %v3760 = vmul.f32 %v3700, %v2988
        %v3761 = vmul.f32 %v3700, %v2989
        %v3762 = vmul.f32 %v3704, %v2988
        %v3763 = vmul.f32 %v3704, %v2989
        %v3764 = vmul.f32 %v3708, %v2988
        %v3765 = vmul.f32 %v3708, %v2989
        %v3766 = vmul.f32 %v3712, %v2988
        %v3767 = vmul.f32 %v3712, %v2989
        %v3768 = vmul.f32 %v3716, %v2988
        %v3769 = vmul.f32 %v3716, %v2989
        %v3770 = vmul.f32 %v3720, %v2988
        %v3771 = vmul.f32 %v3720, %v2989
        %v3772 = vmul.f32 %v3724, %v2988
        %v3773 = vmul.f32 %v3724, %v2989
        %v3774 = vmul.f32 %v3728, %v2988
        %v3775 = vmul.f32 %v3728, %v2989
        %v3776 = vmul.f32 %v3732, %v2988
        %v3777 = vmul.f32 %v3732, %v2989
        %v3778 = vmul.f32 %v3736, %v2988
        %v3779 = vmul.f32 %v3736, %v2989
        %v3780 = vmul.f32 %v3740, %v2988
        %v3781 = vmul.f32 %v3740, %v2989
        %v3782 = vmul.f32 %v3744, %v2988
        %v3783 = vmul.f32 %v3744, %v2989
        %v3784 = vmul.f32 %v3748, %v2988
        %v3785 = vmul.f32 %v3748, %v2989
        %v3786 = vmul.f32 %v3752, %v2988
        %v3787 = vmul.f32 %v3752, %v2989
        %v3788 = vmul.f32 %v3756, %v2988
        %v3789 = vmul.f32 %v3756, %v2989
        %v3790 = vadd.f32 %v3662, %v3758
        %v3791 = vadd.f32 %v3663, %v3759
        %v3792 = vadd.f32 %v3664, %v3760
        %v3793 = vadd.f32 %v3665, %v3761
        %v3794 = vadd.f32 %v3666, %v3762
        %v3795 = vadd.f32 %v3667, %v3763
        %v3796 = vadd.f32 %v3668, %v3764
        %v3797 = vadd.f32 %v3669, %v3765
        %v3798 = vadd.f32 %v3670, %v3766
        %v3799 = vadd.f32 %v3671, %v3767
        %v3800 = vadd.f32 %v3672, %v3768
        %v3801 = vadd.f32 %v3673, %v3769
        %v3802 = vadd.f32 %v3674, %v3770
        %v3803 = vadd.f32 %v3675, %v3771
        %v3804 = vadd.f32 %v3676, %v3772
        %v3805 = vadd.f32 %v3677, %v3773
        %v3806 = vadd.f32 %v3678, %v3774
        %v3807 = vadd.f32 %v3679, %v3775
        %v3808 = vadd.f32 %v3680, %v3776
        %v3809 = vadd.f32 %v3681, %v3777
        %v3810 = vadd.f32 %v3682, %v3778
        %v3811 = vadd.f32 %v3683, %v3779
        %v3812 = vadd.f32 %v3684, %v3780
        %v3813 = vadd.f32 %v3685, %v3781
        %v3814 = vadd.f32 %v3686, %v3782
        %v3815 = vadd.f32 %v3687, %v3783
        %v3816 = vadd.f32 %v3688, %v3784
        %v3817 = vadd.f32 %v3689, %v3785
        %v3818 = vadd.f32 %v3690, %v3786
        %v3819 = vadd.f32 %v3691, %v3787
        %v3820 = vadd.f32 %v3692, %v3788
        %v3821 = vadd.f32 %v3693, %v3789
        %v3822 = vmax.f32 %v3790, %v3792
        %v3823 = vmax.f32 %v3822, %v3794
        %v3824 = vmax.f32 %v3823, %v3796
        %v3825 = vrot.slane %v3824, 4
        %v3826 = vmax.f32 %v3824, %v3825
        %v3827 = vrot.slane %v3826, 2
        %v3828 = vmax.f32 %v3826, %v3827
        %v3829 = vrot.slane %v3828, 1
        %v3830 = vmax.f32 %v3828, %v3829
        %v3831 = vmax.f32 %v3791, %v3793
        %v3832 = vmax.f32 %v3831, %v3795
        %v3833 = vmax.f32 %v3832, %v3797
        %v3834 = vrot.slane %v3833, 4
        %v3835 = vmax.f32 %v3833, %v3834
        %v3836 = vrot.slane %v3835, 2
        %v3837 = vmax.f32 %v3835, %v3836
        %v3838 = vrot.slane %v3837, 1
        %v3839 = vmax.f32 %v3837, %v3838
        %v3840 = vmax.f32 %v3798, %v3800
        %v3841 = vmax.f32 %v3840, %v3802
        %v3842 = vmax.f32 %v3841, %v3804
        %v3843 = vrot.slane %v3842, 4
        %v3844 = vmax.f32 %v3842, %v3843
        %v3845 = vrot.slane %v3844, 2
        %v3846 = vmax.f32 %v3844, %v3845
        %v3847 = vrot.slane %v3846, 1
        %v3848 = vmax.f32 %v3846, %v3847
        %v3849 = vmax.f32 %v3799, %v3801
        %v3850 = vmax.f32 %v3849, %v3803
        %v3851 = vmax.f32 %v3850, %v3805
        %v3852 = vrot.slane %v3851, 4
        %v3853 = vmax.f32 %v3851, %v3852
        %v3854 = vrot.slane %v3853, 2
        %v3855 = vmax.f32 %v3853, %v3854
        %v3856 = vrot.slane %v3855, 1
        %v3857 = vmax.f32 %v3855, %v3856
        %v3858 = vmax.f32 %v3806, %v3808
        %v3859 = vmax.f32 %v3858, %v3810
        %v3860 = vmax.f32 %v3859, %v3812
        %v3861 = vrot.slane %v3860, 4
        %v3862 = vmax.f32 %v3860, %v3861
        %v3863 = vrot.slane %v3862, 2
        %v3864 = vmax.f32 %v3862, %v3863
        %v3865 = vrot.slane %v3864, 1
        %v3866 = vmax.f32 %v3864, %v3865
        %v3867 = vmax.f32 %v3807, %v3809
        %v3868 = vmax.f32 %v3867, %v3811
        %v3869 = vmax.f32 %v3868, %v3813
        %v3870 = vrot.slane %v3869, 4
        %v3871 = vmax.f32 %v3869, %v3870
        %v3872 = vrot.slane %v3871, 2
        %v3873 = vmax.f32 %v3871, %v3872
        %v3874 = vrot.slane %v3873, 1
        %v3875 = vmax.f32 %v3873, %v3874
        %v3876 = vmax.f32 %v3814, %v3816
        %v3877 = vmax.f32 %v3876, %v3818
        %v3878 = vmax.f32 %v3877, %v3820
        %v3879 = vrot.slane %v3878, 4
        %v3880 = vmax.f32 %v3878, %v3879
        %v3881 = vrot.slane %v3880, 2
        %v3882 = vmax.f32 %v3880, %v3881
        %v3883 = vrot.slane %v3882, 1
        %v3884 = vmax.f32 %v3882, %v3883
        %v3885 = vmax.f32 %v3815, %v3817
        %v3886 = vmax.f32 %v3885, %v3819
        %v3887 = vmax.f32 %v3886, %v3821
        %v3888 = vrot.slane %v3887, 4
        %v3889 = vmax.f32 %v3887, %v3888
        %v3890 = vrot.slane %v3889, 2
        %v3891 = vmax.f32 %v3889, %v3890
        %v3892 = vrot.slane %v3891, 1
        %v3893 = vmax.f32 %v3891, %v3892
        %v3894 = vsub.f32 %v3790, %v3830
        %v3895 = vsub.f32 %v3791, %v3839
        %v3896 = vsub.f32 %v3792, %v3830
        %v3897 = vsub.f32 %v3793, %v3839
        %v3898 = vsub.f32 %v3794, %v3830
        %v3899 = vsub.f32 %v3795, %v3839
        %v3900 = vsub.f32 %v3796, %v3830
        %v3901 = vsub.f32 %v3797, %v3839
        %v3902 = vsub.f32 %v3798, %v3848
        %v3903 = vsub.f32 %v3799, %v3857
        %v3904 = vsub.f32 %v3800, %v3848
        %v3905 = vsub.f32 %v3801, %v3857
        %v3906 = vsub.f32 %v3802, %v3848
        %v3907 = vsub.f32 %v3803, %v3857
        %v3908 = vsub.f32 %v3804, %v3848
        %v3909 = vsub.f32 %v3805, %v3857
        %v3910 = vsub.f32 %v3806, %v3866
        %v3911 = vsub.f32 %v3807, %v3875
        %v3912 = vsub.f32 %v3808, %v3866
        %v3913 = vsub.f32 %v3809, %v3875
        %v3914 = vsub.f32 %v3810, %v3866
        %v3915 = vsub.f32 %v3811, %v3875
        %v3916 = vsub.f32 %v3812, %v3866
        %v3917 = vsub.f32 %v3813, %v3875
        %v3918 = vsub.f32 %v3814, %v3884
        %v3919 = vsub.f32 %v3815, %v3893
        %v3920 = vsub.f32 %v3816, %v3884
        %v3921 = vsub.f32 %v3817, %v3893
        %v3922 = vsub.f32 %v3818, %v3884
        %v3923 = vsub.f32 %v3819, %v3893
        %v3924 = vsub.f32 %v3820, %v3884
        %v3925 = vsub.f32 %v3821, %v3893
        %v3926 = vmul.f32 %v3894, 1.442695
        %v3927 = vpow.pop %v3926
        %v3928 = vmul.f32 %v3895, 1.442695
        %v3929 = vpow.pop %v3928
        %v3930 = vmul.f32 %v3896, 1.442695
        %v3931 = vpow.pop %v3930
        %v3932 = vmul.f32 %v3897, 1.442695
        %v3933 = vpow.pop %v3932
        %v3934 = vmul.f32 %v3898, 1.442695
        %v3935 = vpow.pop %v3934
        %v3936 = vmul.f32 %v3899, 1.442695
        %v3937 = vpow.pop %v3936
        %v3938 = vmul.f32 %v3900, 1.442695
        %v3939 = vpow.pop %v3938
        %v3940 = vmul.f32 %v3901, 1.442695
        %v3941 = vpow.pop %v3940
        %v3942 = vmul.f32 %v3902, 1.442695
        %v3943 = vpow.pop %v3942
        %v3944 = vmul.f32 %v3903, 1.442695
        %v3945 = vpow.pop %v3944
        %v3946 = vmul.f32 %v3904, 1.442695
        %v3947 = vpow.pop %v3946
        %v3948 = vmul.f32 %v3905, 1.442695
        %v3949 = vpow.pop %v3948
        %v3950 = vmul.f32 %v3906, 1.442695
        %v3951 = vpow.pop %v3950
        %v3952 = vmul.f32 %v3907, 1.442695
        %v3953 = vpow.pop %v3952
        %v3954 = vmul.f32 %v3908, 1.442695
        %v3955 = vpow.pop %v3954
        %v3956 = vmul.f32 %v3909, 1.442695
        %v3957 = vpow.pop %v3956
        %v3958 = vmul.f32 %v3910, 1.442695
        %v3959 = vpow.pop %v3958
        %v3960 = vmul.f32 %v3911, 1.442695
        %v3961 = vpow.pop %v3960
        %v3962 = vmul.f32 %v3912, 1.442695
        %v3963 = vpow.pop %v3962
        %v3964 = vmul.f32 %v3913, 1.442695
        %v3965 = vpow.pop %v3964
        %v3966 = vmul.f32 %v3914, 1.442695
        %v3967 = vpow.pop %v3966
        %v3968 = vmul.f32 %v3915, 1.442695
        %v3969 = vpow.pop %v3968
        %v3970 = vmul.f32 %v3916, 1.442695
        %v3971 = vpow.pop %v3970
        %v3972 = vmul.f32 %v3917, 1.442695
        %v3973 = vpow.pop %v3972
        %v3974 = vmul.f32 %v3918, 1.442695
        %v3975 = vpow.pop %v3974
        %v3976 = vmul.f32 %v3919, 1.442695
        %v3977 = vpow.pop %v3976
        %v3978 = vmul.f32 %v3920, 1.442695
        %v3979 = vpow.pop %v3978
        %v3980 = vmul.f32 %v3921, 1.442695
        %v3981 = vpow.pop %v3980
        %v3982 = vmul.f32 %v3922, 1.442695
        %v3983 = vpow.pop %v3982
        %v3984 = vmul.f32 %v3923, 1.442695
        %v3985 = vpow.pop %v3984
        %v3986 = vmul.f32 %v3924, 1.442695
        %v3987 = vpow.pop %v3986
        %v3988 = vmul.f32 %v3925, 1.442695
        %v3989 = vpow.pop %v3988
        %v3990 = vadd.f32 %v3927, %v3931
        %v3991 = vadd.f32 %v3990, %v3935
        %v3992 = vadd.f32 %v3991, %v3939
        %v3993 = vrot.slane %v3992, 4
        %v3994 = vadd.f32 %v3992, %v3993
        %v3995 = vrot.slane %v3994, 2
        %v3996 = vadd.f32 %v3994, %v3995
        %v3997 = vrot.slane %v3996, 1
        %v3998 = vadd.f32 %v3996, %v3997
        %v3999 = vadd.f32 %v3929, %v3933
        %v4000 = vadd.f32 %v3999, %v3937
        %v4001 = vadd.f32 %v4000, %v3941
        %v4002 = vrot.slane %v4001, 4
        %v4003 = vadd.f32 %v4001, %v4002
        %v4004 = vrot.slane %v4003, 2
        %v4005 = vadd.f32 %v4003, %v4004
        %v4006 = vrot.slane %v4005, 1
        %v4007 = vadd.f32 %v4005, %v4006
        %v4008 = vadd.f32 %v3943, %v3947
        %v4009 = vadd.f32 %v4008, %v3951
        %v4010 = vadd.f32 %v4009, %v3955
        %v4011 = vrot.slane %v4010, 4
        %v4012 = vadd.f32 %v4010, %v4011
        %v4013 = vrot.slane %v4012, 2
        %v4014 = vadd.f32 %v4012, %v4013
        %v4015 = vrot.slane %v4014, 1
        %v4016 = vadd.f32 %v4014, %v4015
        %v4017 = vadd.f32 %v3945, %v3949
        %v4018 = vadd.f32 %v4017, %v3953
        %v4019 = vadd.f32 %v4018, %v3957
        %v4020 = vrot.slane %v4019, 4
        %v4021 = vadd.f32 %v4019, %v4020
        %v4022 = vrot.slane %v4021, 2
        %v4023 = vadd.f32 %v4021, %v4022
        %v4024 = vrot.slane %v4023, 1
        %v4025 = vadd.f32 %v4023, %v4024
        %v4026 = vadd.f32 %v3959, %v3963
        %v4027 = vadd.f32 %v4026, %v3967
        %v4028 = vadd.f32 %v4027, %v3971
        %v4029 = vrot.slane %v4028, 4
        %v4030 = vadd.f32 %v4028, %v4029
        %v4031 = vrot.slane %v4030, 2
        %v4032 = vadd.f32 %v4030, %v4031
        %v4033 = vrot.slane %v4032, 1
        %v4034 = vadd.f32 %v4032, %v4033
        %v4035 = vadd.f32 %v3961, %v3965
        %v4036 = vadd.f32 %v4035, %v3969
        %v4037 = vadd.f32 %v4036, %v3973
        %v4038 = vrot.slane %v4037, 4
        %v4039 = vadd.f32 %v4037, %v4038
        %v4040 = vrot.slane %v4039, 2
        %v4041 = vadd.f32 %v4039, %v4040
        %v4042 = vrot.slane %v4041, 1
        %v4043 = vadd.f32 %v4041, %v4042
        %v4044 = vadd.f32 %v3975, %v3979
        %v4045 = vadd.f32 %v4044, %v3983
        %v4046 = vadd.f32 %v4045, %v3987
        %v4047 = vrot.slane %v4046, 4
        %v4048 = vadd.f32 %v4046, %v4047
        %v4049 = vrot.slane %v4048, 2
        %v4050 = vadd.f32 %v4048, %v4049
        %v4051 = vrot.slane %v4050, 1
        %v4052 = vadd.f32 %v4050, %v4051
        %v4053 = vadd.f32 %v3977, %v3981
        %v4054 = vadd.f32 %v4053, %v3985
        %v4055 = vadd.f32 %v4054, %v3989
        %v4056 = vrot.slane %v4055, 4
        %v4057 = vadd.f32 %v4055, %v4056
        %v4058 = vrot.slane %v4057, 2
        %v4059 = vadd.f32 %v4057, %v4058
        %v4060 = vrot.slane %v4059, 1
        %v4061 = vadd.f32 %v4059, %v4060
        %v4062 = vrcp.pop %v3998
        %v4063 = vrcp.pop %v4007
        %v4064 = vrcp.pop %v4016
        %v4065 = vrcp.pop %v4025
        %v4066 = vrcp.pop %v4034
        %v4067 = vrcp.pop %v4043
        %v4068 = vrcp.pop %v4052
        %v4069 = vrcp.pop %v4061
        %v4070 = vmul.f32 %v3927, %v4062
        %v4071 = vmul.f32 %v3929, %v4063
        %v4072 = vmul.f32 %v3931, %v4062
        %v4073 = vmul.f32 %v3933, %v4063
        %v4074 = vmul.f32 %v3935, %v4062
        %v4075 = vmul.f32 %v3937, %v4063
        %v4076 = vmul.f32 %v3939, %v4062
        %v4077 = vmul.f32 %v3941, %v4063
        %v4078 = vmul.f32 %v3943, %v4064
        %v4079 = vmul.f32 %v3945, %v4065
        %v4080 = vmul.f32 %v3947, %v4064
        %v4081 = vmul.f32 %v3949, %v4065
        %v4082 = vmul.f32 %v3951, %v4064
        %v4083 = vmul.f32 %v3953, %v4065
        %v4084 = vmul.f32 %v3955, %v4064
        %v4085 = vmul.f32 %v3957, %v4065
        %v4086 = vmul.f32 %v3959, %v4066
        %v4087 = vmul.f32 %v3961, %v4067
        %v4088 = vmul.f32 %v3963, %v4066
        %v4089 = vmul.f32 %v3965, %v4067
        %v4090 = vmul.f32 %v3967, %v4066
        %v4091 = vmul.f32 %v3969, %v4067
        %v4092 = vmul.f32 %v3971, %v4066
        %v4093 = vmul.f32 %v3973, %v4067
        %v4094 = vmul.f32 %v3975, %v4068
        %v4095 = vmul.f32 %v3977, %v4069
        %v4096 = vmul.f32 %v3979, %v4068
        %v4097 = vmul.f32 %v3981, %v4069
        %v4098 = vmul.f32 %v3983, %v4068
        %v4099 = vmul.f32 %v3985, %v4069
        %v4100 = vmul.f32 %v3987, %v4068
        %v4101 = vmul.f32 %v3989, %v4069
        %v4102 = vmul.f32 %v4070, %v3246
        %v4103 = vmul.f32 %v4071, %v3246
        %v4104 = vmul.f32 %v4072, %v3247
        %v4105 = vmul.f32 %v4073, %v3247
        %v4106 = vmul.f32 %v4074, %v3248
        %v4107 = vmul.f32 %v4075, %v3248
        %v4108 = vmul.f32 %v4076, %v3249
        %v4109 = vmul.f32 %v4077, %v3249
        %v4110 = vmul.f32 %v4078, %v3250
        %v4111 = vmul.f32 %v4079, %v3250
        %v4112 = vmul.f32 %v4080, %v3251
        %v4113 = vmul.f32 %v4081, %v3251
        %v4114 = vmul.f32 %v4082, %v3252
        %v4115 = vmul.f32 %v4083, %v3252
        %v4116 = vmul.f32 %v4084, %v3253
        %v4117 = vmul.f32 %v4085, %v3253
        %v4118 = vmul.f32 %v4086, %v3254
        %v4119 = vmul.f32 %v4087, %v3254
        %v4120 = vmul.f32 %v4088, %v3255
        %v4121 = vmul.f32 %v4089, %v3255
        %v4122 = vmul.f32 %v4090, %v3256
        %v4123 = vmul.f32 %v4091, %v3256
        %v4124 = vmul.f32 %v4092, %v3257
        %v4125 = vmul.f32 %v4093, %v3257
        %v4126 = vmul.f32 %v4094, %v3258
        %v4127 = vmul.f32 %v4095, %v3258
        %v4128 = vmul.f32 %v4096, %v3259
        %v4129 = vmul.f32 %v4097, %v3259
        %v4130 = vmul.f32 %v4098, %v3260
        %v4131 = vmul.f32 %v4099, %v3260
        %v4132 = vmul.f32 %v4100, %v3261
        %v4133 = vmul.f32 %v4101, %v3261
        %v4134 = vpack.c.bf16 %v4103, %v4102
        %v4135 = vpack.c.bf16 %v4105, %v4104
        %v4136 = vpack.c.bf16 %v4107, %v4106
        %v4137 = vpack.c.bf16 %v4109, %v4108
        %v4138 = vpack.c.bf16 %v4111, %v4110
        %v4139 = vpack.c.bf16 %v4113, %v4112
        %v4140 = vpack.c.bf16 %v4115, %v4114
        %v4141 = vpack.c.bf16 %v4117, %v4116
        %v4142 = vpack.c.bf16 %v4119, %v4118
        %v4143 = vpack.c.bf16 %v4121, %v4120
        %v4144 = vpack.c.bf16 %v4123, %v4122
        %v4145 = vpack.c.bf16 %v4125, %v4124
        %v4146 = vpack.c.bf16 %v4127, %v4126
        %v4147 = vpack.c.bf16 %v4129, %v4128
        %v4148 = vpack.c.bf16 %v4131, %v4130
        %v4149 = vpack.c.bf16 %v4133, %v4132
        %4150 = vst [vmem:[#allocation2 + $0x80] sm:$0xff] %v4134
        %4151 = vst [vmem:[#allocation2 + $0x88] sm:$0xff] %v4135
        %4152 = vst [vmem:[#allocation2 + $0x90] sm:$0xff] %v4136
        %4153 = vst [vmem:[#allocation2 + $0x98] sm:$0xff] %v4137
        %4154 = vst [vmem:[#allocation2 + $0xa0] sm:$0xff] %v4138
        %4155 = vst [vmem:[#allocation2 + $0xa8] sm:$0xff] %v4139
        %4156 = vst [vmem:[#allocation2 + $0xb0] sm:$0xff] %v4140
        %4157 = vst [vmem:[#allocation2 + $0xb8] sm:$0xff] %v4141
        %4158 = vst [vmem:[#allocation2 + $0xc0] sm:$0xff] %v4142
        %4159 = vst [vmem:[#allocation2 + $0xc8] sm:$0xff] %v4143
        %4160 = vst [vmem:[#allocation2 + $0xd0] sm:$0xff] %v4144
        %4161 = vst [vmem:[#allocation2 + $0xd8] sm:$0xff] %v4145
        %4162 = vst [vmem:[#allocation2 + $0xe0] sm:$0xff] %v4146
        %4163 = vst [vmem:[#allocation2 + $0xe8] sm:$0xff] %v4147
        %4164 = vst [vmem:[#allocation2 + $0xf0] sm:$0xff] %v4148
        %4165 = vst [vmem:[#allocation2 + $0xf8] sm:$0xff] %v4149
        %v4166 = vld [vmem:[%s1 + $0x80] sm:$0xf]
        %v4167 = vld [vmem:[%s1 + $0x84] sm:$0xf]
        %v4168 = vld [vmem:[%s1 + $0x88] sm:$0xf]
        %v4169 = vld [vmem:[%s1 + $0x8c] sm:$0xf]
        %v4170 = vld [vmem:[%s1 + $0x90] sm:$0xf]
        %v4171 = vld [vmem:[%s1 + $0x94] sm:$0xf]
        %v4172 = vld [vmem:[%s1 + $0x98] sm:$0xf]
        %v4173 = vld [vmem:[%s1 + $0x9c] sm:$0xf]
        %v4174 = vld [vmem:[%s1 + $0xa0] sm:$0xf]
        %v4175 = vld [vmem:[%s1 + $0xa4] sm:$0xf]
        %v4176 = vld [vmem:[%s1 + $0xa8] sm:$0xf]
        %v4177 = vld [vmem:[%s1 + $0xac] sm:$0xf]
        %v4178 = vld [vmem:[%s1 + $0xb0] sm:$0xf]
        %v4179 = vld [vmem:[%s1 + $0xb4] sm:$0xf]
        %v4180 = vld [vmem:[%s1 + $0xb8] sm:$0xf]
        %v4181 = vld [vmem:[%s1 + $0xbc] sm:$0xf]
        %v4182 = vunpack.c.l.bf16 %v4166
        %v4183 = vunpack.c.l.bf16 %v4167
        %v4184 = vunpack.c.l.bf16 %v4168
        %v4185 = vunpack.c.l.bf16 %v4169
        %v4186 = vunpack.c.l.bf16 %v4170
        %v4187 = vunpack.c.l.bf16 %v4171
        %v4188 = vunpack.c.l.bf16 %v4172
        %v4189 = vunpack.c.l.bf16 %v4173
        %v4190 = vunpack.c.l.bf16 %v4174
        %v4191 = vunpack.c.l.bf16 %v4175
        %v4192 = vunpack.c.l.bf16 %v4176
        %v4193 = vunpack.c.l.bf16 %v4177
        %v4194 = vunpack.c.l.bf16 %v4178
        %v4195 = vunpack.c.l.bf16 %v4179
        %v4196 = vunpack.c.l.bf16 %v4180
        %v4197 = vunpack.c.l.bf16 %v4181
        %4199 = vset.pattern.permute.xlu0 0
        %4200 = vperm.xlu0 %4199, %v4182
        %v4201 = vpop.permute.xlu0 %4200
        %4204 = vset.pattern.permute.xlu0 0
        %4205 = vperm.xlu0 %4204, %v4183
        %v4206 = vpop.permute.xlu0 %4205
        %4209 = vset.pattern.permute.xlu0 0
        %4210 = vperm.xlu0 %4209, %v4184
        %v4211 = vpop.permute.xlu0 %4210
        %4214 = vset.pattern.permute.xlu0 0
        %4215 = vperm.xlu0 %4214, %v4185
        %v4216 = vpop.permute.xlu0 %4215
        %4219 = vset.pattern.permute.xlu0 0
        %4220 = vperm.xlu0 %4219, %v4186
        %v4221 = vpop.permute.xlu0 %4220
        %4224 = vset.pattern.permute.xlu0 0
        %4225 = vperm.xlu0 %4224, %v4187
        %v4226 = vpop.permute.xlu0 %4225
        %4229 = vset.pattern.permute.xlu0 0
        %4230 = vperm.xlu0 %4229, %v4188
        %v4231 = vpop.permute.xlu0 %4230
        %4234 = vset.pattern.permute.xlu0 0
        %4235 = vperm.xlu0 %4234, %v4189
        %v4236 = vpop.permute.xlu0 %4235
        %4239 = vset.pattern.permute.xlu0 0
        %4240 = vperm.xlu0 %4239, %v4190
        %v4241 = vpop.permute.xlu0 %4240
        %4244 = vset.pattern.permute.xlu0 0
        %4245 = vperm.xlu0 %4244, %v4191
        %v4246 = vpop.permute.xlu0 %4245
        %4249 = vset.pattern.permute.xlu0 0
        %4250 = vperm.xlu0 %4249, %v4192
        %v4251 = vpop.permute.xlu0 %4250
        %4254 = vset.pattern.permute.xlu0 0
        %4255 = vperm.xlu0 %4254, %v4193
        %v4256 = vpop.permute.xlu0 %4255
        %4259 = vset.pattern.permute.xlu0 0
        %4260 = vperm.xlu0 %4259, %v4194
        %v4261 = vpop.permute.xlu0 %4260
        %4264 = vset.pattern.permute.xlu0 0
        %4265 = vperm.xlu0 %4264, %v4195
        %v4266 = vpop.permute.xlu0 %4265
        %4269 = vset.pattern.permute.xlu0 0
        %4270 = vperm.xlu0 %4269, %v4196
        %v4271 = vpop.permute.xlu0 %4270
        %4274 = vset.pattern.permute.xlu0 0
        %4275 = vperm.xlu0 %4274, %v4197
        %v4276 = vpop.permute.xlu0 %4275
        %v4278 = vmul.f32 %v4201, %v2618
        %v4279 = vmul.f32 %v4201, %v2619
        %v4280 = vmul.f32 %v4206, %v2618
        %v4281 = vmul.f32 %v4206, %v2619
        %v4282 = vmul.f32 %v4211, %v2618
        %v4283 = vmul.f32 %v4211, %v2619
        %v4284 = vmul.f32 %v4216, %v2618
        %v4285 = vmul.f32 %v4216, %v2619
        %v4286 = vmul.f32 %v4221, %v2618
        %v4287 = vmul.f32 %v4221, %v2619
        %v4288 = vmul.f32 %v4226, %v2618
        %v4289 = vmul.f32 %v4226, %v2619
        %v4290 = vmul.f32 %v4231, %v2618
        %v4291 = vmul.f32 %v4231, %v2619
        %v4292 = vmul.f32 %v4236, %v2618
        %v4293 = vmul.f32 %v4236, %v2619
        %v4294 = vmul.f32 %v4241, %v2618
        %v4295 = vmul.f32 %v4241, %v2619
        %v4296 = vmul.f32 %v4246, %v2618
        %v4297 = vmul.f32 %v4246, %v2619
        %v4298 = vmul.f32 %v4251, %v2618
        %v4299 = vmul.f32 %v4251, %v2619
        %v4300 = vmul.f32 %v4256, %v2618
        %v4301 = vmul.f32 %v4256, %v2619
        %v4302 = vmul.f32 %v4261, %v2618
        %v4303 = vmul.f32 %v4261, %v2619
        %v4304 = vmul.f32 %v4266, %v2618
        %v4305 = vmul.f32 %v4266, %v2619
        %v4306 = vmul.f32 %v4271, %v2618
        %v4307 = vmul.f32 %v4271, %v2619
        %v4308 = vmul.f32 %v4276, %v2618
        %v4309 = vmul.f32 %v4276, %v2619
        %4310 = vset.pattern.permute.xlu0 1
        %4311 = vperm.xlu0 %4310, %v4182
        %v4312 = vpop.permute.xlu0 %4311
        %4314 = vset.pattern.permute.xlu0 1
        %4315 = vperm.xlu0 %4314, %v4183
        %v4316 = vpop.permute.xlu0 %4315
        %4318 = vset.pattern.permute.xlu0 1
        %4319 = vperm.xlu0 %4318, %v4184
        %v4320 = vpop.permute.xlu0 %4319
        %4322 = vset.pattern.permute.xlu0 1
        %4323 = vperm.xlu0 %4322, %v4185
        %v4324 = vpop.permute.xlu0 %4323
        %4326 = vset.pattern.permute.xlu0 1
        %4327 = vperm.xlu0 %4326, %v4186
        %v4328 = vpop.permute.xlu0 %4327
        %4330 = vset.pattern.permute.xlu0 1
        %4331 = vperm.xlu0 %4330, %v4187
        %v4332 = vpop.permute.xlu0 %4331
        %4334 = vset.pattern.permute.xlu0 1
        %4335 = vperm.xlu0 %4334, %v4188
        %v4336 = vpop.permute.xlu0 %4335
        %4338 = vset.pattern.permute.xlu0 1
        %4339 = vperm.xlu0 %4338, %v4189
        %v4340 = vpop.permute.xlu0 %4339
        %4342 = vset.pattern.permute.xlu0 1
        %4343 = vperm.xlu0 %4342, %v4190
        %v4344 = vpop.permute.xlu0 %4343
        %4346 = vset.pattern.permute.xlu0 1
        %4347 = vperm.xlu0 %4346, %v4191
        %v4348 = vpop.permute.xlu0 %4347
        %4350 = vset.pattern.permute.xlu0 1
        %4351 = vperm.xlu0 %4350, %v4192
        %v4352 = vpop.permute.xlu0 %4351
        %4354 = vset.pattern.permute.xlu0 1
        %4355 = vperm.xlu0 %4354, %v4193
        %v4356 = vpop.permute.xlu0 %4355
        %4358 = vset.pattern.permute.xlu0 1
        %4359 = vperm.xlu0 %4358, %v4194
        %v4360 = vpop.permute.xlu0 %4359
        %4362 = vset.pattern.permute.xlu0 1
        %4363 = vperm.xlu0 %4362, %v4195
        %v4364 = vpop.permute.xlu0 %4363
        %4366 = vset.pattern.permute.xlu0 1
        %4367 = vperm.xlu0 %4366, %v4196
        %v4368 = vpop.permute.xlu0 %4367
        %4370 = vset.pattern.permute.xlu0 1
        %4371 = vperm.xlu0 %4370, %v4197
        %v4372 = vpop.permute.xlu0 %4371
        %v4374 = vmul.f32 %v4312, %v2720
        %v4375 = vmul.f32 %v4312, %v2721
        %v4376 = vmul.f32 %v4316, %v2720
        %v4377 = vmul.f32 %v4316, %v2721
        %v4378 = vmul.f32 %v4320, %v2720
        %v4379 = vmul.f32 %v4320, %v2721
        %v4380 = vmul.f32 %v4324, %v2720
        %v4381 = vmul.f32 %v4324, %v2721
        %v4382 = vmul.f32 %v4328, %v2720
        %v4383 = vmul.f32 %v4328, %v2721
        %v4384 = vmul.f32 %v4332, %v2720
        %v4385 = vmul.f32 %v4332, %v2721
        %v4386 = vmul.f32 %v4336, %v2720
        %v4387 = vmul.f32 %v4336, %v2721
        %v4388 = vmul.f32 %v4340, %v2720
        %v4389 = vmul.f32 %v4340, %v2721
        %v4390 = vmul.f32 %v4344, %v2720
        %v4391 = vmul.f32 %v4344, %v2721
        %v4392 = vmul.f32 %v4348, %v2720
        %v4393 = vmul.f32 %v4348, %v2721
        %v4394 = vmul.f32 %v4352, %v2720
        %v4395 = vmul.f32 %v4352, %v2721
        %v4396 = vmul.f32 %v4356, %v2720
        %v4397 = vmul.f32 %v4356, %v2721
        %v4398 = vmul.f32 %v4360, %v2720
        %v4399 = vmul.f32 %v4360, %v2721
        %v4400 = vmul.f32 %v4364, %v2720
        %v4401 = vmul.f32 %v4364, %v2721
        %v4402 = vmul.f32 %v4368, %v2720
        %v4403 = vmul.f32 %v4368, %v2721
        %v4404 = vmul.f32 %v4372, %v2720
        %v4405 = vmul.f32 %v4372, %v2721
        %v4406 = vadd.f32 %v4278, %v4374
        %v4407 = vadd.f32 %v4279, %v4375
        %v4408 = vadd.f32 %v4280, %v4376
        %v4409 = vadd.f32 %v4281, %v4377
        %v4410 = vadd.f32 %v4282, %v4378
        %v4411 = vadd.f32 %v4283, %v4379
        %v4412 = vadd.f32 %v4284, %v4380
        %v4413 = vadd.f32 %v4285, %v4381
        %v4414 = vadd.f32 %v4286, %v4382
        %v4415 = vadd.f32 %v4287, %v4383
        %v4416 = vadd.f32 %v4288, %v4384
        %v4417 = vadd.f32 %v4289, %v4385
        %v4418 = vadd.f32 %v4290, %v4386
        %v4419 = vadd.f32 %v4291, %v4387
        %v4420 = vadd.f32 %v4292, %v4388
        %v4421 = vadd.f32 %v4293, %v4389
        %v4422 = vadd.f32 %v4294, %v4390
        %v4423 = vadd.f32 %v4295, %v4391
        %v4424 = vadd.f32 %v4296, %v4392
        %v4425 = vadd.f32 %v4297, %v4393
        %v4426 = vadd.f32 %v4298, %v4394
        %v4427 = vadd.f32 %v4299, %v4395
        %v4428 = vadd.f32 %v4300, %v4396
        %v4429 = vadd.f32 %v4301, %v4397
        %v4430 = vadd.f32 %v4302, %v4398
        %v4431 = vadd.f32 %v4303, %v4399
        %v4432 = vadd.f32 %v4304, %v4400
        %v4433 = vadd.f32 %v4305, %v4401
        %v4434 = vadd.f32 %v4306, %v4402
        %v4435 = vadd.f32 %v4307, %v4403
        %v4436 = vadd.f32 %v4308, %v4404
        %v4437 = vadd.f32 %v4309, %v4405
        %4438 = vset.pattern.permute.xlu0 2
        %4439 = vperm.xlu0 %4438, %v4182
        %v4440 = vpop.permute.xlu0 %4439
        %4442 = vset.pattern.permute.xlu0 2
        %4443 = vperm.xlu0 %4442, %v4183
        %v4444 = vpop.permute.xlu0 %4443
        %4446 = vset.pattern.permute.xlu0 2
        %4447 = vperm.xlu0 %4446, %v4184
        %v4448 = vpop.permute.xlu0 %4447
        %4450 = vset.pattern.permute.xlu0 2
        %4451 = vperm.xlu0 %4450, %v4185
        %v4452 = vpop.permute.xlu0 %4451
        %4454 = vset.pattern.permute.xlu0 2
        %4455 = vperm.xlu0 %4454, %v4186
        %v4456 = vpop.permute.xlu0 %4455
        %4458 = vset.pattern.permute.xlu0 2
        %4459 = vperm.xlu0 %4458, %v4187
        %v4460 = vpop.permute.xlu0 %4459
        %4462 = vset.pattern.permute.xlu0 2
        %4463 = vperm.xlu0 %4462, %v4188
        %v4464 = vpop.permute.xlu0 %4463
        %4466 = vset.pattern.permute.xlu0 2
        %4467 = vperm.xlu0 %4466, %v4189
        %v4468 = vpop.permute.xlu0 %4467
        %4470 = vset.pattern.permute.xlu0 2
        %4471 = vperm.xlu0 %4470, %v4190
        %v4472 = vpop.permute.xlu0 %4471
        %4474 = vset.pattern.permute.xlu0 2
        %4475 = vperm.xlu0 %4474, %v4191
        %v4476 = vpop.permute.xlu0 %4475
        %4478 = vset.pattern.permute.xlu0 2
        %4479 = vperm.xlu0 %4478, %v4192
        %v4480 = vpop.permute.xlu0 %4479
        %4482 = vset.pattern.permute.xlu0 2
        %4483 = vperm.xlu0 %4482, %v4193
        %v4484 = vpop.permute.xlu0 %4483
        %4486 = vset.pattern.permute.xlu0 2
        %4487 = vperm.xlu0 %4486, %v4194
        %v4488 = vpop.permute.xlu0 %4487
        %4490 = vset.pattern.permute.xlu0 2
        %4491 = vperm.xlu0 %4490, %v4195
        %v4492 = vpop.permute.xlu0 %4491
        %4494 = vset.pattern.permute.xlu0 2
        %4495 = vperm.xlu0 %4494, %v4196
        %v4496 = vpop.permute.xlu0 %4495
        %4498 = vset.pattern.permute.xlu0 2
        %4499 = vperm.xlu0 %4498, %v4197
        %v4500 = vpop.permute.xlu0 %4499
        %v4502 = vmul.f32 %v4440, %v2854
        %v4503 = vmul.f32 %v4440, %v2855
        %v4504 = vmul.f32 %v4444, %v2854
        %v4505 = vmul.f32 %v4444, %v2855
        %v4506 = vmul.f32 %v4448, %v2854
        %v4507 = vmul.f32 %v4448, %v2855
        %v4508 = vmul.f32 %v4452, %v2854
        %v4509 = vmul.f32 %v4452, %v2855
        %v4510 = vmul.f32 %v4456, %v2854
        %v4511 = vmul.f32 %v4456, %v2855
        %v4512 = vmul.f32 %v4460, %v2854
        %v4513 = vmul.f32 %v4460, %v2855
        %v4514 = vmul.f32 %v4464, %v2854
        %v4515 = vmul.f32 %v4464, %v2855
        %v4516 = vmul.f32 %v4468, %v2854
        %v4517 = vmul.f32 %v4468, %v2855
        %v4518 = vmul.f32 %v4472, %v2854
        %v4519 = vmul.f32 %v4472, %v2855
        %v4520 = vmul.f32 %v4476, %v2854
        %v4521 = vmul.f32 %v4476, %v2855
        %v4522 = vmul.f32 %v4480, %v2854
        %v4523 = vmul.f32 %v4480, %v2855
        %v4524 = vmul.f32 %v4484, %v2854
        %v4525 = vmul.f32 %v4484, %v2855
        %v4526 = vmul.f32 %v4488, %v2854
        %v4527 = vmul.f32 %v4488, %v2855
        %v4528 = vmul.f32 %v4492, %v2854
        %v4529 = vmul.f32 %v4492, %v2855
        %v4530 = vmul.f32 %v4496, %v2854
        %v4531 = vmul.f32 %v4496, %v2855
        %v4532 = vmul.f32 %v4500, %v2854
        %v4533 = vmul.f32 %v4500, %v2855
        %v4534 = vadd.f32 %v4406, %v4502
        %v4535 = vadd.f32 %v4407, %v4503
        %v4536 = vadd.f32 %v4408, %v4504
        %v4537 = vadd.f32 %v4409, %v4505
        %v4538 = vadd.f32 %v4410, %v4506
        %v4539 = vadd.f32 %v4411, %v4507
        %v4540 = vadd.f32 %v4412, %v4508
        %v4541 = vadd.f32 %v4413, %v4509
        %v4542 = vadd.f32 %v4414, %v4510
        %v4543 = vadd.f32 %v4415, %v4511
        %v4544 = vadd.f32 %v4416, %v4512
        %v4545 = vadd.f32 %v4417, %v4513
        %v4546 = vadd.f32 %v4418, %v4514
        %v4547 = vadd.f32 %v4419, %v4515
        %v4548 = vadd.f32 %v4420, %v4516
        %v4549 = vadd.f32 %v4421, %v4517
        %v4550 = vadd.f32 %v4422, %v4518
        %v4551 = vadd.f32 %v4423, %v4519
        %v4552 = vadd.f32 %v4424, %v4520
        %v4553 = vadd.f32 %v4425, %v4521
        %v4554 = vadd.f32 %v4426, %v4522
        %v4555 = vadd.f32 %v4427, %v4523
        %v4556 = vadd.f32 %v4428, %v4524
        %v4557 = vadd.f32 %v4429, %v4525
        %v4558 = vadd.f32 %v4430, %v4526
        %v4559 = vadd.f32 %v4431, %v4527
        %v4560 = vadd.f32 %v4432, %v4528
        %v4561 = vadd.f32 %v4433, %v4529
        %v4562 = vadd.f32 %v4434, %v4530
        %v4563 = vadd.f32 %v4435, %v4531
        %v4564 = vadd.f32 %v4436, %v4532
        %v4565 = vadd.f32 %v4437, %v4533
        %4566 = vset.pattern.permute.xlu0 3
        %4567 = vperm.xlu0 %4566, %v4182
        %v4568 = vpop.permute.xlu0 %4567
        %4570 = vset.pattern.permute.xlu0 3
        %4571 = vperm.xlu0 %4570, %v4183
        %v4572 = vpop.permute.xlu0 %4571
        %4574 = vset.pattern.permute.xlu0 3
        %4575 = vperm.xlu0 %4574, %v4184
        %v4576 = vpop.permute.xlu0 %4575
        %4578 = vset.pattern.permute.xlu0 3
        %4579 = vperm.xlu0 %4578, %v4185
        %v4580 = vpop.permute.xlu0 %4579
        %4582 = vset.pattern.permute.xlu0 3
        %4583 = vperm.xlu0 %4582, %v4186
        %v4584 = vpop.permute.xlu0 %4583
        %4586 = vset.pattern.permute.xlu0 3
        %4587 = vperm.xlu0 %4586, %v4187
        %v4588 = vpop.permute.xlu0 %4587
        %4590 = vset.pattern.permute.xlu0 3
        %4591 = vperm.xlu0 %4590, %v4188
        %v4592 = vpop.permute.xlu0 %4591
        %4594 = vset.pattern.permute.xlu0 3
        %4595 = vperm.xlu0 %4594, %v4189
        %v4596 = vpop.permute.xlu0 %4595
        %4598 = vset.pattern.permute.xlu0 3
        %4599 = vperm.xlu0 %4598, %v4190
        %v4600 = vpop.permute.xlu0 %4599
        %4602 = vset.pattern.permute.xlu0 3
        %4603 = vperm.xlu0 %4602, %v4191
        %v4604 = vpop.permute.xlu0 %4603
        %4606 = vset.pattern.permute.xlu0 3
        %4607 = vperm.xlu0 %4606, %v4192
        %v4608 = vpop.permute.xlu0 %4607
        %4610 = vset.pattern.permute.xlu0 3
        %4611 = vperm.xlu0 %4610, %v4193
        %v4612 = vpop.permute.xlu0 %4611
        %4614 = vset.pattern.permute.xlu0 3
        %4615 = vperm.xlu0 %4614, %v4194
        %v4616 = vpop.permute.xlu0 %4615
        %4618 = vset.pattern.permute.xlu0 3
        %4619 = vperm.xlu0 %4618, %v4195
        %v4620 = vpop.permute.xlu0 %4619
        %4622 = vset.pattern.permute.xlu0 3
        %4623 = vperm.xlu0 %4622, %v4196
        %v4624 = vpop.permute.xlu0 %4623
        %4626 = vset.pattern.permute.xlu0 3
        %4627 = vperm.xlu0 %4626, %v4197
        %v4628 = vpop.permute.xlu0 %4627
        %v4630 = vmul.f32 %v4568, %v2988
        %v4631 = vmul.f32 %v4568, %v2989
        %v4632 = vmul.f32 %v4572, %v2988
        %v4633 = vmul.f32 %v4572, %v2989
        %v4634 = vmul.f32 %v4576, %v2988
        %v4635 = vmul.f32 %v4576, %v2989
        %v4636 = vmul.f32 %v4580, %v2988
        %v4637 = vmul.f32 %v4580, %v2989
        %v4638 = vmul.f32 %v4584, %v2988
        %v4639 = vmul.f32 %v4584, %v2989
        %v4640 = vmul.f32 %v4588, %v2988
        %v4641 = vmul.f32 %v4588, %v2989
        %v4642 = vmul.f32 %v4592, %v2988
        %v4643 = vmul.f32 %v4592, %v2989
        %v4644 = vmul.f32 %v4596, %v2988
        %v4645 = vmul.f32 %v4596, %v2989
        %v4646 = vmul.f32 %v4600, %v2988
        %v4647 = vmul.f32 %v4600, %v2989
        %v4648 = vmul.f32 %v4604, %v2988
        %v4649 = vmul.f32 %v4604, %v2989
        %v4650 = vmul.f32 %v4608, %v2988
        %v4651 = vmul.f32 %v4608, %v2989
        %v4652 = vmul.f32 %v4612, %v2988
        %v4653 = vmul.f32 %v4612, %v2989
        %v4654 = vmul.f32 %v4616, %v2988
        %v4655 = vmul.f32 %v4616, %v2989
        %v4656 = vmul.f32 %v4620, %v2988
        %v4657 = vmul.f32 %v4620, %v2989
        %v4658 = vmul.f32 %v4624, %v2988
        %v4659 = vmul.f32 %v4624, %v2989
        %v4660 = vmul.f32 %v4628, %v2988
        %v4661 = vmul.f32 %v4628, %v2989
        %v4662 = vadd.f32 %v4534, %v4630
        %v4663 = vadd.f32 %v4535, %v4631
        %v4664 = vadd.f32 %v4536, %v4632
        %v4665 = vadd.f32 %v4537, %v4633
        %v4666 = vadd.f32 %v4538, %v4634
        %v4667 = vadd.f32 %v4539, %v4635
        %v4668 = vadd.f32 %v4540, %v4636
        %v4669 = vadd.f32 %v4541, %v4637
        %v4670 = vadd.f32 %v4542, %v4638
        %v4671 = vadd.f32 %v4543, %v4639
        %v4672 = vadd.f32 %v4544, %v4640
        %v4673 = vadd.f32 %v4545, %v4641
        %v4674 = vadd.f32 %v4546, %v4642
        %v4675 = vadd.f32 %v4547, %v4643
        %v4676 = vadd.f32 %v4548, %v4644
        %v4677 = vadd.f32 %v4549, %v4645
        %v4678 = vadd.f32 %v4550, %v4646
        %v4679 = vadd.f32 %v4551, %v4647
        %v4680 = vadd.f32 %v4552, %v4648
        %v4681 = vadd.f32 %v4553, %v4649
        %v4682 = vadd.f32 %v4554, %v4650
        %v4683 = vadd.f32 %v4555, %v4651
        %v4684 = vadd.f32 %v4556, %v4652
        %v4685 = vadd.f32 %v4557, %v4653
        %v4686 = vadd.f32 %v4558, %v4654
        %v4687 = vadd.f32 %v4559, %v4655
        %v4688 = vadd.f32 %v4560, %v4656
        %v4689 = vadd.f32 %v4561, %v4657
        %v4690 = vadd.f32 %v4562, %v4658
        %v4691 = vadd.f32 %v4563, %v4659
        %v4692 = vadd.f32 %v4564, %v4660
        %v4693 = vadd.f32 %v4565, %v4661
        %v4694 = vpack.c.bf16 %v4663, %v4662
        %v4695 = vpack.c.bf16 %v4665, %v4664
        %v4696 = vpack.c.bf16 %v4667, %v4666
        %v4697 = vpack.c.bf16 %v4669, %v4668
        %v4698 = vpack.c.bf16 %v4671, %v4670
        %v4699 = vpack.c.bf16 %v4673, %v4672
        %v4700 = vpack.c.bf16 %v4675, %v4674
        %v4701 = vpack.c.bf16 %v4677, %v4676
        %v4702 = vpack.c.bf16 %v4679, %v4678
        %v4703 = vpack.c.bf16 %v4681, %v4680
        %v4704 = vpack.c.bf16 %v4683, %v4682
        %v4705 = vpack.c.bf16 %v4685, %v4684
        %v4706 = vpack.c.bf16 %v4687, %v4686
        %v4707 = vpack.c.bf16 %v4689, %v4688
        %v4708 = vpack.c.bf16 %v4691, %v4690
        %v4709 = vpack.c.bf16 %v4693, %v4692
        %4710 = vst [vmem:[#allocation4 + $0x80] sm:$0xff] %v4694
        %4711 = vst [vmem:[#allocation4 + $0x88] sm:$0xff] %v4695
        %4712 = vst [vmem:[#allocation4 + $0x90] sm:$0xff] %v4696
        %4713 = vst [vmem:[#allocation4 + $0x98] sm:$0xff] %v4697
        %4714 = vst [vmem:[#allocation4 + $0xa0] sm:$0xff] %v4698
        %4715 = vst [vmem:[#allocation4 + $0xa8] sm:$0xff] %v4699
        %4716 = vst [vmem:[#allocation4 + $0xb0] sm:$0xff] %v4700
        %4717 = vst [vmem:[#allocation4 + $0xb8] sm:$0xff] %v4701
        %4718 = vst [vmem:[#allocation4 + $0xc0] sm:$0xff] %v4702
        %4719 = vst [vmem:[#allocation4 + $0xc8] sm:$0xff] %v4703
        %4720 = vst [vmem:[#allocation4 + $0xd0] sm:$0xff] %v4704
        %4721 = vst [vmem:[#allocation4 + $0xd8] sm:$0xff] %v4705
        %4722 = vst [vmem:[#allocation4 + $0xe0] sm:$0xff] %v4706
        %4723 = vst [vmem:[#allocation4 + $0xe8] sm:$0xff] %v4707
        %4724 = vst [vmem:[#allocation4 + $0xf0] sm:$0xff] %v4708
        %4725 = vst [vmem:[#allocation4 + $0xf8] sm:$0xff] %v4709
        %v4726 = vld [vmem:[#allocation4] sm:$0xff]
        %v4727 = vld [vmem:[#allocation4 + $0x8] sm:$0xff]
        %v4728 = vld [vmem:[#allocation4 + $0x10] sm:$0xff]
        %v4729 = vld [vmem:[#allocation4 + $0x18] sm:$0xff]
        %v4730 = vld [vmem:[#allocation4 + $0x20] sm:$0xff]
        %v4731 = vld [vmem:[#allocation4 + $0x28] sm:$0xff]
        %v4732 = vld [vmem:[#allocation4 + $0x30] sm:$0xff]
        %v4733 = vld [vmem:[#allocation4 + $0x38] sm:$0xff]
        %v4734 = vld [vmem:[#allocation4 + $0x40] sm:$0xff]
        %v4735 = vld [vmem:[#allocation4 + $0x48] sm:$0xff]
        %v4736 = vld [vmem:[#allocation4 + $0x50] sm:$0xff]
        %v4737 = vld [vmem:[#allocation4 + $0x58] sm:$0xff]
        %v4738 = vld [vmem:[#allocation4 + $0x60] sm:$0xff]
        %v4739 = vld [vmem:[#allocation4 + $0x68] sm:$0xff]
        %v4740 = vld [vmem:[#allocation4 + $0x70] sm:$0xff]
        %v4741 = vld [vmem:[#allocation4 + $0x78] sm:$0xff]
        %v4742 = vld [vmem:[#allocation4 + $0x80] sm:$0xff]
        %v4743 = vld [vmem:[#allocation4 + $0x88] sm:$0xff]
        %v4744 = vld [vmem:[#allocation4 + $0x90] sm:$0xff]
        %v4745 = vld [vmem:[#allocation4 + $0x98] sm:$0xff]
        %v4746 = vld [vmem:[#allocation4 + $0xa0] sm:$0xff]
        %v4747 = vld [vmem:[#allocation4 + $0xa8] sm:$0xff]
        %v4748 = vld [vmem:[#allocation4 + $0xb0] sm:$0xff]
        %v4749 = vld [vmem:[#allocation4 + $0xb8] sm:$0xff]
        %v4750 = vld [vmem:[#allocation4 + $0xc0] sm:$0xff]
        %v4751 = vld [vmem:[#allocation4 + $0xc8] sm:$0xff]
        %v4752 = vld [vmem:[#allocation4 + $0xd0] sm:$0xff]
        %v4753 = vld [vmem:[#allocation4 + $0xd8] sm:$0xff]
        %v4754 = vld [vmem:[#allocation4 + $0xe0] sm:$0xff]
        %v4755 = vld [vmem:[#allocation4 + $0xe8] sm:$0xff]
        %v4756 = vld [vmem:[#allocation4 + $0xf0] sm:$0xff]
        %v4757 = vld [vmem:[#allocation4 + $0xf8] sm:$0xff]
        %v4758 = vld [vmem:[#allocation3] sm:$0xff]
        %v4759 = vld [vmem:[#allocation3 + $0x8] sm:$0xff]
        %v4760 = vld [vmem:[#allocation3 + $0x10] sm:$0xff]
        %v4761 = vld [vmem:[#allocation3 + $0x18] sm:$0xff]
        %v4762 = vld [vmem:[#allocation3 + $0x20] sm:$0xff]
        %v4763 = vld [vmem:[#allocation3 + $0x28] sm:$0xff]
        %v4764 = vld [vmem:[#allocation3 + $0x30] sm:$0xff]
        %v4765 = vld [vmem:[#allocation3 + $0x38] sm:$0xff]
        %v4766 = vld [vmem:[#allocation3 + $0x40] sm:$0xff]
        %v4767 = vld [vmem:[#allocation3 + $0x48] sm:$0xff]
        %v4768 = vld [vmem:[#allocation3 + $0x50] sm:$0xff]
        %v4769 = vld [vmem:[#allocation3 + $0x58] sm:$0xff]
        %v4770 = vld [vmem:[#allocation3 + $0x60] sm:$0xff]
        %v4771 = vld [vmem:[#allocation3 + $0x68] sm:$0xff]
        %v4772 = vld [vmem:[#allocation3 + $0x70] sm:$0xff]
        %v4773 = vld [vmem:[#allocation3 + $0x78] sm:$0xff]
        %v4774 = vld [vmem:[#allocation3 + $0x80] sm:$0xff]
        %v4775 = vld [vmem:[#allocation3 + $0x88] sm:$0xff]
        %v4776 = vld [vmem:[#allocation3 + $0x90] sm:$0xff]
        %v4777 = vld [vmem:[#allocation3 + $0x98] sm:$0xff]
        %v4778 = vld [vmem:[#allocation3 + $0xa0] sm:$0xff]
        %v4779 = vld [vmem:[#allocation3 + $0xa8] sm:$0xff]
        %v4780 = vld [vmem:[#allocation3 + $0xb0] sm:$0xff]
        %v4781 = vld [vmem:[#allocation3 + $0xb8] sm:$0xff]
        %v4782 = vld [vmem:[#allocation3 + $0xc0] sm:$0xff]
        %v4783 = vld [vmem:[#allocation3 + $0xc8] sm:$0xff]
        %v4784 = vld [vmem:[#allocation3 + $0xd0] sm:$0xff]
        %v4785 = vld [vmem:[#allocation3 + $0xd8] sm:$0xff]
        %v4786 = vld [vmem:[#allocation3 + $0xe0] sm:$0xff]
        %v4787 = vld [vmem:[#allocation3 + $0xe8] sm:$0xff]
        %v4788 = vld [vmem:[#allocation3 + $0xf0] sm:$0xff]
        %v4789 = vld [vmem:[#allocation3 + $0xf8] sm:$0xff]
        %v4822 = vunpack.c.l.b16 %v4726
        %v4823 = vunpack.c.h.b16 %v4726
        %v4824 = vunpack.c.l.b16 %v4727
        %v4825 = vunpack.c.h.b16 %v4727
        %v4826 = vunpack.c.l.b16 %v4728
        %v4827 = vunpack.c.h.b16 %v4728
        %v4828 = vunpack.c.l.b16 %v4729
        %v4829 = vunpack.c.h.b16 %v4729
        %v4830 = vunpack.c.l.b16 %v4730
        %v4831 = vunpack.c.h.b16 %v4730
        %v4832 = vunpack.c.l.b16 %v4731
        %v4833 = vunpack.c.h.b16 %v4731
        %v4834 = vunpack.c.l.b16 %v4732
        %v4835 = vunpack.c.h.b16 %v4732
        %v4836 = vunpack.c.l.b16 %v4733
        %v4837 = vunpack.c.h.b16 %v4733
        %v4838 = vunpack.c.l.b16 %v4734
        %v4839 = vunpack.c.h.b16 %v4734
        %v4840 = vunpack.c.l.b16 %v4735
        %v4841 = vunpack.c.h.b16 %v4735
        %v4842 = vunpack.c.l.b16 %v4736
        %v4843 = vunpack.c.h.b16 %v4736
        %v4844 = vunpack.c.l.b16 %v4737
        %v4845 = vunpack.c.h.b16 %v4737
        %v4846 = vunpack.c.l.b16 %v4738
        %v4847 = vunpack.c.h.b16 %v4738
        %v4848 = vunpack.c.l.b16 %v4739
        %v4849 = vunpack.c.h.b16 %v4739
        %v4850 = vunpack.c.l.b16 %v4740
        %v4851 = vunpack.c.h.b16 %v4740
        %v4852 = vunpack.c.l.b16 %v4741
        %v4853 = vunpack.c.h.b16 %v4741
        %v4854 = vunpack.c.l.b16 %v4742
        %v4855 = vunpack.c.h.b16 %v4742
        %v4856 = vunpack.c.l.b16 %v4743
        %v4857 = vunpack.c.h.b16 %v4743
        %v4858 = vunpack.c.l.b16 %v4744
        %v4859 = vunpack.c.h.b16 %v4744
        %v4860 = vunpack.c.l.b16 %v4745
        %v4861 = vunpack.c.h.b16 %v4745
        %v4862 = vunpack.c.l.b16 %v4746
        %v4863 = vunpack.c.h.b16 %v4746
        %v4864 = vunpack.c.l.b16 %v4747
        %v4865 = vunpack.c.h.b16 %v4747
        %v4866 = vunpack.c.l.b16 %v4748
        %v4867 = vunpack.c.h.b16 %v4748
        %v4868 = vunpack.c.l.b16 %v4749
        %v4869 = vunpack.c.h.b16 %v4749
        %v4870 = vunpack.c.l.b16 %v4750
        %v4871 = vunpack.c.h.b16 %v4750
        %v4872 = vunpack.c.l.b16 %v4751
        %v4873 = vunpack.c.h.b16 %v4751
        %v4874 = vunpack.c.l.b16 %v4752
        %v4875 = vunpack.c.h.b16 %v4752
        %v4876 = vunpack.c.l.b16 %v4753
        %v4877 = vunpack.c.h.b16 %v4753
        %v4878 = vunpack.c.l.b16 %v4754
        %v4879 = vunpack.c.h.b16 %v4754
        %v4880 = vunpack.c.l.b16 %v4755
        %v4881 = vunpack.c.h.b16 %v4755
        %v4882 = vunpack.c.l.b16 %v4756
        %v4883 = vunpack.c.h.b16 %v4756
        %v4884 = vunpack.c.l.b16 %v4757
        %v4885 = vunpack.c.h.b16 %v4757
        %v4886 = vpack.c.b16 %v4824, %v4822
        %v4887 = vpack.c.b16 %v4825, %v4823
        %v4888 = vpack.c.b16 %v4828, %v4826
        %v4889 = vpack.c.b16 %v4829, %v4827
        %v4890 = vpack.c.b16 %v4832, %v4830
        %v4891 = vpack.c.b16 %v4833, %v4831
        %v4892 = vpack.c.b16 %v4836, %v4834
        %v4893 = vpack.c.b16 %v4837, %v4835
        %v4894 = vpack.c.b16 %v4840, %v4838
        %v4895 = vpack.c.b16 %v4841, %v4839
        %v4896 = vpack.c.b16 %v4844, %v4842
        %v4897 = vpack.c.b16 %v4845, %v4843
        %v4898 = vpack.c.b16 %v4848, %v4846
        %v4899 = vpack.c.b16 %v4849, %v4847
        %v4900 = vpack.c.b16 %v4852, %v4850
        %v4901 = vpack.c.b16 %v4853, %v4851
        %v4902 = vpack.c.b16 %v4856, %v4854
        %v4903 = vpack.c.b16 %v4857, %v4855
        %v4904 = vpack.c.b16 %v4860, %v4858
        %v4905 = vpack.c.b16 %v4861, %v4859
        %v4906 = vpack.c.b16 %v4864, %v4862
        %v4907 = vpack.c.b16 %v4865, %v4863
        %v4908 = vpack.c.b16 %v4868, %v4866
        %v4909 = vpack.c.b16 %v4869, %v4867
        %v4910 = vpack.c.b16 %v4872, %v4870
        %v4911 = vpack.c.b16 %v4873, %v4871
        %v4912 = vpack.c.b16 %v4876, %v4874
        %v4913 = vpack.c.b16 %v4877, %v4875
        %v4914 = vpack.c.b16 %v4880, %v4878
        %v4915 = vpack.c.b16 %v4881, %v4879
        %v4916 = vpack.c.b16 %v4884, %v4882
        %v4917 = vpack.c.b16 %v4885, %v4883
        %v4982 = vunpack.c.l.b16 %v4758
        %v4983 = vunpack.c.h.b16 %v4758
        %v4984 = vunpack.c.l.b16 %v4759
        %v4985 = vunpack.c.h.b16 %v4759
        %v4986 = vunpack.c.l.b16 %v4760
        %v4987 = vunpack.c.h.b16 %v4760
        %v4988 = vunpack.c.l.b16 %v4761
        %v4989 = vunpack.c.h.b16 %v4761
        %v4990 = vunpack.c.l.b16 %v4762
        %v4991 = vunpack.c.h.b16 %v4762
        %v4992 = vunpack.c.l.b16 %v4763
        %v4993 = vunpack.c.h.b16 %v4763
        %v4994 = vunpack.c.l.b16 %v4764
        %v4995 = vunpack.c.h.b16 %v4764
        %v4996 = vunpack.c.l.b16 %v4765
        %v4997 = vunpack.c.h.b16 %v4765
        %v4998 = vunpack.c.l.b16 %v4766
        %v4999 = vunpack.c.h.b16 %v4766
        %v5000 = vunpack.c.l.b16 %v4767
        %v5001 = vunpack.c.h.b16 %v4767
        %v5002 = vunpack.c.l.b16 %v4768
        %v5003 = vunpack.c.h.b16 %v4768
        %v5004 = vunpack.c.l.b16 %v4769
        %v5005 = vunpack.c.h.b16 %v4769
        %v5006 = vunpack.c.l.b16 %v4770
        %v5007 = vunpack.c.h.b16 %v4770
        %v5008 = vunpack.c.l.b16 %v4771
        %v5009 = vunpack.c.h.b16 %v4771
        %v5010 = vunpack.c.l.b16 %v4772
        %v5011 = vunpack.c.h.b16 %v4772
        %v5012 = vunpack.c.l.b16 %v4773
        %v5013 = vunpack.c.h.b16 %v4773
        %v5014 = vunpack.c.l.b16 %v4774
        %v5015 = vunpack.c.h.b16 %v4774
        %v5016 = vunpack.c.l.b16 %v4775
        %v5017 = vunpack.c.h.b16 %v4775
        %v5018 = vunpack.c.l.b16 %v4776
        %v5019 = vunpack.c.h.b16 %v4776
        %v5020 = vunpack.c.l.b16 %v4777
        %v5021 = vunpack.c.h.b16 %v4777
        %v5022 = vunpack.c.l.b16 %v4778
        %v5023 = vunpack.c.h.b16 %v4778
        %v5024 = vunpack.c.l.b16 %v4779
        %v5025 = vunpack.c.h.b16 %v4779
        %v5026 = vunpack.c.l.b16 %v4780
        %v5027 = vunpack.c.h.b16 %v4780
        %v5028 = vunpack.c.l.b16 %v4781
        %v5029 = vunpack.c.h.b16 %v4781
        %v5030 = vunpack.c.l.b16 %v4782
        %v5031 = vunpack.c.h.b16 %v4782
        %v5032 = vunpack.c.l.b16 %v4783
        %v5033 = vunpack.c.h.b16 %v4783
        %v5034 = vunpack.c.l.b16 %v4784
        %v5035 = vunpack.c.h.b16 %v4784
        %v5036 = vunpack.c.l.b16 %v4785
        %v5037 = vunpack.c.h.b16 %v4785
        %v5038 = vunpack.c.l.b16 %v4786
        %v5039 = vunpack.c.h.b16 %v4786
        %v5040 = vunpack.c.l.b16 %v4787
        %v5041 = vunpack.c.h.b16 %v4787
        %v5042 = vunpack.c.l.b16 %v4788
        %v5043 = vunpack.c.h.b16 %v4788
        %v5044 = vunpack.c.l.b16 %v4789
        %v5045 = vunpack.c.h.b16 %v4789
        %v5046 = vpack.c.b16 %v4984, %v4982
        %v5047 = vpack.c.b16 %v4985, %v4983
        %v5048 = vpack.c.b16 %v4988, %v4986
        %v5049 = vpack.c.b16 %v4989, %v4987
        %v5050 = vpack.c.b16 %v4992, %v4990
        %v5051 = vpack.c.b16 %v4993, %v4991
        %v5052 = vpack.c.b16 %v4996, %v4994
        %v5053 = vpack.c.b16 %v4997, %v4995
        %v5054 = vpack.c.b16 %v5000, %v4998
        %v5055 = vpack.c.b16 %v5001, %v4999
        %v5056 = vpack.c.b16 %v5004, %v5002
        %v5057 = vpack.c.b16 %v5005, %v5003
        %v5058 = vpack.c.b16 %v5008, %v5006
        %v5059 = vpack.c.b16 %v5009, %v5007
        %v5060 = vpack.c.b16 %v5012, %v5010
        %v5061 = vpack.c.b16 %v5013, %v5011
        %v5062 = vpack.c.b16 %v5016, %v5014
        %v5063 = vpack.c.b16 %v5017, %v5015
        %v5064 = vpack.c.b16 %v5020, %v5018
        %v5065 = vpack.c.b16 %v5021, %v5019
        %v5066 = vpack.c.b16 %v5024, %v5022
        %v5067 = vpack.c.b16 %v5025, %v5023
        %v5068 = vpack.c.b16 %v5028, %v5026
        %v5069 = vpack.c.b16 %v5029, %v5027
        %v5070 = vpack.c.b16 %v5032, %v5030
        %v5071 = vpack.c.b16 %v5033, %v5031
        %v5072 = vpack.c.b16 %v5036, %v5034
        %v5073 = vpack.c.b16 %v5037, %v5035
        %v5074 = vpack.c.b16 %v5040, %v5038
        %v5075 = vpack.c.b16 %v5041, %v5039
        %v5076 = vpack.c.b16 %v5044, %v5042
        %v5077 = vpack.c.b16 %v5045, %v5043
        %5110 = vmatpush.bf16.xpose.msra.mxu0 %v5060
        %5111 = vmatpush.bf16.xpose.msra.mxu0 %v5058
        %5112 = vmatpush.bf16.xpose.msra.mxu0 %v5056
        %5113 = vmatpush.bf16.xpose.msra.mxu0 %v5054
        %5114 = vmatpush.bf16.xpose.msra.mxu0 %v5052
        %5115 = vmatpush.bf16.xpose.msra.mxu0 %v5050
        %5116 = vmatpush.bf16.xpose.msra.mxu0 %v5048
        %5117 = vmatpush.bf16.xpose.msra.mxu0 %v5046
        %5118 = vmatmul.bf16.gmra.mxu0 %v4886
        %v5119 = vpop.f32.mrf.mxu0
        %v5120 = vadd.f32 0.0, %v5119
        %v5121 = vpop.f32.mrf.mxu0
        %v5122 = vadd.f32 0.0, %v5121
        %5123 = vmatmul.bf16.gmra.mxu0 %v4888
        %v5124 = vpop.f32.mrf.mxu0
        %v5125 = vadd.f32 0.0, %v5124
        %v5126 = vpop.f32.mrf.mxu0
        %v5127 = vadd.f32 0.0, %v5126
        %5128 = vmatmul.bf16.gmra.mxu0 %v4890
        %v5129 = vpop.f32.mrf.mxu0
        %v5130 = vadd.f32 0.0, %v5129
        %v5131 = vpop.f32.mrf.mxu0
        %v5132 = vadd.f32 0.0, %v5131
        %5133 = vmatmul.bf16.gmra.mxu0 %v4892
        %v5134 = vpop.f32.mrf.mxu0
        %v5135 = vadd.f32 0.0, %v5134
        %v5136 = vpop.f32.mrf.mxu0
        %v5137 = vadd.f32 0.0, %v5136
        %5138 = vmatmul.bf16.gmra.mxu0 %v4894
        %v5139 = vpop.f32.mrf.mxu0
        %v5140 = vadd.f32 0.0, %v5139
        %v5141 = vpop.f32.mrf.mxu0
        %v5142 = vadd.f32 0.0, %v5141
        %5143 = vmatmul.bf16.gmra.mxu0 %v4896
        %v5144 = vpop.f32.mrf.mxu0
        %v5145 = vadd.f32 0.0, %v5144
        %v5146 = vpop.f32.mrf.mxu0
        %v5147 = vadd.f32 0.0, %v5146
        %5148 = vmatmul.bf16.gmra.mxu0 %v4898
        %v5149 = vpop.f32.mrf.mxu0
        %v5150 = vadd.f32 0.0, %v5149
        %v5151 = vpop.f32.mrf.mxu0
        %v5152 = vadd.f32 0.0, %v5151
        %5153 = vmatmul.bf16.gmra.mxu0 %v4900
        %v5154 = vpop.f32.mrf.mxu0
        %v5155 = vadd.f32 0.0, %v5154
        %v5156 = vpop.f32.mrf.mxu0
        %v5157 = vadd.f32 0.0, %v5156
        %5158 = vmatmul.bf16.gmra.mxu0 %v4902
        %v5159 = vpop.f32.mrf.mxu0
        %v5160 = vadd.f32 0.0, %v5159
        %v5161 = vpop.f32.mrf.mxu0
        %v5162 = vadd.f32 0.0, %v5161
        %5163 = vmatmul.bf16.gmra.mxu0 %v4904
        %v5164 = vpop.f32.mrf.mxu0
        %v5165 = vadd.f32 0.0, %v5164
        %v5166 = vpop.f32.mrf.mxu0
        %v5167 = vadd.f32 0.0, %v5166
        %5168 = vmatmul.bf16.gmra.mxu0 %v4906
        %v5169 = vpop.f32.mrf.mxu0
        %v5170 = vadd.f32 0.0, %v5169
        %v5171 = vpop.f32.mrf.mxu0
        %v5172 = vadd.f32 0.0, %v5171
        %5173 = vmatmul.bf16.gmra.mxu0 %v4908
        %v5174 = vpop.f32.mrf.mxu0
        %v5175 = vadd.f32 0.0, %v5174
        %v5176 = vpop.f32.mrf.mxu0
        %v5177 = vadd.f32 0.0, %v5176
        %5178 = vmatmul.bf16.gmra.mxu0 %v4910
        %v5179 = vpop.f32.mrf.mxu0
        %v5180 = vadd.f32 0.0, %v5179
        %v5181 = vpop.f32.mrf.mxu0
        %v5182 = vadd.f32 0.0, %v5181
        %5183 = vmatmul.bf16.gmra.mxu0 %v4912
        %v5184 = vpop.f32.mrf.mxu0
        %v5185 = vadd.f32 0.0, %v5184
        %v5186 = vpop.f32.mrf.mxu0
        %v5187 = vadd.f32 0.0, %v5186
        %5188 = vmatmul.bf16.gmra.mxu0 %v4914
        %v5189 = vpop.f32.mrf.mxu0
        %v5190 = vadd.f32 0.0, %v5189
        %v5191 = vpop.f32.mrf.mxu0
        %v5192 = vadd.f32 0.0, %v5191
        %5193 = vmatmul.bf16.gmra.mxu0 %v4916
        %v5194 = vpop.f32.mrf.mxu0
        %v5195 = vadd.f32 0.0, %v5194
        %v5196 = vpop.f32.mrf.mxu0
        %v5197 = vadd.f32 0.0, %v5196
        %5198 = vdwg.mxu0
        %5199 = vmatpush.bf16.xpose.msra.mxu0 %v5061
        %5200 = vmatpush.bf16.xpose.msra.mxu0 %v5059
        %5201 = vmatpush.bf16.xpose.msra.mxu0 %v5057
        %5202 = vmatpush.bf16.xpose.msra.mxu0 %v5055
        %5203 = vmatpush.bf16.xpose.msra.mxu0 %v5053
        %5204 = vmatpush.bf16.xpose.msra.mxu0 %v5051
        %5205 = vmatpush.bf16.xpose.msra.mxu0 %v5049
        %5206 = vmatpush.bf16.xpose.msra.mxu0 %v5047
        %5207 = vmatmul.bf16.gmra.mxu0 %v4887
        %v5208 = vpop.f32.mrf.mxu0
        %v5209 = vadd.f32 %v5120, %v5208
        %v5210 = vpop.f32.mrf.mxu0
        %v5211 = vadd.f32 %v5122, %v5210
        %5212 = vmatmul.bf16.gmra.mxu0 %v4889
        %v5213 = vpop.f32.mrf.mxu0
        %v5214 = vadd.f32 %v5125, %v5213
        %v5215 = vpop.f32.mrf.mxu0
        %v5216 = vadd.f32 %v5127, %v5215
        %5217 = vmatmul.bf16.gmra.mxu0 %v4891
        %v5218 = vpop.f32.mrf.mxu0
        %v5219 = vadd.f32 %v5130, %v5218
        %v5220 = vpop.f32.mrf.mxu0
        %v5221 = vadd.f32 %v5132, %v5220
        %5222 = vmatmul.bf16.gmra.mxu0 %v4893
        %v5223 = vpop.f32.mrf.mxu0
        %v5224 = vadd.f32 %v5135, %v5223
        %v5225 = vpop.f32.mrf.mxu0
        %v5226 = vadd.f32 %v5137, %v5225
        %5227 = vmatmul.bf16.gmra.mxu0 %v4895
        %v5228 = vpop.f32.mrf.mxu0
        %v5229 = vadd.f32 %v5140, %v5228
        %v5230 = vpop.f32.mrf.mxu0
        %v5231 = vadd.f32 %v5142, %v5230
        %5232 = vmatmul.bf16.gmra.mxu0 %v4897
        %v5233 = vpop.f32.mrf.mxu0
        %v5234 = vadd.f32 %v5145, %v5233
        %v5235 = vpop.f32.mrf.mxu0
        %v5236 = vadd.f32 %v5147, %v5235
        %5237 = vmatmul.bf16.gmra.mxu0 %v4899
        %v5238 = vpop.f32.mrf.mxu0
        %v5239 = vadd.f32 %v5150, %v5238
        %v5240 = vpop.f32.mrf.mxu0
        %v5241 = vadd.f32 %v5152, %v5240
        %5242 = vmatmul.bf16.gmra.mxu0 %v4901
        %v5243 = vpop.f32.mrf.mxu0
        %v5244 = vadd.f32 %v5155, %v5243
        %v5245 = vpop.f32.mrf.mxu0
        %v5246 = vadd.f32 %v5157, %v5245
        %5247 = vmatmul.bf16.gmra.mxu0 %v4903
        %v5248 = vpop.f32.mrf.mxu0
        %v5249 = vadd.f32 %v5160, %v5248
        %v5250 = vpop.f32.mrf.mxu0
        %v5251 = vadd.f32 %v5162, %v5250
        %5252 = vmatmul.bf16.gmra.mxu0 %v4905
        %v5253 = vpop.f32.mrf.mxu0
        %v5254 = vadd.f32 %v5165, %v5253
        %v5255 = vpop.f32.mrf.mxu0
        %v5256 = vadd.f32 %v5167, %v5255
        %5257 = vmatmul.bf16.gmra.mxu0 %v4907
        %v5258 = vpop.f32.mrf.mxu0
        %v5259 = vadd.f32 %v5170, %v5258
        %v5260 = vpop.f32.mrf.mxu0
        %v5261 = vadd.f32 %v5172, %v5260
        %5262 = vmatmul.bf16.gmra.mxu0 %v4909
        %v5263 = vpop.f32.mrf.mxu0
        %v5264 = vadd.f32 %v5175, %v5263
        %v5265 = vpop.f32.mrf.mxu0
        %v5266 = vadd.f32 %v5177, %v5265
        %5267 = vmatmul.bf16.gmra.mxu0 %v4911
        %v5268 = vpop.f32.mrf.mxu0
        %v5269 = vadd.f32 %v5180, %v5268
        %v5270 = vpop.f32.mrf.mxu0
        %v5271 = vadd.f32 %v5182, %v5270
        %5272 = vmatmul.bf16.gmra.mxu0 %v4913
        %v5273 = vpop.f32.mrf.mxu0
        %v5274 = vadd.f32 %v5185, %v5273
        %v5275 = vpop.f32.mrf.mxu0
        %v5276 = vadd.f32 %v5187, %v5275
        %5277 = vmatmul.bf16.gmra.mxu0 %v4915
        %v5278 = vpop.f32.mrf.mxu0
        %v5279 = vadd.f32 %v5190, %v5278
        %v5280 = vpop.f32.mrf.mxu0
        %v5281 = vadd.f32 %v5192, %v5280
        %5282 = vmatmul.bf16.gmra.mxu0 %v4917
        %v5283 = vpop.f32.mrf.mxu0
        %v5284 = vadd.f32 %v5195, %v5283
        %v5285 = vpop.f32.mrf.mxu0
        %v5286 = vadd.f32 %v5197, %v5285
        %5287 = vdwg.mxu0
        %5288 = vmatpush.bf16.xpose.msra.mxu0 %v5076
        %5289 = vmatpush.bf16.xpose.msra.mxu0 %v5074
        %5290 = vmatpush.bf16.xpose.msra.mxu0 %v5072
        %5291 = vmatpush.bf16.xpose.msra.mxu0 %v5070
        %5292 = vmatpush.bf16.xpose.msra.mxu0 %v5068
        %5293 = vmatpush.bf16.xpose.msra.mxu0 %v5066
        %5294 = vmatpush.bf16.xpose.msra.mxu0 %v5064
        %5295 = vmatpush.bf16.xpose.msra.mxu0 %v5062
        %5296 = vmatmul.bf16.gmra.mxu0 %v4886
        %v5297 = vpop.f32.mrf.mxu0
        %v5298 = vadd.f32 0.0, %v5297
        %v5299 = vpop.f32.mrf.mxu0
        %v5300 = vadd.f32 0.0, %v5299
        %5301 = vmatmul.bf16.gmra.mxu0 %v4888
        %v5302 = vpop.f32.mrf.mxu0
        %v5303 = vadd.f32 0.0, %v5302
        %v5304 = vpop.f32.mrf.mxu0
        %v5305 = vadd.f32 0.0, %v5304
        %5306 = vmatmul.bf16.gmra.mxu0 %v4890
        %v5307 = vpop.f32.mrf.mxu0
        %v5308 = vadd.f32 0.0, %v5307
        %v5309 = vpop.f32.mrf.mxu0
        %v5310 = vadd.f32 0.0, %v5309
        %5311 = vmatmul.bf16.gmra.mxu0 %v4892
        %v5312 = vpop.f32.mrf.mxu0
        %v5313 = vadd.f32 0.0, %v5312
        %v5314 = vpop.f32.mrf.mxu0
        %v5315 = vadd.f32 0.0, %v5314
        %5316 = vmatmul.bf16.gmra.mxu0 %v4894
        %v5317 = vpop.f32.mrf.mxu0
        %v5318 = vadd.f32 0.0, %v5317
        %v5319 = vpop.f32.mrf.mxu0
        %v5320 = vadd.f32 0.0, %v5319
        %5321 = vmatmul.bf16.gmra.mxu0 %v4896
        %v5322 = vpop.f32.mrf.mxu0
        %v5323 = vadd.f32 0.0, %v5322
        %v5324 = vpop.f32.mrf.mxu0
        %v5325 = vadd.f32 0.0, %v5324
        %5326 = vmatmul.bf16.gmra.mxu0 %v4898
        %v5327 = vpop.f32.mrf.mxu0
        %v5328 = vadd.f32 0.0, %v5327
        %v5329 = vpop.f32.mrf.mxu0
        %v5330 = vadd.f32 0.0, %v5329
        %5331 = vmatmul.bf16.gmra.mxu0 %v4900
        %v5332 = vpop.f32.mrf.mxu0
        %v5333 = vadd.f32 0.0, %v5332
        %v5334 = vpop.f32.mrf.mxu0
        %v5335 = vadd.f32 0.0, %v5334
        %5336 = vmatmul.bf16.gmra.mxu0 %v4902
        %v5337 = vpop.f32.mrf.mxu0
        %v5338 = vadd.f32 0.0, %v5337
        %v5339 = vpop.f32.mrf.mxu0
        %v5340 = vadd.f32 0.0, %v5339
        %5341 = vmatmul.bf16.gmra.mxu0 %v4904
        %v5342 = vpop.f32.mrf.mxu0
        %v5343 = vadd.f32 0.0, %v5342
        %v5344 = vpop.f32.mrf.mxu0
        %v5345 = vadd.f32 0.0, %v5344
        %5346 = vmatmul.bf16.gmra.mxu0 %v4906
        %v5347 = vpop.f32.mrf.mxu0
        %v5348 = vadd.f32 0.0, %v5347
        %v5349 = vpop.f32.mrf.mxu0
        %v5350 = vadd.f32 0.0, %v5349
        %5351 = vmatmul.bf16.gmra.mxu0 %v4908
        %v5352 = vpop.f32.mrf.mxu0
        %v5353 = vadd.f32 0.0, %v5352
        %v5354 = vpop.f32.mrf.mxu0
        %v5355 = vadd.f32 0.0, %v5354
        %5356 = vmatmul.bf16.gmra.mxu0 %v4910
        %v5357 = vpop.f32.mrf.mxu0
        %v5358 = vadd.f32 0.0, %v5357
        %v5359 = vpop.f32.mrf.mxu0
        %v5360 = vadd.f32 0.0, %v5359
        %5361 = vmatmul.bf16.gmra.mxu0 %v4912
        %v5362 = vpop.f32.mrf.mxu0
        %v5363 = vadd.f32 0.0, %v5362
        %v5364 = vpop.f32.mrf.mxu0
        %v5365 = vadd.f32 0.0, %v5364
        %5366 = vmatmul.bf16.gmra.mxu0 %v4914
        %v5367 = vpop.f32.mrf.mxu0
        %v5368 = vadd.f32 0.0, %v5367
        %v5369 = vpop.f32.mrf.mxu0
        %v5370 = vadd.f32 0.0, %v5369
        %5371 = vmatmul.bf16.gmra.mxu0 %v4916
        %v5372 = vpop.f32.mrf.mxu0
        %v5373 = vadd.f32 0.0, %v5372
        %v5374 = vpop.f32.mrf.mxu0
        %v5375 = vadd.f32 0.0, %v5374
        %5376 = vdwg.mxu0
        %5377 = vmatpush.bf16.xpose.msra.mxu0 %v5077
        %5378 = vmatpush.bf16.xpose.msra.mxu0 %v5075
        %5379 = vmatpush.bf16.xpose.msra.mxu0 %v5073
        %5380 = vmatpush.bf16.xpose.msra.mxu0 %v5071
        %5381 = vmatpush.bf16.xpose.msra.mxu0 %v5069
        %5382 = vmatpush.bf16.xpose.msra.mxu0 %v5067
        %5383 = vmatpush.bf16.xpose.msra.mxu0 %v5065
        %5384 = vmatpush.bf16.xpose.msra.mxu0 %v5063
        %5385 = vmatmul.bf16.gmra.mxu0 %v4887
        %v5386 = vpop.f32.mrf.mxu0
        %v5387 = vadd.f32 %v5298, %v5386
        %v5388 = vpop.f32.mrf.mxu0
        %v5389 = vadd.f32 %v5300, %v5388
        %5390 = vmatmul.bf16.gmra.mxu0 %v4889
        %v5391 = vpop.f32.mrf.mxu0
        %v5392 = vadd.f32 %v5303, %v5391
        %v5393 = vpop.f32.mrf.mxu0
        %v5394 = vadd.f32 %v5305, %v5393
        %5395 = vmatmul.bf16.gmra.mxu0 %v4891
        %v5396 = vpop.f32.mrf.mxu0
        %v5397 = vadd.f32 %v5308, %v5396
        %v5398 = vpop.f32.mrf.mxu0
        %v5399 = vadd.f32 %v5310, %v5398
        %5400 = vmatmul.bf16.gmra.mxu0 %v4893
        %v5401 = vpop.f32.mrf.mxu0
        %v5402 = vadd.f32 %v5313, %v5401
        %v5403 = vpop.f32.mrf.mxu0
        %v5404 = vadd.f32 %v5315, %v5403
        %5405 = vmatmul.bf16.gmra.mxu0 %v4895
        %v5406 = vpop.f32.mrf.mxu0
        %v5407 = vadd.f32 %v5318, %v5406
        %v5408 = vpop.f32.mrf.mxu0
        %v5409 = vadd.f32 %v5320, %v5408
        %5410 = vmatmul.bf16.gmra.mxu0 %v4897
        %v5411 = vpop.f32.mrf.mxu0
        %v5412 = vadd.f32 %v5323, %v5411
        %v5413 = vpop.f32.mrf.mxu0
        %v5414 = vadd.f32 %v5325, %v5413
        %5415 = vmatmul.bf16.gmra.mxu0 %v4899
        %v5416 = vpop.f32.mrf.mxu0
        %v5417 = vadd.f32 %v5328, %v5416
        %v5418 = vpop.f32.mrf.mxu0
        %v5419 = vadd.f32 %v5330, %v5418
        %5420 = vmatmul.bf16.gmra.mxu0 %v4901
        %v5421 = vpop.f32.mrf.mxu0
        %v5422 = vadd.f32 %v5333, %v5421
        %v5423 = vpop.f32.mrf.mxu0
        %v5424 = vadd.f32 %v5335, %v5423
        %5425 = vmatmul.bf16.gmra.mxu0 %v4903
        %v5426 = vpop.f32.mrf.mxu0
        %v5427 = vadd.f32 %v5338, %v5426
        %v5428 = vpop.f32.mrf.mxu0
        %v5429 = vadd.f32 %v5340, %v5428
        %5430 = vmatmul.bf16.gmra.mxu0 %v4905
        %v5431 = vpop.f32.mrf.mxu0
        %v5432 = vadd.f32 %v5343, %v5431
        %v5433 = vpop.f32.mrf.mxu0
        %v5434 = vadd.f32 %v5345, %v5433
        %5435 = vmatmul.bf16.gmra.mxu0 %v4907
        %v5436 = vpop.f32.mrf.mxu0
        %v5437 = vadd.f32 %v5348, %v5436
        %v5438 = vpop.f32.mrf.mxu0
        %v5439 = vadd.f32 %v5350, %v5438
        %5440 = vmatmul.bf16.gmra.mxu0 %v4909
        %v5441 = vpop.f32.mrf.mxu0
        %v5442 = vadd.f32 %v5353, %v5441
        %v5443 = vpop.f32.mrf.mxu0
        %v5444 = vadd.f32 %v5355, %v5443
        %5445 = vmatmul.bf16.gmra.mxu0 %v4911
        %v5446 = vpop.f32.mrf.mxu0
        %v5447 = vadd.f32 %v5358, %v5446
        %v5448 = vpop.f32.mrf.mxu0
        %v5449 = vadd.f32 %v5360, %v5448
        %5450 = vmatmul.bf16.gmra.mxu0 %v4913
        %v5451 = vpop.f32.mrf.mxu0
        %v5452 = vadd.f32 %v5363, %v5451
        %v5453 = vpop.f32.mrf.mxu0
        %v5454 = vadd.f32 %v5365, %v5453
        %5455 = vmatmul.bf16.gmra.mxu0 %v4915
        %v5456 = vpop.f32.mrf.mxu0
        %v5457 = vadd.f32 %v5368, %v5456
        %v5458 = vpop.f32.mrf.mxu0
        %v5459 = vadd.f32 %v5370, %v5458
        %5460 = vmatmul.bf16.gmra.mxu0 %v4917
        %v5461 = vpop.f32.mrf.mxu0
        %v5462 = vadd.f32 %v5373, %v5461
        %v5463 = vpop.f32.mrf.mxu0
        %v5464 = vadd.f32 %v5375, %v5463
        %5465 = vdwg.mxu0
        %v5466 = vld [vmem:[#allocation5] sm:$0xff]
        %v5467 = vld [vmem:[#allocation5 + $0x8] sm:$0xff]
        %v5468 = vld [vmem:[#allocation5 + $0x10] sm:$0xff]
        %v5469 = vld [vmem:[#allocation5 + $0x18] sm:$0xff]
        %v5470 = vld [vmem:[#allocation5 + $0x20] sm:$0xff]
        %v5471 = vld [vmem:[#allocation5 + $0x28] sm:$0xff]
        %v5472 = vld [vmem:[#allocation5 + $0x30] sm:$0xff]
        %v5473 = vld [vmem:[#allocation5 + $0x38] sm:$0xff]
        %v5474 = vld [vmem:[#allocation5 + $0x40] sm:$0xff]
        %v5475 = vld [vmem:[#allocation5 + $0x48] sm:$0xff]
        %v5476 = vld [vmem:[#allocation5 + $0x50] sm:$0xff]
        %v5477 = vld [vmem:[#allocation5 + $0x58] sm:$0xff]
        %v5478 = vld [vmem:[#allocation5 + $0x60] sm:$0xff]
        %v5479 = vld [vmem:[#allocation5 + $0x68] sm:$0xff]
        %v5480 = vld [vmem:[#allocation5 + $0x70] sm:$0xff]
        %v5481 = vld [vmem:[#allocation5 + $0x78] sm:$0xff]
        %v5482 = vld [vmem:[#allocation5 + $0x80] sm:$0xff]
        %v5483 = vld [vmem:[#allocation5 + $0x88] sm:$0xff]
        %v5484 = vld [vmem:[#allocation5 + $0x90] sm:$0xff]
        %v5485 = vld [vmem:[#allocation5 + $0x98] sm:$0xff]
        %v5486 = vld [vmem:[#allocation5 + $0xa0] sm:$0xff]
        %v5487 = vld [vmem:[#allocation5 + $0xa8] sm:$0xff]
        %v5488 = vld [vmem:[#allocation5 + $0xb0] sm:$0xff]
        %v5489 = vld [vmem:[#allocation5 + $0xb8] sm:$0xff]
        %v5490 = vld [vmem:[#allocation5 + $0xc0] sm:$0xff]
        %v5491 = vld [vmem:[#allocation5 + $0xc8] sm:$0xff]
        %v5492 = vld [vmem:[#allocation5 + $0xd0] sm:$0xff]
        %v5493 = vld [vmem:[#allocation5 + $0xd8] sm:$0xff]
        %v5494 = vld [vmem:[#allocation5 + $0xe0] sm:$0xff]
        %v5495 = vld [vmem:[#allocation5 + $0xe8] sm:$0xff]
        %v5496 = vld [vmem:[#allocation5 + $0xf0] sm:$0xff]
        %v5497 = vld [vmem:[#allocation5 + $0xf8] sm:$0xff]
        %v5498 = vld [vmem:[#allocation5 + $0x100] sm:$0xff]
        %v5499 = vld [vmem:[#allocation5 + $0x108] sm:$0xff]
        %v5500 = vld [vmem:[#allocation5 + $0x110] sm:$0xff]
        %v5501 = vld [vmem:[#allocation5 + $0x118] sm:$0xff]
        %v5502 = vld [vmem:[#allocation5 + $0x120] sm:$0xff]
        %v5503 = vld [vmem:[#allocation5 + $0x128] sm:$0xff]
        %v5504 = vld [vmem:[#allocation5 + $0x130] sm:$0xff]
        %v5505 = vld [vmem:[#allocation5 + $0x138] sm:$0xff]
        %v5506 = vld [vmem:[#allocation5 + $0x140] sm:$0xff]
        %v5507 = vld [vmem:[#allocation5 + $0x148] sm:$0xff]
        %v5508 = vld [vmem:[#allocation5 + $0x150] sm:$0xff]
        %v5509 = vld [vmem:[#allocation5 + $0x158] sm:$0xff]
        %v5510 = vld [vmem:[#allocation5 + $0x160] sm:$0xff]
        %v5511 = vld [vmem:[#allocation5 + $0x168] sm:$0xff]
        %v5512 = vld [vmem:[#allocation5 + $0x170] sm:$0xff]
        %v5513 = vld [vmem:[#allocation5 + $0x178] sm:$0xff]
        %v5514 = vld [vmem:[#allocation5 + $0x180] sm:$0xff]
        %v5515 = vld [vmem:[#allocation5 + $0x188] sm:$0xff]
        %v5516 = vld [vmem:[#allocation5 + $0x190] sm:$0xff]
        %v5517 = vld [vmem:[#allocation5 + $0x198] sm:$0xff]
        %v5518 = vld [vmem:[#allocation5 + $0x1a0] sm:$0xff]
        %v5519 = vld [vmem:[#allocation5 + $0x1a8] sm:$0xff]
        %v5520 = vld [vmem:[#allocation5 + $0x1b0] sm:$0xff]
        %v5521 = vld [vmem:[#allocation5 + $0x1b8] sm:$0xff]
        %v5522 = vld [vmem:[#allocation5 + $0x1c0] sm:$0xff]
        %v5523 = vld [vmem:[#allocation5 + $0x1c8] sm:$0xff]
        %v5524 = vld [vmem:[#allocation5 + $0x1d0] sm:$0xff]
        %v5525 = vld [vmem:[#allocation5 + $0x1d8] sm:$0xff]
        %v5526 = vld [vmem:[#allocation5 + $0x1e0] sm:$0xff]
        %v5527 = vld [vmem:[#allocation5 + $0x1e8] sm:$0xff]
        %v5528 = vld [vmem:[#allocation5 + $0x1f0] sm:$0xff]
        %v5529 = vld [vmem:[#allocation5 + $0x1f8] sm:$0xff]
        %v5530 = vmul.f32 %v5209, %v5466
        %v5531 = vmul.f32 %v5387, %v5467
        %v5532 = vmul.f32 %v5211, %v5468
        %v5533 = vmul.f32 %v5389, %v5469
        %v5534 = vmul.f32 %v5214, %v5470
        %v5535 = vmul.f32 %v5392, %v5471
        %v5536 = vmul.f32 %v5216, %v5472
        %v5537 = vmul.f32 %v5394, %v5473
        %v5538 = vmul.f32 %v5219, %v5474
        %v5539 = vmul.f32 %v5397, %v5475
        %v5540 = vmul.f32 %v5221, %v5476
        %v5541 = vmul.f32 %v5399, %v5477
        %v5542 = vmul.f32 %v5224, %v5478
        %v5543 = vmul.f32 %v5402, %v5479
        %v5544 = vmul.f32 %v5226, %v5480
        %v5545 = vmul.f32 %v5404, %v5481
        %v5546 = vmul.f32 %v5229, %v5482
        %v5547 = vmul.f32 %v5407, %v5483
        %v5548 = vmul.f32 %v5231, %v5484
        %v5549 = vmul.f32 %v5409, %v5485
        %v5550 = vmul.f32 %v5234, %v5486
        %v5551 = vmul.f32 %v5412, %v5487
        %v5552 = vmul.f32 %v5236, %v5488
        %v5553 = vmul.f32 %v5414, %v5489
        %v5554 = vmul.f32 %v5239, %v5490
        %v5555 = vmul.f32 %v5417, %v5491
        %v5556 = vmul.f32 %v5241, %v5492
        %v5557 = vmul.f32 %v5419, %v5493
        %v5558 = vmul.f32 %v5244, %v5494
        %v5559 = vmul.f32 %v5422, %v5495
        %v5560 = vmul.f32 %v5246, %v5496
        %v5561 = vmul.f32 %v5424, %v5497
        %v5562 = vmul.f32 %v5249, %v5498
        %v5563 = vmul.f32 %v5427, %v5499
        %v5564 = vmul.f32 %v5251, %v5500
        %v5565 = vmul.f32 %v5429, %v5501
        %v5566 = vmul.f32 %v5254, %v5502
        %v5567 = vmul.f32 %v5432, %v5503
        %v5568 = vmul.f32 %v5256, %v5504
        %v5569 = vmul.f32 %v5434, %v5505
        %v5570 = vmul.f32 %v5259, %v5506
        %v5571 = vmul.f32 %v5437, %v5507
        %v5572 = vmul.f32 %v5261, %v5508
        %v5573 = vmul.f32 %v5439, %v5509
        %v5574 = vmul.f32 %v5264, %v5510
        %v5575 = vmul.f32 %v5442, %v5511
        %v5576 = vmul.f32 %v5266, %v5512
        %v5577 = vmul.f32 %v5444, %v5513
        %v5578 = vmul.f32 %v5269, %v5514
        %v5579 = vmul.f32 %v5447, %v5515
        %v5580 = vmul.f32 %v5271, %v5516
        %v5581 = vmul.f32 %v5449, %v5517
        %v5582 = vmul.f32 %v5274, %v5518
        %v5583 = vmul.f32 %v5452, %v5519
        %v5584 = vmul.f32 %v5276, %v5520
        %v5585 = vmul.f32 %v5454, %v5521
        %v5586 = vmul.f32 %v5279, %v5522
        %v5587 = vmul.f32 %v5457, %v5523
        %v5588 = vmul.f32 %v5281, %v5524
        %v5589 = vmul.f32 %v5459, %v5525
        %v5590 = vmul.f32 %v5284, %v5526
        %v5591 = vmul.f32 %v5462, %v5527
        %v5592 = vmul.f32 %v5286, %v5528
        %v5593 = vmul.f32 %v5464, %v5529
        %v5594 = vpack.c.bf16 %v5532, %v5530
        %v5595 = vpack.c.bf16 %v5533, %v5531
        %v5596 = vpack.c.bf16 %v5536, %v5534
        %v5597 = vpack.c.bf16 %v5537, %v5535
        %v5598 = vpack.c.bf16 %v5540, %v5538
        %v5599 = vpack.c.bf16 %v5541, %v5539
        %v5600 = vpack.c.bf16 %v5544, %v5542
        %v5601 = vpack.c.bf16 %v5545, %v5543
        %v5602 = vpack.c.bf16 %v5548, %v5546
        %v5603 = vpack.c.bf16 %v5549, %v5547
        %v5604 = vpack.c.bf16 %v5552, %v5550
        %v5605 = vpack.c.bf16 %v5553, %v5551
        %v5606 = vpack.c.bf16 %v5556, %v5554
        %v5607 = vpack.c.bf16 %v5557, %v5555
        %v5608 = vpack.c.bf16 %v5560, %v5558
        %v5609 = vpack.c.bf16 %v5561, %v5559
        %v5610 = vpack.c.bf16 %v5564, %v5562
        %v5611 = vpack.c.bf16 %v5565, %v5563
        %v5612 = vpack.c.bf16 %v5568, %v5566
        %v5613 = vpack.c.bf16 %v5569, %v5567
        %v5614 = vpack.c.bf16 %v5572, %v5570
        %v5615 = vpack.c.bf16 %v5573, %v5571
        %v5616 = vpack.c.bf16 %v5576, %v5574
        %v5617 = vpack.c.bf16 %v5577, %v5575
        %v5618 = vpack.c.bf16 %v5580, %v5578
        %v5619 = vpack.c.bf16 %v5581, %v5579
        %v5620 = vpack.c.bf16 %v5584, %v5582
        %v5621 = vpack.c.bf16 %v5585, %v5583
        %v5622 = vpack.c.bf16 %v5588, %v5586
        %v5623 = vpack.c.bf16 %v5589, %v5587
        %v5624 = vpack.c.bf16 %v5592, %v5590
        %v5625 = vpack.c.bf16 %v5593, %v5591
        %v5626 = vld [vmem:[#allocation2] sm:$0xff]
        %v5627 = vld [vmem:[#allocation2 + $0x8] sm:$0xff]
        %v5628 = vld [vmem:[#allocation2 + $0x10] sm:$0xff]
        %v5629 = vld [vmem:[#allocation2 + $0x18] sm:$0xff]
        %v5630 = vld [vmem:[#allocation2 + $0x20] sm:$0xff]
        %v5631 = vld [vmem:[#allocation2 + $0x28] sm:$0xff]
        %v5632 = vld [vmem:[#allocation2 + $0x30] sm:$0xff]
        %v5633 = vld [vmem:[#allocation2 + $0x38] sm:$0xff]
        %v5634 = vld [vmem:[#allocation2 + $0x40] sm:$0xff]
        %v5635 = vld [vmem:[#allocation2 + $0x48] sm:$0xff]
        %v5636 = vld [vmem:[#allocation2 + $0x50] sm:$0xff]
        %v5637 = vld [vmem:[#allocation2 + $0x58] sm:$0xff]
        %v5638 = vld [vmem:[#allocation2 + $0x60] sm:$0xff]
        %v5639 = vld [vmem:[#allocation2 + $0x68] sm:$0xff]
        %v5640 = vld [vmem:[#allocation2 + $0x70] sm:$0xff]
        %v5641 = vld [vmem:[#allocation2 + $0x78] sm:$0xff]
        %v5642 = vld [vmem:[#allocation2 + $0x80] sm:$0xff]
        %v5643 = vld [vmem:[#allocation2 + $0x88] sm:$0xff]
        %v5644 = vld [vmem:[#allocation2 + $0x90] sm:$0xff]
        %v5645 = vld [vmem:[#allocation2 + $0x98] sm:$0xff]
        %v5646 = vld [vmem:[#allocation2 + $0xa0] sm:$0xff]
        %v5647 = vld [vmem:[#allocation2 + $0xa8] sm:$0xff]
        %v5648 = vld [vmem:[#allocation2 + $0xb0] sm:$0xff]
        %v5649 = vld [vmem:[#allocation2 + $0xb8] sm:$0xff]
        %v5650 = vld [vmem:[#allocation2 + $0xc0] sm:$0xff]
        %v5651 = vld [vmem:[#allocation2 + $0xc8] sm:$0xff]
        %v5652 = vld [vmem:[#allocation2 + $0xd0] sm:$0xff]
        %v5653 = vld [vmem:[#allocation2 + $0xd8] sm:$0xff]
        %v5654 = vld [vmem:[#allocation2 + $0xe0] sm:$0xff]
        %v5655 = vld [vmem:[#allocation2 + $0xe8] sm:$0xff]
        %v5656 = vld [vmem:[#allocation2 + $0xf0] sm:$0xff]
        %v5657 = vld [vmem:[#allocation2 + $0xf8] sm:$0xff]
        %v5690 = vunpack.c.l.b16 %v5626
        %v5691 = vunpack.c.h.b16 %v5626
        %v5692 = vunpack.c.l.b16 %v5627
        %v5693 = vunpack.c.h.b16 %v5627
        %v5694 = vunpack.c.l.b16 %v5628
        %v5695 = vunpack.c.h.b16 %v5628
        %v5696 = vunpack.c.l.b16 %v5629
        %v5697 = vunpack.c.h.b16 %v5629
        %v5698 = vunpack.c.l.b16 %v5630
        %v5699 = vunpack.c.h.b16 %v5630
        %v5700 = vunpack.c.l.b16 %v5631
        %v5701 = vunpack.c.h.b16 %v5631
        %v5702 = vunpack.c.l.b16 %v5632
        %v5703 = vunpack.c.h.b16 %v5632
        %v5704 = vunpack.c.l.b16 %v5633
        %v5705 = vunpack.c.h.b16 %v5633
        %v5706 = vunpack.c.l.b16 %v5634
        %v5707 = vunpack.c.h.b16 %v5634
        %v5708 = vunpack.c.l.b16 %v5635
        %v5709 = vunpack.c.h.b16 %v5635
        %v5710 = vunpack.c.l.b16 %v5636
        %v5711 = vunpack.c.h.b16 %v5636
        %v5712 = vunpack.c.l.b16 %v5637
        %v5713 = vunpack.c.h.b16 %v5637
        %v5714 = vunpack.c.l.b16 %v5638
        %v5715 = vunpack.c.h.b16 %v5638
        %v5716 = vunpack.c.l.b16 %v5639
        %v5717 = vunpack.c.h.b16 %v5639
        %v5718 = vunpack.c.l.b16 %v5640
        %v5719 = vunpack.c.h.b16 %v5640
        %v5720 = vunpack.c.l.b16 %v5641
        %v5721 = vunpack.c.h.b16 %v5641
        %v5722 = vunpack.c.l.b16 %v5642
        %v5723 = vunpack.c.h.b16 %v5642
        %v5724 = vunpack.c.l.b16 %v5643
        %v5725 = vunpack.c.h.b16 %v5643
        %v5726 = vunpack.c.l.b16 %v5644
        %v5727 = vunpack.c.h.b16 %v5644
        %v5728 = vunpack.c.l.b16 %v5645
        %v5729 = vunpack.c.h.b16 %v5645
        %v5730 = vunpack.c.l.b16 %v5646
        %v5731 = vunpack.c.h.b16 %v5646
        %v5732 = vunpack.c.l.b16 %v5647
        %v5733 = vunpack.c.h.b16 %v5647
        %v5734 = vunpack.c.l.b16 %v5648
        %v5735 = vunpack.c.h.b16 %v5648
        %v5736 = vunpack.c.l.b16 %v5649
        %v5737 = vunpack.c.h.b16 %v5649
        %v5738 = vunpack.c.l.b16 %v5650
        %v5739 = vunpack.c.h.b16 %v5650
        %v5740 = vunpack.c.l.b16 %v5651
        %v5741 = vunpack.c.h.b16 %v5651
        %v5742 = vunpack.c.l.b16 %v5652
        %v5743 = vunpack.c.h.b16 %v5652
        %v5744 = vunpack.c.l.b16 %v5653
        %v5745 = vunpack.c.h.b16 %v5653
        %v5746 = vunpack.c.l.b16 %v5654
        %v5747 = vunpack.c.h.b16 %v5654
        %v5748 = vunpack.c.l.b16 %v5655
        %v5749 = vunpack.c.h.b16 %v5655
        %v5750 = vunpack.c.l.b16 %v5656
        %v5751 = vunpack.c.h.b16 %v5656
        %v5752 = vunpack.c.l.b16 %v5657
        %v5753 = vunpack.c.h.b16 %v5657
        %v5754 = vpack.c.b16 %v5692, %v5690
        %v5755 = vpack.c.b16 %v5693, %v5691
        %v5756 = vpack.c.b16 %v5696, %v5694
        %v5757 = vpack.c.b16 %v5697, %v5695
        %v5758 = vpack.c.b16 %v5700, %v5698
        %v5759 = vpack.c.b16 %v5701, %v5699
        %v5760 = vpack.c.b16 %v5704, %v5702
        %v5761 = vpack.c.b16 %v5705, %v5703
        %v5762 = vpack.c.b16 %v5708, %v5706
        %v5763 = vpack.c.b16 %v5709, %v5707
        %v5764 = vpack.c.b16 %v5712, %v5710
        %v5765 = vpack.c.b16 %v5713, %v5711
        %v5766 = vpack.c.b16 %v5716, %v5714
        %v5767 = vpack.c.b16 %v5717, %v5715
        %v5768 = vpack.c.b16 %v5720, %v5718
        %v5769 = vpack.c.b16 %v5721, %v5719
        %v5770 = vpack.c.b16 %v5724, %v5722
        %v5771 = vpack.c.b16 %v5725, %v5723
        %v5772 = vpack.c.b16 %v5728, %v5726
        %v5773 = vpack.c.b16 %v5729, %v5727
        %v5774 = vpack.c.b16 %v5732, %v5730
        %v5775 = vpack.c.b16 %v5733, %v5731
        %v5776 = vpack.c.b16 %v5736, %v5734
        %v5777 = vpack.c.b16 %v5737, %v5735
        %v5778 = vpack.c.b16 %v5740, %v5738
        %v5779 = vpack.c.b16 %v5741, %v5739
        %v5780 = vpack.c.b16 %v5744, %v5742
        %v5781 = vpack.c.b16 %v5745, %v5743
        %v5782 = vpack.c.b16 %v5748, %v5746
        %v5783 = vpack.c.b16 %v5749, %v5747
        %v5784 = vpack.c.b16 %v5752, %v5750
        %v5785 = vpack.c.b16 %v5753, %v5751
        %5818 = vmatpush.bf16.msra.mxu0 %v5768
        %5819 = vmatpush.bf16.msra.mxu0 %v5766
        %5820 = vmatpush.bf16.msra.mxu0 %v5764
        %5821 = vmatpush.bf16.msra.mxu0 %v5762
        %5822 = vmatpush.bf16.msra.mxu0 %v5760
        %5823 = vmatpush.bf16.msra.mxu0 %v5758
        %5824 = vmatpush.bf16.msra.mxu0 %v5756
        %5825 = vmatpush.bf16.msra.mxu0 %v5754
        %5826 = vmatmul.bf16.gmra.mxu0 %v5594
        %v5827 = vpop.f32.mrf.mxu0
        %v5828 = vadd.f32 0.0, %v5827
        %v5829 = vpop.f32.mrf.mxu0
        %v5830 = vadd.f32 0.0, %v5829
        %5831 = vmatmul.bf16.gmra.mxu0 %v5596
        %v5832 = vpop.f32.mrf.mxu0
        %v5833 = vadd.f32 0.0, %v5832
        %v5834 = vpop.f32.mrf.mxu0
        %v5835 = vadd.f32 0.0, %v5834
        %5836 = vmatmul.bf16.gmra.mxu0 %v5598
        %v5837 = vpop.f32.mrf.mxu0
        %v5838 = vadd.f32 0.0, %v5837
        %v5839 = vpop.f32.mrf.mxu0
        %v5840 = vadd.f32 0.0, %v5839
        %5841 = vmatmul.bf16.gmra.mxu0 %v5600
        %v5842 = vpop.f32.mrf.mxu0
        %v5843 = vadd.f32 0.0, %v5842
        %v5844 = vpop.f32.mrf.mxu0
        %v5845 = vadd.f32 0.0, %v5844
        %5846 = vmatmul.bf16.gmra.mxu0 %v5602
        %v5847 = vpop.f32.mrf.mxu0
        %v5848 = vadd.f32 0.0, %v5847
        %v5849 = vpop.f32.mrf.mxu0
        %v5850 = vadd.f32 0.0, %v5849
        %5851 = vmatmul.bf16.gmra.mxu0 %v5604
        %v5852 = vpop.f32.mrf.mxu0
        %v5853 = vadd.f32 0.0, %v5852
        %v5854 = vpop.f32.mrf.mxu0
        %v5855 = vadd.f32 0.0, %v5854
        %5856 = vmatmul.bf16.gmra.mxu0 %v5606
        %v5857 = vpop.f32.mrf.mxu0
        %v5858 = vadd.f32 0.0, %v5857
        %v5859 = vpop.f32.mrf.mxu0
        %v5860 = vadd.f32 0.0, %v5859
        %5861 = vmatmul.bf16.gmra.mxu0 %v5608
        %v5862 = vpop.f32.mrf.mxu0
        %v5863 = vadd.f32 0.0, %v5862
        %v5864 = vpop.f32.mrf.mxu0
        %v5865 = vadd.f32 0.0, %v5864
        %5866 = vmatmul.bf16.gmra.mxu0 %v5610
        %v5867 = vpop.f32.mrf.mxu0
        %v5868 = vadd.f32 0.0, %v5867
        %v5869 = vpop.f32.mrf.mxu0
        %v5870 = vadd.f32 0.0, %v5869
        %5871 = vmatmul.bf16.gmra.mxu0 %v5612
        %v5872 = vpop.f32.mrf.mxu0
        %v5873 = vadd.f32 0.0, %v5872
        %v5874 = vpop.f32.mrf.mxu0
        %v5875 = vadd.f32 0.0, %v5874
        %5876 = vmatmul.bf16.gmra.mxu0 %v5614
        %v5877 = vpop.f32.mrf.mxu0
        %v5878 = vadd.f32 0.0, %v5877
        %v5879 = vpop.f32.mrf.mxu0
        %v5880 = vadd.f32 0.0, %v5879
        %5881 = vmatmul.bf16.gmra.mxu0 %v5616
        %v5882 = vpop.f32.mrf.mxu0
        %v5883 = vadd.f32 0.0, %v5882
        %v5884 = vpop.f32.mrf.mxu0
        %v5885 = vadd.f32 0.0, %v5884
        %5886 = vmatmul.bf16.gmra.mxu0 %v5618
        %v5887 = vpop.f32.mrf.mxu0
        %v5888 = vadd.f32 0.0, %v5887
        %v5889 = vpop.f32.mrf.mxu0
        %v5890 = vadd.f32 0.0, %v5889
        %5891 = vmatmul.bf16.gmra.mxu0 %v5620
        %v5892 = vpop.f32.mrf.mxu0
        %v5893 = vadd.f32 0.0, %v5892
        %v5894 = vpop.f32.mrf.mxu0
        %v5895 = vadd.f32 0.0, %v5894
        %5896 = vmatmul.bf16.gmra.mxu0 %v5622
        %v5897 = vpop.f32.mrf.mxu0
        %v5898 = vadd.f32 0.0, %v5897
        %v5899 = vpop.f32.mrf.mxu0
        %v5900 = vadd.f32 0.0, %v5899
        %5901 = vmatmul.bf16.gmra.mxu0 %v5624
        %v5902 = vpop.f32.mrf.mxu0
        %v5903 = vadd.f32 0.0, %v5902
        %v5904 = vpop.f32.mrf.mxu0
        %v5905 = vadd.f32 0.0, %v5904
        %5906 = vdwg.mxu0
        %5907 = vmatpush.bf16.msra.mxu0 %v5784
        %5908 = vmatpush.bf16.msra.mxu0 %v5782
        %5909 = vmatpush.bf16.msra.mxu0 %v5780
        %5910 = vmatpush.bf16.msra.mxu0 %v5778
        %5911 = vmatpush.bf16.msra.mxu0 %v5776
        %5912 = vmatpush.bf16.msra.mxu0 %v5774
        %5913 = vmatpush.bf16.msra.mxu0 %v5772
        %5914 = vmatpush.bf16.msra.mxu0 %v5770
        %5915 = vmatmul.bf16.gmra.mxu0 %v5595
        %v5916 = vpop.f32.mrf.mxu0
        %v5917 = vadd.f32 %v5828, %v5916
        %v5918 = vpop.f32.mrf.mxu0
        %v5919 = vadd.f32 %v5830, %v5918
        %5920 = vmatmul.bf16.gmra.mxu0 %v5597
        %v5921 = vpop.f32.mrf.mxu0
        %v5922 = vadd.f32 %v5833, %v5921
        %v5923 = vpop.f32.mrf.mxu0
        %v5924 = vadd.f32 %v5835, %v5923
        %5925 = vmatmul.bf16.gmra.mxu0 %v5599
        %v5926 = vpop.f32.mrf.mxu0
        %v5927 = vadd.f32 %v5838, %v5926
        %v5928 = vpop.f32.mrf.mxu0
        %v5929 = vadd.f32 %v5840, %v5928
        %5930 = vmatmul.bf16.gmra.mxu0 %v5601
        %v5931 = vpop.f32.mrf.mxu0
        %v5932 = vadd.f32 %v5843, %v5931
        %v5933 = vpop.f32.mrf.mxu0
        %v5934 = vadd.f32 %v5845, %v5933
        %5935 = vmatmul.bf16.gmra.mxu0 %v5603
        %v5936 = vpop.f32.mrf.mxu0
        %v5937 = vadd.f32 %v5848, %v5936
        %v5938 = vpop.f32.mrf.mxu0
        %v5939 = vadd.f32 %v5850, %v5938
        %5940 = vmatmul.bf16.gmra.mxu0 %v5605
        %v5941 = vpop.f32.mrf.mxu0
        %v5942 = vadd.f32 %v5853, %v5941
        %v5943 = vpop.f32.mrf.mxu0
        %v5944 = vadd.f32 %v5855, %v5943
        %5945 = vmatmul.bf16.gmra.mxu0 %v5607
        %v5946 = vpop.f32.mrf.mxu0
        %v5947 = vadd.f32 %v5858, %v5946
        %v5948 = vpop.f32.mrf.mxu0
        %v5949 = vadd.f32 %v5860, %v5948
        %5950 = vmatmul.bf16.gmra.mxu0 %v5609
        %v5951 = vpop.f32.mrf.mxu0
        %v5952 = vadd.f32 %v5863, %v5951
        %v5953 = vpop.f32.mrf.mxu0
        %v5954 = vadd.f32 %v5865, %v5953
        %5955 = vmatmul.bf16.gmra.mxu0 %v5611
        %v5956 = vpop.f32.mrf.mxu0
        %v5957 = vadd.f32 %v5868, %v5956
        %v5958 = vpop.f32.mrf.mxu0
        %v5959 = vadd.f32 %v5870, %v5958
        %5960 = vmatmul.bf16.gmra.mxu0 %v5613
        %v5961 = vpop.f32.mrf.mxu0
        %v5962 = vadd.f32 %v5873, %v5961
        %v5963 = vpop.f32.mrf.mxu0
        %v5964 = vadd.f32 %v5875, %v5963
        %5965 = vmatmul.bf16.gmra.mxu0 %v5615
        %v5966 = vpop.f32.mrf.mxu0
        %v5967 = vadd.f32 %v5878, %v5966
        %v5968 = vpop.f32.mrf.mxu0
        %v5969 = vadd.f32 %v5880, %v5968
        %5970 = vmatmul.bf16.gmra.mxu0 %v5617
        %v5971 = vpop.f32.mrf.mxu0
        %v5972 = vadd.f32 %v5883, %v5971
        %v5973 = vpop.f32.mrf.mxu0
        %v5974 = vadd.f32 %v5885, %v5973
        %5975 = vmatmul.bf16.gmra.mxu0 %v5619
        %v5976 = vpop.f32.mrf.mxu0
        %v5977 = vadd.f32 %v5888, %v5976
        %v5978 = vpop.f32.mrf.mxu0
        %v5979 = vadd.f32 %v5890, %v5978
        %5980 = vmatmul.bf16.gmra.mxu0 %v5621
        %v5981 = vpop.f32.mrf.mxu0
        %v5982 = vadd.f32 %v5893, %v5981
        %v5983 = vpop.f32.mrf.mxu0
        %v5984 = vadd.f32 %v5895, %v5983
        %5985 = vmatmul.bf16.gmra.mxu0 %v5623
        %v5986 = vpop.f32.mrf.mxu0
        %v5987 = vadd.f32 %v5898, %v5986
        %v5988 = vpop.f32.mrf.mxu0
        %v5989 = vadd.f32 %v5900, %v5988
        %5990 = vmatmul.bf16.gmra.mxu0 %v5625
        %v5991 = vpop.f32.mrf.mxu0
        %v5992 = vadd.f32 %v5903, %v5991
        %v5993 = vpop.f32.mrf.mxu0
        %v5994 = vadd.f32 %v5905, %v5993
        %5995 = vdwg.mxu0
        %5996 = vmatpush.bf16.msra.mxu0 %v5769
        %5997 = vmatpush.bf16.msra.mxu0 %v5767
        %5998 = vmatpush.bf16.msra.mxu0 %v5765
        %5999 = vmatpush.bf16.msra.mxu0 %v5763
        %6000 = vmatpush.bf16.msra.mxu0 %v5761
        %6001 = vmatpush.bf16.msra.mxu0 %v5759
        %6002 = vmatpush.bf16.msra.mxu0 %v5757
        %6003 = vmatpush.bf16.msra.mxu0 %v5755
        %6004 = vmatmul.bf16.gmra.mxu0 %v5594
        %v6005 = vpop.f32.mrf.mxu0
        %v6006 = vadd.f32 0.0, %v6005
        %v6007 = vpop.f32.mrf.mxu0
        %v6008 = vadd.f32 0.0, %v6007
        %6009 = vmatmul.bf16.gmra.mxu0 %v5596
        %v6010 = vpop.f32.mrf.mxu0
        %v6011 = vadd.f32 0.0, %v6010
        %v6012 = vpop.f32.mrf.mxu0
        %v6013 = vadd.f32 0.0, %v6012
        %6014 = vmatmul.bf16.gmra.mxu0 %v5598
        %v6015 = vpop.f32.mrf.mxu0
        %v6016 = vadd.f32 0.0, %v6015
        %v6017 = vpop.f32.mrf.mxu0
        %v6018 = vadd.f32 0.0, %v6017
        %6019 = vmatmul.bf16.gmra.mxu0 %v5600
        %v6020 = vpop.f32.mrf.mxu0
        %v6021 = vadd.f32 0.0, %v6020
        %v6022 = vpop.f32.mrf.mxu0
        %v6023 = vadd.f32 0.0, %v6022
        %6024 = vmatmul.bf16.gmra.mxu0 %v5602
        %v6025 = vpop.f32.mrf.mxu0
        %v6026 = vadd.f32 0.0, %v6025
        %v6027 = vpop.f32.mrf.mxu0
        %v6028 = vadd.f32 0.0, %v6027
        %6029 = vmatmul.bf16.gmra.mxu0 %v5604
        %v6030 = vpop.f32.mrf.mxu0
        %v6031 = vadd.f32 0.0, %v6030
        %v6032 = vpop.f32.mrf.mxu0
        %v6033 = vadd.f32 0.0, %v6032
        %6034 = vmatmul.bf16.gmra.mxu0 %v5606
        %v6035 = vpop.f32.mrf.mxu0
        %v6036 = vadd.f32 0.0, %v6035
        %v6037 = vpop.f32.mrf.mxu0
        %v6038 = vadd.f32 0.0, %v6037
        %6039 = vmatmul.bf16.gmra.mxu0 %v5608
        %v6040 = vpop.f32.mrf.mxu0
        %v6041 = vadd.f32 0.0, %v6040
        %v6042 = vpop.f32.mrf.mxu0
        %v6043 = vadd.f32 0.0, %v6042
        %6044 = vmatmul.bf16.gmra.mxu0 %v5610
        %v6045 = vpop.f32.mrf.mxu0
        %v6046 = vadd.f32 0.0, %v6045
        %v6047 = vpop.f32.mrf.mxu0
        %v6048 = vadd.f32 0.0, %v6047
        %6049 = vmatmul.bf16.gmra.mxu0 %v5612
        %v6050 = vpop.f32.mrf.mxu0
        %v6051 = vadd.f32 0.0, %v6050
        %v6052 = vpop.f32.mrf.mxu0
        %v6053 = vadd.f32 0.0, %v6052
        %6054 = vmatmul.bf16.gmra.mxu0 %v5614
        %v6055 = vpop.f32.mrf.mxu0
        %v6056 = vadd.f32 0.0, %v6055
        %v6057 = vpop.f32.mrf.mxu0
        %v6058 = vadd.f32 0.0, %v6057
        %6059 = vmatmul.bf16.gmra.mxu0 %v5616
        %v6060 = vpop.f32.mrf.mxu0
        %v6061 = vadd.f32 0.0, %v6060
        %v6062 = vpop.f32.mrf.mxu0
        %v6063 = vadd.f32 0.0, %v6062
        %6064 = vmatmul.bf16.gmra.mxu0 %v5618
        %v6065 = vpop.f32.mrf.mxu0
        %v6066 = vadd.f32 0.0, %v6065
        %v6067 = vpop.f32.mrf.mxu0
        %v6068 = vadd.f32 0.0, %v6067
        %6069 = vmatmul.bf16.gmra.mxu0 %v5620
        %v6070 = vpop.f32.mrf.mxu0
        %v6071 = vadd.f32 0.0, %v6070
        %v6072 = vpop.f32.mrf.mxu0
        %v6073 = vadd.f32 0.0, %v6072
        %6074 = vmatmul.bf16.gmra.mxu0 %v5622
        %v6075 = vpop.f32.mrf.mxu0
        %v6076 = vadd.f32 0.0, %v6075
        %v6077 = vpop.f32.mrf.mxu0
        %v6078 = vadd.f32 0.0, %v6077
        %6079 = vmatmul.bf16.gmra.mxu0 %v5624
        %v6080 = vpop.f32.mrf.mxu0
        %v6081 = vadd.f32 0.0, %v6080
        %v6082 = vpop.f32.mrf.mxu0
        %v6083 = vadd.f32 0.0, %v6082
        %6084 = vdwg.mxu0
        %6085 = vmatpush.bf16.msra.mxu0 %v5785
        %6086 = vmatpush.bf16.msra.mxu0 %v5783
        %6087 = vmatpush.bf16.msra.mxu0 %v5781
        %6088 = vmatpush.bf16.msra.mxu0 %v5779
        %6089 = vmatpush.bf16.msra.mxu0 %v5777
        %6090 = vmatpush.bf16.msra.mxu0 %v5775
        %6091 = vmatpush.bf16.msra.mxu0 %v5773
        %6092 = vmatpush.bf16.msra.mxu0 %v5771
        %6093 = vmatmul.bf16.gmra.mxu0 %v5595
        %v6094 = vpop.f32.mrf.mxu0
        %v6095 = vadd.f32 %v6006, %v6094
        %v6096 = vpop.f32.mrf.mxu0
        %v6097 = vadd.f32 %v6008, %v6096
        %6098 = vmatmul.bf16.gmra.mxu0 %v5597
        %v6099 = vpop.f32.mrf.mxu0
        %v6100 = vadd.f32 %v6011, %v6099
        %v6101 = vpop.f32.mrf.mxu0
        %v6102 = vadd.f32 %v6013, %v6101
        %6103 = vmatmul.bf16.gmra.mxu0 %v5599
        %v6104 = vpop.f32.mrf.mxu0
        %v6105 = vadd.f32 %v6016, %v6104
        %v6106 = vpop.f32.mrf.mxu0
        %v6107 = vadd.f32 %v6018, %v6106
        %6108 = vmatmul.bf16.gmra.mxu0 %v5601
        %v6109 = vpop.f32.mrf.mxu0
        %v6110 = vadd.f32 %v6021, %v6109
        %v6111 = vpop.f32.mrf.mxu0
        %v6112 = vadd.f32 %v6023, %v6111
        %6113 = vmatmul.bf16.gmra.mxu0 %v5603
        %v6114 = vpop.f32.mrf.mxu0
        %v6115 = vadd.f32 %v6026, %v6114
        %v6116 = vpop.f32.mrf.mxu0
        %v6117 = vadd.f32 %v6028, %v6116
        %6118 = vmatmul.bf16.gmra.mxu0 %v5605
        %v6119 = vpop.f32.mrf.mxu0
        %v6120 = vadd.f32 %v6031, %v6119
        %v6121 = vpop.f32.mrf.mxu0
        %v6122 = vadd.f32 %v6033, %v6121
        %6123 = vmatmul.bf16.gmra.mxu0 %v5607
        %v6124 = vpop.f32.mrf.mxu0
        %v6125 = vadd.f32 %v6036, %v6124
        %v6126 = vpop.f32.mrf.mxu0
        %v6127 = vadd.f32 %v6038, %v6126
        %6128 = vmatmul.bf16.gmra.mxu0 %v5609
        %v6129 = vpop.f32.mrf.mxu0
        %v6130 = vadd.f32 %v6041, %v6129
        %v6131 = vpop.f32.mrf.mxu0
        %v6132 = vadd.f32 %v6043, %v6131
        %6133 = vmatmul.bf16.gmra.mxu0 %v5611
        %v6134 = vpop.f32.mrf.mxu0
        %v6135 = vadd.f32 %v6046, %v6134
        %v6136 = vpop.f32.mrf.mxu0
        %v6137 = vadd.f32 %v6048, %v6136
        %6138 = vmatmul.bf16.gmra.mxu0 %v5613
        %v6139 = vpop.f32.mrf.mxu0
        %v6140 = vadd.f32 %v6051, %v6139
        %v6141 = vpop.f32.mrf.mxu0
        %v6142 = vadd.f32 %v6053, %v6141
        %6143 = vmatmul.bf16.gmra.mxu0 %v5615
        %v6144 = vpop.f32.mrf.mxu0
        %v6145 = vadd.f32 %v6056, %v6144
        %v6146 = vpop.f32.mrf.mxu0
        %v6147 = vadd.f32 %v6058, %v6146
        %6148 = vmatmul.bf16.gmra.mxu0 %v5617
        %v6149 = vpop.f32.mrf.mxu0
        %v6150 = vadd.f32 %v6061, %v6149
        %v6151 = vpop.f32.mrf.mxu0
        %v6152 = vadd.f32 %v6063, %v6151
        %6153 = vmatmul.bf16.gmra.mxu0 %v5619
        %v6154 = vpop.f32.mrf.mxu0
        %v6155 = vadd.f32 %v6066, %v6154
        %v6156 = vpop.f32.mrf.mxu0
        %v6157 = vadd.f32 %v6068, %v6156
        %6158 = vmatmul.bf16.gmra.mxu0 %v5621
        %v6159 = vpop.f32.mrf.mxu0
        %v6160 = vadd.f32 %v6071, %v6159
        %v6161 = vpop.f32.mrf.mxu0
        %v6162 = vadd.f32 %v6073, %v6161
        %6163 = vmatmul.bf16.gmra.mxu0 %v5623
        %v6164 = vpop.f32.mrf.mxu0
        %v6165 = vadd.f32 %v6076, %v6164
        %v6166 = vpop.f32.mrf.mxu0
        %v6167 = vadd.f32 %v6078, %v6166
        %6168 = vmatmul.bf16.gmra.mxu0 %v5625
        %v6169 = vpop.f32.mrf.mxu0
        %v6170 = vadd.f32 %v6081, %v6169
        %v6171 = vpop.f32.mrf.mxu0
        %v6172 = vadd.f32 %v6083, %v6171
        %6173 = vdwg.mxu0
        %v6174 = vpack.c.bf16 %v5919, %v5917
        %v6175 = vpack.c.bf16 %v6097, %v6095
        %v6176 = vpack.c.bf16 %v5924, %v5922
        %v6177 = vpack.c.bf16 %v6102, %v6100
        %v6178 = vpack.c.bf16 %v5929, %v5927
        %v6179 = vpack.c.bf16 %v6107, %v6105
        %v6180 = vpack.c.bf16 %v5934, %v5932
        %v6181 = vpack.c.bf16 %v6112, %v6110
        %v6182 = vpack.c.bf16 %v5939, %v5937
        %v6183 = vpack.c.bf16 %v6117, %v6115
        %v6184 = vpack.c.bf16 %v5944, %v5942
        %v6185 = vpack.c.bf16 %v6122, %v6120
        %v6186 = vpack.c.bf16 %v5949, %v5947
        %v6187 = vpack.c.bf16 %v6127, %v6125
        %v6188 = vpack.c.bf16 %v5954, %v5952
        %v6189 = vpack.c.bf16 %v6132, %v6130
        %v6190 = vld [vmem:[%s2] sm:$0x3]
        %v6191 = vld [vmem:[%s3] sm:$0xf]
        %6193 = vset.pattern.permute.xlu0 0
        %6194 = vperm.xlu0 %6193, %v6191
        %v6195 = vpop.permute.xlu0 %6194
        %6197 = vmatpush.bf16.msra.mxu0 %v6188
        %6198 = vmatpush.bf16.msra.mxu0 %v6186
        %6199 = vmatpush.bf16.msra.mxu0 %v6184
        %6200 = vmatpush.bf16.msra.mxu0 %v6182
        %6201 = vmatpush.bf16.msra.mxu0 %v6180
        %6202 = vmatpush.bf16.msra.mxu0 %v6178
        %6203 = vmatpush.bf16.msra.mxu0 %v6176
        %6204 = vmatpush.bf16.msra.mxu0 %v6174
        %6205 = vmatmul.bf16.gmra.mxu0 %v6190
        %v6206 = vpop.f32.mrf.mxu0
        %v6207 = vadd.f32 %v6195, %v6206
        %v6208 = vpop.f32.mrf.mxu0
        %6209 = vdwg.mxu0
        %6210 = vmatpush.bf16.msra.mxu0 %v6189
        %6211 = vmatpush.bf16.msra.mxu0 %v6187
        %6212 = vmatpush.bf16.msra.mxu0 %v6185
        %6213 = vmatpush.bf16.msra.mxu0 %v6183
        %6214 = vmatpush.bf16.msra.mxu0 %v6181
        %6215 = vmatpush.bf16.msra.mxu0 %v6179
        %6216 = vmatpush.bf16.msra.mxu0 %v6177
        %6217 = vmatpush.bf16.msra.mxu0 %v6175
        %6218 = vmatmul.bf16.gmra.mxu0 %v6190
        %v6219 = vpop.f32.mrf.mxu0
        %v6220 = vadd.f32 %v6195, %v6219
        %v6221 = vpop.f32.mrf.mxu0
        %6222 = vdwg.mxu0
        %v6223 = vmul.f32 %v6207, %v6207
        %v6224 = vmul.f32 %v6220, %v6220
        %vm6225 = vcmask 1043456
        %v6226 = vsel %vm6225, %v6223, 0.0
        %v6227 = vrot.slane %v6226, 4
        %v6228 = vadd.f32 %v6226, %v6227
        %v6229 = vrot.slane %v6228, 2
        %v6230 = vadd.f32 %v6228, %v6229
        %v6231 = vrot.slane %v6230, 1
        %v6232 = vadd.f32 %v6230, %v6231
        %v6233 = vsel %vm6225, %v6224, 0.0
        %v6234 = vrot.slane %v6233, 4
        %v6235 = vadd.f32 %v6233, %v6234
        %v6236 = vrot.slane %v6235, 2
        %v6237 = vadd.f32 %v6235, %v6236
        %v6238 = vrot.slane %v6237, 1
        %v6239 = vadd.f32 %v6237, %v6238
        %v6240 = vmax.f32 %v6232, 1e-24
        %v6241 = vmax.f32 %v6239, 1e-24
        %v6242 = vrsqrt.pop %v6240
        %v6243 = vmul.f32 %v6242, %v6240
        %v6244 = vmul.f32 %v6243, %v6242
        %v6245 = vmul.f32 0.5, %v6244
        %v6246 = vsub.f32 1.5, %v6245
        %v6247 = vmul.f32 %v6242, %v6246
        %vm6248 = vweird.f32 %v6240
        %vm6249 = vweird.f32 %v6242
        %vm6250 = vmor %vm6248, %vm6249
        %v6251 = vsel %vm6250, %v6242, %v6247
        %v6252 = vrsqrt.pop %v6241
        %v6253 = vmul.f32 %v6252, %v6241
        %v6254 = vmul.f32 %v6253, %v6252
        %v6255 = vmul.f32 0.5, %v6254
        %v6256 = vsub.f32 1.5, %v6255
        %v6257 = vmul.f32 %v6252, %v6256
        %vm6258 = vweird.f32 %v6241
        %vm6259 = vweird.f32 %v6252
        %vm6260 = vmor %vm6258, %vm6259
        %v6261 = vsel %vm6260, %v6252, %v6257
        %v6262 = vmul.f32 %v6207, %v6251
        %v6263 = vmul.f32 %v6220, %v6261
        %v6264 = vld [vmem:[%s4] sm:$0xf]
        %6266 = vset.pattern.permute.xlu0 0
        %6267 = vperm.xlu0 %6266, %v6264
        %v6268 = vpop.permute.xlu0 %6267
        %v6270 = vmul.f32 %v6262, %v6268
        %v6271 = vmul.f32 %v6263, %v6268
        %v6272 = vpack.c.bf16 %v6271, %v6270
        %v6274 = vrot.slane %v6272, 2
        %vm6275 = vcmask 1041408
        %v6278 = vsel %vm6275, %v6272, %v6274
        %6280 = vst [vmem:[%s264] sm:$0xf] %v6278
        %v6281 = vpack.c.bf16 %v5959, %v5957
        %v6282 = vpack.c.bf16 %v6137, %v6135
        %v6283 = vpack.c.bf16 %v5964, %v5962
        %v6284 = vpack.c.bf16 %v6142, %v6140
        %v6285 = vpack.c.bf16 %v5969, %v5967
        %v6286 = vpack.c.bf16 %v6147, %v6145
        %v6287 = vpack.c.bf16 %v5974, %v5972
        %v6288 = vpack.c.bf16 %v6152, %v6150
        %v6289 = vpack.c.bf16 %v5979, %v5977
        %v6290 = vpack.c.bf16 %v6157, %v6155
        %v6291 = vpack.c.bf16 %v5984, %v5982
        %v6292 = vpack.c.bf16 %v6162, %v6160
        %v6293 = vpack.c.bf16 %v5989, %v5987
        %v6294 = vpack.c.bf16 %v6167, %v6165
        %v6295 = vpack.c.bf16 %v5994, %v5992
        %v6296 = vpack.c.bf16 %v6172, %v6170
        %v6297 = vld [vmem:[%s2] sm:$0x3]
        %v6298 = vld [vmem:[%s3] sm:$0xf]
        %6300 = vset.pattern.permute.xlu0 0
        %6301 = vperm.xlu0 %6300, %v6298
        %v6302 = vpop.permute.xlu0 %6301
        %6304 = vmatpush.bf16.msra.mxu0 %v6295
        %6305 = vmatpush.bf16.msra.mxu0 %v6293
        %6306 = vmatpush.bf16.msra.mxu0 %v6291
        %6307 = vmatpush.bf16.msra.mxu0 %v6289
        %6308 = vmatpush.bf16.msra.mxu0 %v6287
        %6309 = vmatpush.bf16.msra.mxu0 %v6285
        %6310 = vmatpush.bf16.msra.mxu0 %v6283
        %6311 = vmatpush.bf16.msra.mxu0 %v6281
        %6312 = vmatmul.bf16.gmra.mxu0 %v6297
        %v6313 = vpop.f32.mrf.mxu0
        %v6314 = vadd.f32 %v6302, %v6313
        %v6315 = vpop.f32.mrf.mxu0
        %6316 = vdwg.mxu0
        %6317 = vmatpush.bf16.msra.mxu0 %v6296
        %6318 = vmatpush.bf16.msra.mxu0 %v6294
        %6319 = vmatpush.bf16.msra.mxu0 %v6292
        %6320 = vmatpush.bf16.msra.mxu0 %v6290
        %6321 = vmatpush.bf16.msra.mxu0 %v6288
        %6322 = vmatpush.bf16.msra.mxu0 %v6286
        %6323 = vmatpush.bf16.msra.mxu0 %v6284
        %6324 = vmatpush.bf16.msra.mxu0 %v6282
        %6325 = vmatmul.bf16.gmra.mxu0 %v6297
        %v6326 = vpop.f32.mrf.mxu0
        %v6327 = vadd.f32 %v6302, %v6326
        %v6328 = vpop.f32.mrf.mxu0
        %6329 = vdwg.mxu0
        %v6330 = vmul.f32 %v6314, %v6314
        %v6331 = vmul.f32 %v6327, %v6327
        %v6332 = vsel %vm6225, %v6330, 0.0
        %v6333 = vrot.slane %v6332, 4
        %v6334 = vadd.f32 %v6332, %v6333
        %v6335 = vrot.slane %v6334, 2
        %v6336 = vadd.f32 %v6334, %v6335
        %v6337 = vrot.slane %v6336, 1
        %v6338 = vadd.f32 %v6336, %v6337
        %v6339 = vsel %vm6225, %v6331, 0.0
        %v6340 = vrot.slane %v6339, 4
        %v6341 = vadd.f32 %v6339, %v6340
        %v6342 = vrot.slane %v6341, 2
        %v6343 = vadd.f32 %v6341, %v6342
        %v6344 = vrot.slane %v6343, 1
        %v6345 = vadd.f32 %v6343, %v6344
        %v6346 = vmax.f32 %v6338, 1e-24
        %v6347 = vmax.f32 %v6345, 1e-24
        %v6348 = vrsqrt.pop %v6346
        %v6349 = vmul.f32 %v6348, %v6346
        %v6350 = vmul.f32 %v6349, %v6348
        %v6351 = vmul.f32 0.5, %v6350
        %v6352 = vsub.f32 1.5, %v6351
        %v6353 = vmul.f32 %v6348, %v6352
        %vm6354 = vweird.f32 %v6346
        %vm6355 = vweird.f32 %v6348
        %vm6356 = vmor %vm6354, %vm6355
        %v6357 = vsel %vm6356, %v6348, %v6353
        %v6358 = vrsqrt.pop %v6347
        %v6359 = vmul.f32 %v6358, %v6347
        %v6360 = vmul.f32 %v6359, %v6358
        %v6361 = vmul.f32 0.5, %v6360
        %v6362 = vsub.f32 1.5, %v6361
        %v6363 = vmul.f32 %v6358, %v6362
        %vm6364 = vweird.f32 %v6347
        %vm6365 = vweird.f32 %v6358
        %vm6366 = vmor %vm6364, %vm6365
        %v6367 = vsel %vm6366, %v6358, %v6363
        %v6368 = vmul.f32 %v6314, %v6357
        %v6369 = vmul.f32 %v6327, %v6367
        %v6370 = vld [vmem:[%s4] sm:$0xf]
        %6372 = vset.pattern.permute.xlu0 0
        %6373 = vperm.xlu0 %6372, %v6370
        %v6374 = vpop.permute.xlu0 %6373
        %v6376 = vmul.f32 %v6368, %v6374
        %v6377 = vmul.f32 %v6369, %v6374
        %v6378 = vpack.c.bf16 %v6377, %v6376
        %v6380 = vrot.slane %v6378, 2
        %v6383 = vsel %vm6275, %v6378, %v6380
        %s6385 = scalar_lea.vmem %s264, 4 [#allocation8]
        %6386 = vst [vmem:[%s6385] sm:$0xf] %v6383
        %s6387 = sand.u32 %s160, 1
        %s6388 = scalar_lea.sflag [#allocation7], %s6387
        %s6389 = sand.u32 %s160, 1
        %s6390 = smul.addr %s6389, 8
        %s6391 = scalar_lea.vmem [#allocation8], %s6390
        // Predicated region
        $region49: #{tpu_custom_call.1} parent=43 // pred_check
          %p6392 = pneg %p170
        $region50: #{tpu_custom_call.1} parent=43 // pred_check_branch
          %6394 = sbr.rel (%p6392) target = $region52
        $region51: #{tpu_custom_call.1} parent=43 // pred_region
          %s6395 = smul.u32 2, %s21
          %6397 = vsyncadd %s6388, 0
          %s6398 = smul.addr %s6395, 2
          %s6399 = smul.addr %s6398, 2
          %s6400 = scalar_lea.hbm %s6, %s6399
          %s6401 = sshll.u32 %s6391, 4
          %s6402 = int_to_ptr.vmem [resolvable:$true] %s6401
          %s6403 = sshll.u32 %s6400, 4
          %s6404 = int_to_ptr.hbm [resolvable:$true] %s6403
          %6409 = dma.vmem_to_hbm [thread:$0]  %s6402, 128, %s6404, %s6388, 64, 64, 4
        $region52: #{tpu_custom_call.1} parent=43 // pred_fallthru
          _
      $region44: #{tpu_custom_call.1} parent=5 // pred_fallthru
        _
      %p6410 = scmp.le.s32.totalorder 2, %s16
      // Predicated region
      $region53: #{tpu_custom_call.1} parent=5 // pred_check
        %p6411 = pneg %p6410
      $region54: #{tpu_custom_call.1} parent=5 // pred_check_branch
        %6413 = sbr.rel (%p6411) target = $region56
      $region55: #{tpu_custom_call.1} parent=5 // pred_region
        %s6414 = ssub.s32 %s16, 2
        // Predicated region
        $region57: #{tpu_custom_call.1} parent=55 // pred_check
          %p6415 = pneg %p176
        $region58: #{tpu_custom_call.1} parent=55 // pred_check_branch
          %6417 = sbr.rel (%p6415) target = $region60
        $region59: #{tpu_custom_call.1} parent=55 // pred_region
          %s6418 = sand.u32 %s161, 1
          %s6419 = scalar_lea.sflag [#allocation7], %s6418
          %s6420 = sand.u32 %s161, 1
          %s6421 = smul.addr %s6420, 8
          %s6422 = scalar_lea.vmem [#allocation8], %s6421
          %6424 = dma.done %s6419, 128
        $region60: #{tpu_custom_call.1} parent=55 // pred_fallthru
          _
      $region56: #{tpu_custom_call.1} parent=5 // pred_fallthru
        _
    $region6: #{tpu_custom_call.1} parent=1 // loop_footer
      %s20 = sadd.s32 1, %s16
    $region7: #{tpu_custom_call.1} parent=1 // loop_footer_branch
      %15 = sbr.rel target = $region3
    $region8: #{tpu_custom_call.1} parent=1 // loop_exit
      _
    %6425 = vsyncpa [#allocation6], 1
    %s6426 = scalar_lea.sflag [#allocation6], 1
    %6427 = vsyncpa %s6426, 1
    %6428 = vsyncpa [#allocation7], 1
    %s6429 = scalar_lea.sflag [#allocation7], 1
    %6430 = vsyncpa %s6429, 1

</llo_original>
